<compile_context>
chip_gen: v6e
topology: v6e:2x2x1
jax: 0.10.0
libtpu: 0.0.40
codegen_flags: <defaults>
</compile_context>

<pallas_src>
import jax
import jax.numpy as jnp
from jax.experimental import pallas as pl
from jax.experimental.pallas import tpu as pltpu

# ---------------- model hyper-parameters (as in the module) -----------------
INPUT_DIM = 32        # noise dimension
OUTPUT_DIM = 16       # generated-sample dimension
NUM_CLASSES = 4
EMBEDDING_SIZE = 28
HIDDEN = (512, 256, 64)
BN_EPS = 1e-5
BATCH = 256           # full batch per call (training-mode BN needs whole-batch stats)


# ---------------- Pallas kernel ---------------------------------------------
def _generator_kernel(x_ref, w1_ref, g1_ref, be1_ref,
                      w2_ref, g2_ref, be2_ref,
                      w3_ref, g3_ref, be3_ref,
                      w4_ref, b4_ref, out_ref):
    """x=[z|onehot] @ [W1z;embed@W1e] -> 3x (fused train-BN -> ReLU -> Linear)."""
    f32, bf16 = jnp.float32, jnp.bfloat16
    inv_n = 1.0 / x_ref.shape[0]

    def bn_relu(h, g_ref, be_ref):
        # training-mode BatchNorm1d (biased variance), one data pass, fused FMA + ReLU
        mean = jnp.sum(h, axis=0, keepdims=True) * inv_n
        msq = jnp.sum(h * h, axis=0, keepdims=True) * inv_n
        var = msq - mean * mean
        scale = g_ref[...] * jax.lax.rsqrt(var + BN_EPS)   # rsqrt -> EUP slot (free-ish)
        shift = be_ref[...] - mean * scale
        return jnp.maximum(h * scale + shift, 0.0)

    # layer 1: bias b1 dropped (exact under training-mode BN)
    h = jnp.dot(x_ref[...], w1_ref[...], preferred_element_type=f32)
    h = bn_relu(h, g1_ref, be1_ref)
    # layer 2
    h = jnp.dot(h.astype(bf16), w2_ref[...], preferred_element_type=f32)
    h = bn_relu(h, g2_ref, be2_ref)
    # layer 3
    h = jnp.dot(h.astype(bf16), w3_ref[...], preferred_element_type=f32)
    h = bn_relu(h, g3_ref, be3_ref)
    # layer 4 (no BN -> keep b4)
    out = jnp.dot(h.astype(bf16), w4_ref[...], preferred_element_type=f32) + b4_ref[...]
    out_ref[...] = out.astype(out_ref.dtype)


# ---------------- wrapper-side operand preparation (exact algebraic folds) --
def _prepare_operands(z, labels, params):
    """Layout hygiene done in XLA: bf16 casts, one-hot labels, embedding fold."""
    bf16 = jnp.bfloat16
    onehot = jax.nn.one_hot(labels, NUM_CLASSES, dtype=bf16)            # (B, 4)
    x = jnp.concatenate([z.astype(bf16), onehot], axis=1)               # (B, 36)
    # cat([z, embed[labels]]) @ W1  ==  z @ W1[:32] + onehot @ (embed @ W1[32:])
    emb_w1 = jnp.dot(params["embed"], params["w1"][INPUT_DIM:],
                     preferred_element_type=jnp.float32)                # (4, 512)
    w1 = jnp.concatenate([params["w1"][:INPUT_DIM], emb_w1],
                         axis=0).astype(bf16)                           # (36, 512)
    # b1/b2/b3 intentionally omitted: a constant pre-BN bias cancels exactly.
    return (x, w1, params["g1"], params["be1"],
            params["w2"].astype(bf16), params["g2"], params["be2"],
            params["w3"].astype(bf16), params["g3"], params["be3"],
            params["w4"].astype(bf16), params["b4"])


@jax.jit
def generator_forward(z, labels, params):
    """z: (B, INPUT_DIM) float32, labels: (B,) int32 -> (B, OUTPUT_DIM) float32."""
    B = z.shape[0]
    operands = _prepare_operands(z, labels, params)
    vmem = pl.BlockSpec(memory_space=pltpu.MemorySpace.VMEM)

    flops = 2 * B * ((INPUT_DIM + NUM_CLASSES) * HIDDEN[0]
                     + HIDDEN[0] * HIDDEN[1]
                     + HIDDEN[1] * HIDDEN[2]
                     + HIDDEN[2] * OUTPUT_DIM)
    bytes_accessed = int(sum(op.size * op.dtype.itemsize for op in operands)
                         + B * OUTPUT_DIM * 4)

    return pl.pallas_call(
        _generator_kernel,
        out_shape=jax.ShapeDtypeStruct((B, OUTPUT_DIM), jnp.float32),
        in_specs=[vmem] * len(operands),
        out_specs=vmem,
        cost_estimate=pl.CostEstimate(flops=flops,
                                      transcendentals=sum(HIDDEN),   # one rsqrt / BN feature
                                      bytes_accessed=bytes_accessed),
    )(*operands)


# ---------------- deterministic parameter construction ----------------------
def init_params(key):
    """f32 master params, PyTorch-style init; weights stored as (in, out)."""
    in0 = INPUT_DIM + EMBEDDING_SIZE
    dims_in = (in0,) + HIDDEN
    dims_out = HIDDEN + (OUTPUT_DIM,)
    keys = jax.random.split(key, 2 * len(dims_in) + 1)
    params = {}
    for i, (din, dout) in enumerate(zip(dims_in, dims_out)):
        bound = 1.0 / float(jnp.sqrt(din))
        params[f"w{i + 1}"] = jax.random.uniform(
            keys[2 * i], (din, dout), jnp.float32, -bound, bound)
        params[f"b{i + 1}"] = jax.random.uniform(
            keys[2 * i + 1], (1, dout), jnp.float32, -bound, bound)
    for i, h in enumerate(HIDDEN):          # BatchNorm1d affine init: gamma=1, beta=0
        params[f"g{i + 1}"] = jnp.ones((1, h), jnp.float32)
        params[f"be{i + 1}"] = jnp.zeros((1, h), jnp.float32)
    params["embed"] = jax.random.normal(     # nn.Embedding ~ N(0,1)
        keys[-1], (NUM_CLASSES, EMBEDDING_SIZE), jnp.float32)
    return params


# ---------------- references -------------------------------------------------
def reference_forward(z, labels, params):
    """Module-faithful pure-JAX reference (f32 weights, embedding lookup, concat, biases)."""
    def bn_relu(h, g, be):
        mean = jnp.mean(h, axis=0, keepdims=True)
        var = jnp.mean(jnp.square(h - mean), axis=0, keepdims=True)   # biased, train mode
        return jnp.maximum(g * (h - mean) * jax.lax.rsqrt(var + BN_EPS) + be, 0.0)

    emb = jnp.take(params["embed"], labels, axis=0)
    x = jnp.concatenate([z, emb], axis=1)
    h = bn_relu(x @ params["w1"] + params["b1"], params["g1"], params["be1"])
    h = bn_relu(h @ params["w2"] + params["b2"], params["g2"], params["be2"])
    h = bn_relu(h @ params["w3"] + params["b3"], params["g3"], params["be3"])
    return h @ params["w4"] + params["b4"]


def mirror_reference(z, labels, params):
    """Pure-JAX reference that mirrors the kernel's exact numerics (same operands)."""
    (x, w1, g1, be1, w2, g2, be2, w3, g3, be3, w4, b4) = _prepare_operands(z, labels, params)
    f32, bf16 = jnp.float32, jnp.bfloat16

    def bn_relu(h, g, be):
        mean = jnp.mean(h, axis=0, keepdims=True)
        var = jnp.mean(h * h, axis=0, keepdims=True) - mean * mean
        s = g * jax.lax.rsqrt(var + BN_EPS)
        return jnp.maximum(h * s + (be - mean * s), 0.0)

    h = bn_relu(jnp.dot(x, w1, preferred_element_type=f32), g1, be1)
    h = bn_relu(jnp.dot(h.astype(bf16), w2, preferred_element_type=f32), g2, be2)
    h = bn_relu(jnp.dot(h.astype(bf16), w3, preferred_element_type=f32), g3, be3)
    return jnp.dot(h.astype(bf16), w4, preferred_element_type=f32) + b4


if __name__ == "__main__":
    key = jax.random.PRNGKey(0)
    kp, kz, kl = jax.random.split(key, 3)

    params = init_params(kp)
    z = jax.random.normal(kz, (BATCH, INPUT_DIM), jnp.float32)
    labels = jax.random.randint(kl, (BATCH,), 0, NUM_CLASSES, jnp.int32)

    out = jax.block_until_ready(generator_forward(z, labels, params))
    assert out.shape == (BATCH, OUTPUT_DIM)
    assert bool(jnp.all(jnp.isfinite(out)))

    # tight check: kernel vs same-numerics JAX graph
    err_mirror = float(jnp.max(jnp.abs(out - mirror_reference(z, labels, params))))
    assert err_mirror < 1e-2, f"kernel/mirror mismatch: {err_mirror}"

    # semantic check: kernel (bf16 weights) vs module-faithful f32 reference
    err_gold = float(jnp.max(jnp.abs(out - reference_forward(z, labels, params))))
    assert err_gold < 1e-1, f"kernel/module mismatch: {err_gold}"

    print("KERNEL_OK")
</pallas_src>

<mosaic_0001>
module attributes {stable_mosaic.version = 11 : i64} {
  func.func @_generator_kernel(%arg0: memref<256x36xbf16, #tpu.memory_space<vmem>>, %arg1: memref<36x512xbf16, #tpu.memory_space<vmem>>, %arg2: memref<1x512xf32, #tpu.memory_space<vmem>>, %arg3: memref<1x512xf32, #tpu.memory_space<vmem>>, %arg4: memref<512x256xbf16, #tpu.memory_space<vmem>>, %arg5: memref<1x256xf32, #tpu.memory_space<vmem>>, %arg6: memref<1x256xf32, #tpu.memory_space<vmem>>, %arg7: memref<256x64xbf16, #tpu.memory_space<vmem>>, %arg8: memref<1x64xf32, #tpu.memory_space<vmem>>, %arg9: memref<1x64xf32, #tpu.memory_space<vmem>>, %arg10: memref<64x16xbf16, #tpu.memory_space<vmem>>, %arg11: memref<1x16xf32, #tpu.memory_space<vmem>>, %arg12: memref<256x16xf32, #tpu.memory_space<vmem>>) attributes {dimension_semantics = [], scalar_prefetch = 0 : i64, scratch_operands = 0 : i64, tpu.core_type = #tpu.core_type<tc>} {
    %c0 = arith.constant 0 : index
    %c0_0 = arith.constant 0 : index
    %0 = vector.load %arg0[%c0, %c0_0] : memref<256x36xbf16, #tpu.memory_space<vmem>>, vector<256x36xbf16>
    %c0_1 = arith.constant 0 : index
    %c0_2 = arith.constant 0 : index
    %1 = vector.load %arg1[%c0_1, %c0_2] : memref<36x512xbf16, #tpu.memory_space<vmem>>, vector<36x512xbf16>
    %cst = arith.constant dense<0.000000e+00> : vector<256x512xf32>
    %2 = tpu.matmul %0, %1, %cst {dimension_numbers = #tpu.dot_dimension_numbers<[1], [0], [0], [1], [0, 0, 1, 1], [], []>} : vector<256x36xbf16>, vector<36x512xbf16>, vector<256x512xf32> -> vector<256x512xf32>
    %cst_3 = arith.constant dense<0.000000e+00> : vector<512xf32>
    %3 = vector.multi_reduction <add>, %2, %cst_3 [0] : vector<256x512xf32> to vector<512xf32>
    %4 = vector.shape_cast %3 : vector<512xf32> to vector<1x512xf32>
    %cst_4 = arith.constant 3.906250e-03 : f32
    %5 = vector.broadcast %cst_4 : f32 to vector<1x512xf32>
    %6 = arith.mulf %4, %5 : vector<1x512xf32>
    %7 = arith.mulf %2, %2 : vector<256x512xf32>
    %cst_5 = arith.constant dense<0.000000e+00> : vector<512xf32>
    %8 = vector.multi_reduction <add>, %7, %cst_5 [0] : vector<256x512xf32> to vector<512xf32>
    %9 = vector.shape_cast %8 : vector<512xf32> to vector<1x512xf32>
    %cst_6 = arith.constant 3.906250e-03 : f32
    %10 = vector.broadcast %cst_6 : f32 to vector<1x512xf32>
    %11 = arith.mulf %9, %10 : vector<1x512xf32>
    %12 = arith.mulf %6, %6 : vector<1x512xf32>
    %13 = arith.subf %11, %12 : vector<1x512xf32>
    %c0_7 = arith.constant 0 : index
    %c0_8 = arith.constant 0 : index
    %14 = vector.load %arg2[%c0_7, %c0_8] : memref<1x512xf32, #tpu.memory_space<vmem>>, vector<1x512xf32>
    %cst_9 = arith.constant 9.99999974E-6 : f32
    %15 = vector.broadcast %cst_9 : f32 to vector<1x512xf32>
    %16 = arith.addf %13, %15 : vector<1x512xf32>
    %17 = math.rsqrt %16 : vector<1x512xf32>
    %18 = arith.mulf %14, %17 : vector<1x512xf32>
    %c0_10 = arith.constant 0 : index
    %c0_11 = arith.constant 0 : index
    %19 = vector.load %arg3[%c0_10, %c0_11] : memref<1x512xf32, #tpu.memory_space<vmem>>, vector<1x512xf32>
    %20 = arith.mulf %6, %18 : vector<1x512xf32>
    %21 = arith.subf %19, %20 : vector<1x512xf32>
    %22 = vector.broadcast %18 : vector<1x512xf32> to vector<256x512xf32>
    %23 = arith.mulf %2, %22 : vector<256x512xf32>
    %24 = vector.broadcast %21 : vector<1x512xf32> to vector<256x512xf32>
    %25 = arith.addf %23, %24 : vector<256x512xf32>
    %cst_12 = arith.constant 0.000000e+00 : f32
    %26 = vector.broadcast %cst_12 : f32 to vector<256x512xf32>
    %27 = arith.maximumf %25, %26 : vector<256x512xf32>
    %28 = arith.truncf %27 : vector<256x512xf32> to vector<256x512xbf16>
    %c0_13 = arith.constant 0 : index
    %c0_14 = arith.constant 0 : index
    %29 = vector.load %arg4[%c0_13, %c0_14] : memref<512x256xbf16, #tpu.memory_space<vmem>>, vector<512x256xbf16>
    %cst_15 = arith.constant dense<0.000000e+00> : vector<256x256xf32>
    %30 = tpu.matmul %28, %29, %cst_15 {dimension_numbers = #tpu.dot_dimension_numbers<[1], [0], [0], [1], [0, 0, 1, 1], [], []>} : vector<256x512xbf16>, vector<512x256xbf16>, vector<256x256xf32> -> vector<256x256xf32>
    %cst_16 = arith.constant dense<0.000000e+00> : vector<256xf32>
    %31 = vector.multi_reduction <add>, %30, %cst_16 [0] : vector<256x256xf32> to vector<256xf32>
    %32 = vector.shape_cast %31 : vector<256xf32> to vector<1x256xf32>
    %cst_17 = arith.constant 3.906250e-03 : f32
    %33 = vector.broadcast %cst_17 : f32 to vector<1x256xf32>
    %34 = arith.mulf %32, %33 : vector<1x256xf32>
    %35 = arith.mulf %30, %30 : vector<256x256xf32>
    %cst_18 = arith.constant dense<0.000000e+00> : vector<256xf32>
    %36 = vector.multi_reduction <add>, %35, %cst_18 [0] : vector<256x256xf32> to vector<256xf32>
    %37 = vector.shape_cast %36 : vector<256xf32> to vector<1x256xf32>
    %cst_19 = arith.constant 3.906250e-03 : f32
    %38 = vector.broadcast %cst_19 : f32 to vector<1x256xf32>
    %39 = arith.mulf %37, %38 : vector<1x256xf32>
    %40 = arith.mulf %34, %34 : vector<1x256xf32>
    %41 = arith.subf %39, %40 : vector<1x256xf32>
    %c0_20 = arith.constant 0 : index
    %c0_21 = arith.constant 0 : index
    %42 = vector.load %arg5[%c0_20, %c0_21] : memref<1x256xf32, #tpu.memory_space<vmem>>, vector<1x256xf32>
    %cst_22 = arith.constant 9.99999974E-6 : f32
    %43 = vector.broadcast %cst_22 : f32 to vector<1x256xf32>
    %44 = arith.addf %41, %43 : vector<1x256xf32>
    %45 = math.rsqrt %44 : vector<1x256xf32>
    %46 = arith.mulf %42, %45 : vector<1x256xf32>
    %c0_23 = arith.constant 0 : index
    %c0_24 = arith.constant 0 : index
    %47 = vector.load %arg6[%c0_23, %c0_24] : memref<1x256xf32, #tpu.memory_space<vmem>>, vector<1x256xf32>
    %48 = arith.mulf %34, %46 : vector<1x256xf32>
    %49 = arith.subf %47, %48 : vector<1x256xf32>
    %50 = vector.broadcast %46 : vector<1x256xf32> to vector<256x256xf32>
    %51 = arith.mulf %30, %50 : vector<256x256xf32>
    %52 = vector.broadcast %49 : vector<1x256xf32> to vector<256x256xf32>
    %53 = arith.addf %51, %52 : vector<256x256xf32>
    %cst_25 = arith.constant 0.000000e+00 : f32
    %54 = vector.broadcast %cst_25 : f32 to vector<256x256xf32>
    %55 = arith.maximumf %53, %54 : vector<256x256xf32>
    %56 = arith.truncf %55 : vector<256x256xf32> to vector<256x256xbf16>
    %c0_26 = arith.constant 0 : index
    %c0_27 = arith.constant 0 : index
    %57 = vector.load %arg7[%c0_26, %c0_27] : memref<256x64xbf16, #tpu.memory_space<vmem>>, vector<256x64xbf16>
    %cst_28 = arith.constant dense<0.000000e+00> : vector<256x64xf32>
    %58 = tpu.matmul %56, %57, %cst_28 {dimension_numbers = #tpu.dot_dimension_numbers<[1], [0], [0], [1], [0, 0, 1, 1], [], []>} : vector<256x256xbf16>, vector<256x64xbf16>, vector<256x64xf32> -> vector<256x64xf32>
    %cst_29 = arith.constant dense<0.000000e+00> : vector<64xf32>
    %59 = vector.multi_reduction <add>, %58, %cst_29 [0] : vector<256x64xf32> to vector<64xf32>
    %60 = vector.shape_cast %59 : vector<64xf32> to vector<1x64xf32>
    %cst_30 = arith.constant 3.906250e-03 : f32
    %61 = vector.broadcast %cst_30 : f32 to vector<1x64xf32>
    %62 = arith.mulf %60, %61 : vector<1x64xf32>
    %63 = arith.mulf %58, %58 : vector<256x64xf32>
    %cst_31 = arith.constant dense<0.000000e+00> : vector<64xf32>
    %64 = vector.multi_reduction <add>, %63, %cst_31 [0] : vector<256x64xf32> to vector<64xf32>
    %65 = vector.shape_cast %64 : vector<64xf32> to vector<1x64xf32>
    %cst_32 = arith.constant 3.906250e-03 : f32
    %66 = vector.broadcast %cst_32 : f32 to vector<1x64xf32>
    %67 = arith.mulf %65, %66 : vector<1x64xf32>
    %68 = arith.mulf %62, %62 : vector<1x64xf32>
    %69 = arith.subf %67, %68 : vector<1x64xf32>
    %c0_33 = arith.constant 0 : index
    %c0_34 = arith.constant 0 : index
    %70 = vector.load %arg8[%c0_33, %c0_34] : memref<1x64xf32, #tpu.memory_space<vmem>>, vector<1x64xf32>
    %cst_35 = arith.constant 9.99999974E-6 : f32
    %71 = vector.broadcast %cst_35 : f32 to vector<1x64xf32>
    %72 = arith.addf %69, %71 : vector<1x64xf32>
    %73 = math.rsqrt %72 : vector<1x64xf32>
    %74 = arith.mulf %70, %73 : vector<1x64xf32>
    %c0_36 = arith.constant 0 : index
    %c0_37 = arith.constant 0 : index
    %75 = vector.load %arg9[%c0_36, %c0_37] : memref<1x64xf32, #tpu.memory_space<vmem>>, vector<1x64xf32>
    %76 = arith.mulf %62, %74 : vector<1x64xf32>
    %77 = arith.subf %75, %76 : vector<1x64xf32>
    %78 = vector.broadcast %74 : vector<1x64xf32> to vector<256x64xf32>
    %79 = arith.mulf %58, %78 : vector<256x64xf32>
    %80 = vector.broadcast %77 : vector<1x64xf32> to vector<256x64xf32>
    %81 = arith.addf %79, %80 : vector<256x64xf32>
    %cst_38 = arith.constant 0.000000e+00 : f32
    %82 = vector.broadcast %cst_38 : f32 to vector<256x64xf32>
    %83 = arith.maximumf %81, %82 : vector<256x64xf32>
    %84 = arith.truncf %83 : vector<256x64xf32> to vector<256x64xbf16>
    %c0_39 = arith.constant 0 : index
    %c0_40 = arith.constant 0 : index
    %85 = vector.load %arg10[%c0_39, %c0_40] : memref<64x16xbf16, #tpu.memory_space<vmem>>, vector<64x16xbf16>
    %cst_41 = arith.constant dense<0.000000e+00> : vector<256x16xf32>
    %86 = tpu.matmul %84, %85, %cst_41 {dimension_numbers = #tpu.dot_dimension_numbers<[1], [0], [0], [1], [0, 0, 1, 1], [], []>} : vector<256x64xbf16>, vector<64x16xbf16>, vector<256x16xf32> -> vector<256x16xf32>
    %c0_42 = arith.constant 0 : index
    %c0_43 = arith.constant 0 : index
    %87 = vector.load %arg11[%c0_42, %c0_43] : memref<1x16xf32, #tpu.memory_space<vmem>>, vector<1x16xf32>
    %88 = vector.broadcast %87 : vector<1x16xf32> to vector<256x16xf32>
    %89 = arith.addf %86, %88 : vector<256x16xf32>
    %c0_44 = arith.constant 0 : index
    %c0_45 = arith.constant 0 : index
    %90 = vector.load %arg12[%c0_44, %c0_45] : memref<256x16xf32, #tpu.memory_space<vmem>>, vector<256x16xf32>
    tpu.vector_store %arg12[%c0_44, %c0_45], %89 {strides = array<i32>} : memref<256x16xf32, #tpu.memory_space<vmem>>, vector<256x16xf32>,
    return
  }
}

</mosaic_0001>

<llo_original>
// kernel: generator_forward.1
$region0: #{generator_forward.1}
  #allocation0 [shape = 'u32[]', space=smem, size = 0x4, offset = 0x4, fixed_abs, tag = 'smem constant byte address 0x4 - core index']
  #allocation1 [shape = 'u32[144,128]{1,0:T(1,128)}', space=vmem, size = 0x12000, scoped, tag = 'internal scratch']
  %s0 = inlined_call_operand.vmem [shape: bf16[256,36], index: 0, kind: input, shape index: {}]
  %s1 = inlined_call_operand.vmem [shape: bf16[36,512], index: 1, kind: input, shape index: {}]
  %s2 = inlined_call_operand.vmem [shape: f32[1,512], index: 2, kind: input, shape index: {}]
  %s3 = inlined_call_operand.vmem [shape: f32[1,512], index: 3, kind: input, shape index: {}]
  %s4 = inlined_call_operand.vmem [shape: bf16[512,256], index: 4, kind: input, shape index: {}]
  %s5 = inlined_call_operand.vmem [shape: f32[1,256], index: 5, kind: input, shape index: {}]
  %s6 = inlined_call_operand.vmem [shape: f32[1,256], index: 6, kind: input, shape index: {}]
  %s7 = inlined_call_operand.vmem [shape: bf16[256,64], index: 7, kind: input, shape index: {}]
  %s8 = inlined_call_operand.vmem [shape: f32[1,64], index: 8, kind: input, shape index: {}]
  %s9 = inlined_call_operand.vmem [shape: f32[1,64], index: 9, kind: input, shape index: {}]
  %s10 = inlined_call_operand.vmem [shape: bf16[64,16], index: 10, kind: input, shape index: {}]
  %s11 = inlined_call_operand.vmem [shape: f32[1,16], index: 11, kind: input, shape index: {}]
  %s12 = inlined_call_operand.vmem [shape: f32[256,16], index: 12, kind: output, shape index: {}]
  %s13 = sld [smem:[#allocation0]]
  $region58: #{generator_forward.1} parent=0
    _
  %s15 = ssub.s32 1, %s13
  %s16 = scalar_select 0, %s15, %s13
  // Predicated region
  $region2: #{generator_forward.1} parent=0 // pred_check
    _
  $region3: #{generator_forward.1} parent=0 // pred_check_branch
    %18 = sbr.rel (0) target = $region5
  $region4: #{generator_forward.1} parent=0 // pred_region
    _
  $region5: #{generator_forward.1} parent=0 // pred_fallthru
    _
  // Predicated region
  $region6: #{generator_forward.1} parent=0 // pred_check
    _
  $region7: #{generator_forward.1} parent=0 // pred_check_branch
    %20 = sbr.rel (0) target = $region9
  $region8: #{generator_forward.1} parent=0 // pred_region
    _
  $region9: #{generator_forward.1} parent=0 // pred_fallthru
    _
  // Predicated region
  $region10: #{generator_forward.1} parent=0 // pred_check
    _
  $region11: #{generator_forward.1} parent=0 // pred_check_branch
    %22 = sbr.rel (0) target = $region13
  $region12: #{generator_forward.1} parent=0 // pred_region
    _
  $region13: #{generator_forward.1} parent=0 // pred_fallthru
    _
  // Predicated region
  $region14: #{generator_forward.1} parent=0 // pred_check
    _
  $region15: #{generator_forward.1} parent=0 // pred_check_branch
    %24 = sbr.rel (0) target = $region17
  $region16: #{generator_forward.1} parent=0 // pred_region
    _
  $region17: #{generator_forward.1} parent=0 // pred_fallthru
    _
  // Predicated region
  $region18: #{generator_forward.1} parent=0 // pred_check
    _
  $region19: #{generator_forward.1} parent=0 // pred_check_branch
    %26 = sbr.rel (0) target = $region21
  $region20: #{generator_forward.1} parent=0 // pred_region
    _
  $region21: #{generator_forward.1} parent=0 // pred_fallthru
    _
  // Predicated region
  $region22: #{generator_forward.1} parent=0 // pred_check
    _
  $region23: #{generator_forward.1} parent=0 // pred_check_branch
    %28 = sbr.rel (0) target = $region25
  $region24: #{generator_forward.1} parent=0 // pred_region
    _
  $region25: #{generator_forward.1} parent=0 // pred_fallthru
    _
  // Predicated region
  $region26: #{generator_forward.1} parent=0 // pred_check
    _
  $region27: #{generator_forward.1} parent=0 // pred_check_branch
    %30 = sbr.rel (0) target = $region29
  $region28: #{generator_forward.1} parent=0 // pred_region
    _
  $region29: #{generator_forward.1} parent=0 // pred_fallthru
    _
  // Predicated region
  $region30: #{generator_forward.1} parent=0 // pred_check
    _
  $region31: #{generator_forward.1} parent=0 // pred_check_branch
    %32 = sbr.rel (0) target = $region33
  $region32: #{generator_forward.1} parent=0 // pred_region
    _
  $region33: #{generator_forward.1} parent=0 // pred_fallthru
    _
  // Predicated region
  $region34: #{generator_forward.1} parent=0 // pred_check
    _
  $region35: #{generator_forward.1} parent=0 // pred_check_branch
    %34 = sbr.rel (0) target = $region37
  $region36: #{generator_forward.1} parent=0 // pred_region
    _
  $region37: #{generator_forward.1} parent=0 // pred_fallthru
    _
  // Predicated region
  $region38: #{generator_forward.1} parent=0 // pred_check
    _
  $region39: #{generator_forward.1} parent=0 // pred_check_branch
    %36 = sbr.rel (0) target = $region41
  $region40: #{generator_forward.1} parent=0 // pred_region
    _
  $region41: #{generator_forward.1} parent=0 // pred_fallthru
    _
  // Predicated region
  $region42: #{generator_forward.1} parent=0 // pred_check
    _
  $region43: #{generator_forward.1} parent=0 // pred_check_branch
    %38 = sbr.rel (0) target = $region45
  $region44: #{generator_forward.1} parent=0 // pred_region
    _
  $region45: #{generator_forward.1} parent=0 // pred_fallthru
    _
  // Predicated region
  $region46: #{generator_forward.1} parent=0 // pred_check
    _
  $region47: #{generator_forward.1} parent=0 // pred_check_branch
    %40 = sbr.rel (0) target = $region49
  $region48: #{generator_forward.1} parent=0 // pred_region
    _
  $region49: #{generator_forward.1} parent=0 // pred_fallthru
    _
  %v42 = vld [vmem:[%s0] sm:$0xf]
  %v43 = vld [vmem:[%s0 + $0x4] sm:$0xf]
  %v44 = vld [vmem:[%s0 + $0x8] sm:$0xf]
  %v45 = vld [vmem:[%s0 + $0xc] sm:$0xf]
  %v46 = vld [vmem:[%s0 + $0x10] sm:$0xf]
  %v47 = vld [vmem:[%s0 + $0x14] sm:$0xf]
  %v48 = vld [vmem:[%s0 + $0x18] sm:$0xf]
  %v49 = vld [vmem:[%s0 + $0x1c] sm:$0xf]
  %v50 = vld [vmem:[%s0 + $0x20] sm:$0xf]
  %v51 = vld [vmem:[%s0 + $0x24] sm:$0xf]
  %v52 = vld [vmem:[%s0 + $0x28] sm:$0xf]
  %v53 = vld [vmem:[%s0 + $0x2c] sm:$0xf]
  %v54 = vld [vmem:[%s0 + $0x30] sm:$0xf]
  %v55 = vld [vmem:[%s0 + $0x34] sm:$0xf]
  %v56 = vld [vmem:[%s0 + $0x38] sm:$0xf]
  %v57 = vld [vmem:[%s0 + $0x3c] sm:$0xf]
  %v58 = vld [vmem:[%s0 + $0x40] sm:$0xf]
  %v59 = vld [vmem:[%s0 + $0x44] sm:$0xf]
  %v60 = vld [vmem:[%s0 + $0x48] sm:$0xf]
  %v61 = vld [vmem:[%s0 + $0x4c] sm:$0xf]
  %v62 = vld [vmem:[%s0 + $0x50] sm:$0xf]
  %v63 = vld [vmem:[%s0 + $0x54] sm:$0xf]
  %v64 = vld [vmem:[%s0 + $0x58] sm:$0xf]
  %v65 = vld [vmem:[%s0 + $0x5c] sm:$0xf]
  %v66 = vld [vmem:[%s0 + $0x60] sm:$0xf]
  %v67 = vld [vmem:[%s0 + $0x64] sm:$0xf]
  %v68 = vld [vmem:[%s0 + $0x68] sm:$0xf]
  %v69 = vld [vmem:[%s0 + $0x6c] sm:$0xf]
  %v70 = vld [vmem:[%s0 + $0x70] sm:$0xf]
  %v71 = vld [vmem:[%s0 + $0x74] sm:$0xf]
  %v72 = vld [vmem:[%s0 + $0x78] sm:$0xf]
  %v73 = vld [vmem:[%s0 + $0x7c] sm:$0xf]
  %v74 = vld [vmem:[%s1] sm:$0xff]
  %v75 = vld [vmem:[%s1 + $0x8] sm:$0xff]
  %v76 = vld [vmem:[%s1 + $0x10] sm:$0xff]
  %v77 = vld [vmem:[%s1 + $0x18] sm:$0xff]
  %v78 = vld [vmem:[%s1 + $0x20] sm:$0xff]
  %v79 = vld [vmem:[%s1 + $0x28] sm:$0xff]
  %v80 = vld [vmem:[%s1 + $0x30] sm:$0xff]
  %v81 = vld [vmem:[%s1 + $0x38] sm:$0xff]
  %v82 = vld [vmem:[%s1 + $0x40] sm:$0x33]
  %v83 = vld [vmem:[%s1 + $0x48] sm:$0x33]
  %v116 = vunpack.c.l.b16 %v42
  %v117 = vunpack.c.l.b16 %v43
  %v118 = vunpack.c.l.b16 %v44
  %v119 = vunpack.c.l.b16 %v45
  %v120 = vunpack.c.l.b16 %v46
  %v121 = vunpack.c.l.b16 %v47
  %v122 = vunpack.c.l.b16 %v48
  %v123 = vunpack.c.l.b16 %v49
  %v124 = vunpack.c.l.b16 %v50
  %v125 = vunpack.c.l.b16 %v51
  %v126 = vunpack.c.l.b16 %v52
  %v127 = vunpack.c.l.b16 %v53
  %v128 = vunpack.c.l.b16 %v54
  %v129 = vunpack.c.l.b16 %v55
  %v130 = vunpack.c.l.b16 %v56
  %v131 = vunpack.c.l.b16 %v57
  %v132 = vunpack.c.l.b16 %v58
  %v133 = vunpack.c.l.b16 %v59
  %v134 = vunpack.c.l.b16 %v60
  %v135 = vunpack.c.l.b16 %v61
  %v136 = vunpack.c.l.b16 %v62
  %v137 = vunpack.c.l.b16 %v63
  %v138 = vunpack.c.l.b16 %v64
  %v139 = vunpack.c.l.b16 %v65
  %v140 = vunpack.c.l.b16 %v66
  %v141 = vunpack.c.l.b16 %v67
  %v142 = vunpack.c.l.b16 %v68
  %v143 = vunpack.c.l.b16 %v69
  %v144 = vunpack.c.l.b16 %v70
  %v145 = vunpack.c.l.b16 %v71
  %v146 = vunpack.c.l.b16 %v72
  %v147 = vunpack.c.l.b16 %v73
  %v148 = vpack.c.b16 %v117, %v116
  %v149 = vpack.c.b16 %v119, %v118
  %v150 = vpack.c.b16 %v121, %v120
  %v151 = vpack.c.b16 %v123, %v122
  %v152 = vpack.c.b16 %v125, %v124
  %v153 = vpack.c.b16 %v127, %v126
  %v154 = vpack.c.b16 %v129, %v128
  %v155 = vpack.c.b16 %v131, %v130
  %v156 = vpack.c.b16 %v133, %v132
  %v157 = vpack.c.b16 %v135, %v134
  %v158 = vpack.c.b16 %v137, %v136
  %v159 = vpack.c.b16 %v139, %v138
  %v160 = vpack.c.b16 %v141, %v140
  %v161 = vpack.c.b16 %v143, %v142
  %v162 = vpack.c.b16 %v145, %v144
  %v163 = vpack.c.b16 %v147, %v146
  %v174 = vunpack.c.l.b16 %v74
  %v175 = vunpack.c.h.b16 %v74
  %v176 = vunpack.c.l.b16 %v75
  %v177 = vunpack.c.h.b16 %v75
  %v178 = vunpack.c.l.b16 %v76
  %v179 = vunpack.c.h.b16 %v76
  %v180 = vunpack.c.l.b16 %v77
  %v181 = vunpack.c.h.b16 %v77
  %v182 = vunpack.c.l.b16 %v78
  %v183 = vunpack.c.h.b16 %v78
  %v184 = vunpack.c.l.b16 %v79
  %v185 = vunpack.c.h.b16 %v79
  %v186 = vunpack.c.l.b16 %v80
  %v187 = vunpack.c.h.b16 %v80
  %v188 = vunpack.c.l.b16 %v81
  %v189 = vunpack.c.h.b16 %v81
  %v190 = vunpack.c.l.b16 %v82
  %v191 = vunpack.c.h.b16 %v82
  %v192 = vunpack.c.l.b16 %v83
  %v193 = vunpack.c.h.b16 %v83
  %v194 = vpack.c.b16 %v178, %v174
  %v195 = vpack.c.b16 %v179, %v175
  %v196 = vpack.c.b16 %v180, %v176
  %v197 = vpack.c.b16 %v181, %v177
  %v198 = vpack.c.b16 %v186, %v182
  %v199 = vpack.c.b16 %v187, %v183
  %v200 = vpack.c.b16 %v188, %v184
  %v201 = vpack.c.b16 %v189, %v185
  %v202 = vpack.c.b16 %v190, %v190
  %v203 = vpack.c.b16 %v191, %v191
  %v204 = vpack.c.b16 %v192, %v192
  %v205 = vpack.c.b16 %v193, %v193
  %vm214 = vcmask 293888
  %v216 = vsel %vm214, %v148, 0
  %v219 = vsel %vm214, %v149, 0
  %v222 = vsel %vm214, %v150, 0
  %v225 = vsel %vm214, %v151, 0
  %v228 = vsel %vm214, %v152, 0
  %v231 = vsel %vm214, %v153, 0
  %v234 = vsel %vm214, %v154, 0
  %v237 = vsel %vm214, %v155, 0
  %v240 = vsel %vm214, %v156, 0
  %v243 = vsel %vm214, %v157, 0
  %v246 = vsel %vm214, %v158, 0
  %v249 = vsel %vm214, %v159, 0
  %v252 = vsel %vm214, %v160, 0
  %v255 = vsel %vm214, %v161, 0
  %v258 = vsel %vm214, %v162, 0
  %v261 = vsel %vm214, %v163, 0
  %vm263 = vcmask 1041408
  %v265 = vsel %vm263, %v202, 0
  %v268 = vsel %vm263, %v203, 0
  %v271 = vsel %vm263, %v204, 0
  %v274 = vsel %vm263, %v205, 0
  %276 = vmatprep.subr.bf16.mxu0 0
  %277 = vmatpush1.bf16.msra.mxu0 0
  %278 = vmatprep.subr.bf16.mxu0 0
  %279 = vmatpush1.bf16.msra.mxu0 0
  %280 = vmatprep.subr.bf16.mxu0 0
  %281 = vmatpush1.bf16.msra.mxu0 0
  %282 = vmatprep.subr.bf16.mxu0 0
  %283 = vmatpush1.bf16.msra.mxu0 0
  %284 = vmatprep.subr.bf16.mxu0 0
  %285 = vmatpush1.bf16.msra.mxu0 0
  %286 = vmatprep.subr.bf16.mxu0 %v268
  %287 = vmatpush1.bf16.msra.mxu0 %v265
  %288 = vmatprep.subr.bf16.mxu0 %v199
  %289 = vmatpush1.bf16.msra.mxu0 %v198
  %290 = vmatprep.subr.bf16.mxu0 %v195
  %291 = vmatpush1.bf16.msra.mxu0 %v194
  %292 = vmatprep.subr.bf16.mxu0 0
  %293 = vmatpush2.bf16.msra.mxu0 0
  %294 = vmatprep.subr.bf16.mxu0 0
  %295 = vmatpush2.bf16.msra.mxu0 0
  %296 = vmatprep.subr.bf16.mxu0 0
  %297 = vmatpush2.bf16.msra.mxu0 0
  %298 = vmatprep.subr.bf16.mxu0 0
  %299 = vmatpush2.bf16.msra.mxu0 0
  %300 = vmatprep.subr.bf16.mxu0 0
  %301 = vmatpush2.bf16.msra.mxu0 0
  %302 = vmatprep.subr.bf16.mxu0 0
  %303 = vmatpush2.bf16.msra.mxu0 0
  %304 = vmatprep.subr.bf16.mxu0 0
  %305 = vmatpush2.bf16.msra.mxu0 0
  %306 = vmatprep.subr.bf16.mxu0 0
  %307 = vmatpush2.bf16.msra.mxu0 0
  %308 = vmatprep.mubr.bf16.mxu0 0
  %309 = vmatmul.mubr.bf16.gmra.mxu0 %v216
  %v310 = vpop.f32.mrf.mxu0
  %v311 = vadd.f32 0.0, %v310
  %v312 = vpop.f32.mrf.mxu0
  %v313 = vadd.f32 0.0, %v312
  %v314 = vpop.f32.mrf.mxu0
  %v315 = vadd.f32 0.0, %v314
  %v316 = vpop.f32.mrf.mxu0
  %v317 = vadd.f32 0.0, %v316
  %318 = vmatprep.mubr.bf16.mxu0 0
  %319 = vmatmul.mubr.bf16.gmra.mxu0 %v219
  %v320 = vpop.f32.mrf.mxu0
  %v321 = vadd.f32 0.0, %v320
  %v322 = vpop.f32.mrf.mxu0
  %v323 = vadd.f32 0.0, %v322
  %v324 = vpop.f32.mrf.mxu0
  %v325 = vadd.f32 0.0, %v324
  %v326 = vpop.f32.mrf.mxu0
  %v327 = vadd.f32 0.0, %v326
  %328 = vmatprep.mubr.bf16.mxu0 0
  %329 = vmatmul.mubr.bf16.gmra.mxu0 %v222
  %v330 = vpop.f32.mrf.mxu0
  %v331 = vadd.f32 0.0, %v330
  %v332 = vpop.f32.mrf.mxu0
  %v333 = vadd.f32 0.0, %v332
  %v334 = vpop.f32.mrf.mxu0
  %v335 = vadd.f32 0.0, %v334
  %v336 = vpop.f32.mrf.mxu0
  %v337 = vadd.f32 0.0, %v336
  %338 = vmatprep.mubr.bf16.mxu0 0
  %339 = vmatmul.mubr.bf16.gmra.mxu0 %v225
  %v340 = vpop.f32.mrf.mxu0
  %v341 = vadd.f32 0.0, %v340
  %v342 = vpop.f32.mrf.mxu0
  %v343 = vadd.f32 0.0, %v342
  %v344 = vpop.f32.mrf.mxu0
  %v345 = vadd.f32 0.0, %v344
  %v346 = vpop.f32.mrf.mxu0
  %v347 = vadd.f32 0.0, %v346
  %348 = vmatprep.mubr.bf16.mxu0 0
  %349 = vmatmul.mubr.bf16.gmra.mxu0 %v228
  %v350 = vpop.f32.mrf.mxu0
  %v351 = vadd.f32 0.0, %v350
  %v352 = vpop.f32.mrf.mxu0
  %v353 = vadd.f32 0.0, %v352
  %v354 = vpop.f32.mrf.mxu0
  %v355 = vadd.f32 0.0, %v354
  %v356 = vpop.f32.mrf.mxu0
  %v357 = vadd.f32 0.0, %v356
  %358 = vmatprep.mubr.bf16.mxu0 0
  %359 = vmatmul.mubr.bf16.gmra.mxu0 %v231
  %v360 = vpop.f32.mrf.mxu0
  %v361 = vadd.f32 0.0, %v360
  %v362 = vpop.f32.mrf.mxu0
  %v363 = vadd.f32 0.0, %v362
  %v364 = vpop.f32.mrf.mxu0
  %v365 = vadd.f32 0.0, %v364
  %v366 = vpop.f32.mrf.mxu0
  %v367 = vadd.f32 0.0, %v366
  %368 = vmatprep.mubr.bf16.mxu0 0
  %369 = vmatmul.mubr.bf16.gmra.mxu0 %v234
  %v370 = vpop.f32.mrf.mxu0
  %v371 = vadd.f32 0.0, %v370
  %v372 = vpop.f32.mrf.mxu0
  %v373 = vadd.f32 0.0, %v372
  %v374 = vpop.f32.mrf.mxu0
  %v375 = vadd.f32 0.0, %v374
  %v376 = vpop.f32.mrf.mxu0
  %v377 = vadd.f32 0.0, %v376
  %378 = vmatprep.mubr.bf16.mxu0 0
  %379 = vmatmul.mubr.bf16.gmra.mxu0 %v237
  %v380 = vpop.f32.mrf.mxu0
  %v381 = vadd.f32 0.0, %v380
  %v382 = vpop.f32.mrf.mxu0
  %v383 = vadd.f32 0.0, %v382
  %v384 = vpop.f32.mrf.mxu0
  %v385 = vadd.f32 0.0, %v384
  %v386 = vpop.f32.mrf.mxu0
  %v387 = vadd.f32 0.0, %v386
  %388 = vmatprep.mubr.bf16.mxu0 0
  %389 = vmatmul.mubr.bf16.gmra.mxu0 %v240
  %v390 = vpop.f32.mrf.mxu0
  %v391 = vadd.f32 0.0, %v390
  %v392 = vpop.f32.mrf.mxu0
  %v393 = vadd.f32 0.0, %v392
  %v394 = vpop.f32.mrf.mxu0
  %v395 = vadd.f32 0.0, %v394
  %v396 = vpop.f32.mrf.mxu0
  %v397 = vadd.f32 0.0, %v396
  %398 = vmatprep.mubr.bf16.mxu0 0
  %399 = vmatmul.mubr.bf16.gmra.mxu0 %v243
  %v400 = vpop.f32.mrf.mxu0
  %v401 = vadd.f32 0.0, %v400
  %v402 = vpop.f32.mrf.mxu0
  %v403 = vadd.f32 0.0, %v402
  %v404 = vpop.f32.mrf.mxu0
  %v405 = vadd.f32 0.0, %v404
  %v406 = vpop.f32.mrf.mxu0
  %v407 = vadd.f32 0.0, %v406
  %408 = vmatprep.mubr.bf16.mxu0 0
  %409 = vmatmul.mubr.bf16.gmra.mxu0 %v246
  %v410 = vpop.f32.mrf.mxu0
  %v411 = vadd.f32 0.0, %v410
  %v412 = vpop.f32.mrf.mxu0
  %v413 = vadd.f32 0.0, %v412
  %v414 = vpop.f32.mrf.mxu0
  %v415 = vadd.f32 0.0, %v414
  %v416 = vpop.f32.mrf.mxu0
  %v417 = vadd.f32 0.0, %v416
  %418 = vmatprep.mubr.bf16.mxu0 0
  %419 = vmatmul.mubr.bf16.gmra.mxu0 %v249
  %v420 = vpop.f32.mrf.mxu0
  %v421 = vadd.f32 0.0, %v420
  %v422 = vpop.f32.mrf.mxu0
  %v423 = vadd.f32 0.0, %v422
  %v424 = vpop.f32.mrf.mxu0
  %v425 = vadd.f32 0.0, %v424
  %v426 = vpop.f32.mrf.mxu0
  %v427 = vadd.f32 0.0, %v426
  %428 = vmatprep.mubr.bf16.mxu0 0
  %429 = vmatmul.mubr.bf16.gmra.mxu0 %v252
  %v430 = vpop.f32.mrf.mxu0
  %v431 = vadd.f32 0.0, %v430
  %v432 = vpop.f32.mrf.mxu0
  %v433 = vadd.f32 0.0, %v432
  %v434 = vpop.f32.mrf.mxu0
  %v435 = vadd.f32 0.0, %v434
  %v436 = vpop.f32.mrf.mxu0
  %v437 = vadd.f32 0.0, %v436
  %438 = vmatprep.mubr.bf16.mxu0 0
  %439 = vmatmul.mubr.bf16.gmra.mxu0 %v255
  %v440 = vpop.f32.mrf.mxu0
  %v441 = vadd.f32 0.0, %v440
  %v442 = vpop.f32.mrf.mxu0
  %v443 = vadd.f32 0.0, %v442
  %v444 = vpop.f32.mrf.mxu0
  %v445 = vadd.f32 0.0, %v444
  %v446 = vpop.f32.mrf.mxu0
  %v447 = vadd.f32 0.0, %v446
  %448 = vmatprep.mubr.bf16.mxu0 0
  %449 = vmatmul.mubr.bf16.gmra.mxu0 %v258
  %v450 = vpop.f32.mrf.mxu0
  %v451 = vadd.f32 0.0, %v450
  %v452 = vpop.f32.mrf.mxu0
  %v453 = vadd.f32 0.0, %v452
  %v454 = vpop.f32.mrf.mxu0
  %v455 = vadd.f32 0.0, %v454
  %v456 = vpop.f32.mrf.mxu0
  %v457 = vadd.f32 0.0, %v456
  %458 = vmatprep.mubr.bf16.mxu0 0
  %459 = vmatmul.mubr.bf16.gmra.mxu0 %v261
  %v460 = vpop.f32.mrf.mxu0
  %v461 = vadd.f32 0.0, %v460
  %v462 = vpop.f32.mrf.mxu0
  %v463 = vadd.f32 0.0, %v462
  %v464 = vpop.f32.mrf.mxu0
  %v465 = vadd.f32 0.0, %v464
  %v466 = vpop.f32.mrf.mxu0
  %v467 = vadd.f32 0.0, %v466
  %468 = vdwg.mxu0
  %469 = vmatprep.subr.bf16.mxu0 0
  %470 = vmatpush1.bf16.msra.mxu0 0
  %471 = vmatprep.subr.bf16.mxu0 0
  %472 = vmatpush1.bf16.msra.mxu0 0
  %473 = vmatprep.subr.bf16.mxu0 0
  %474 = vmatpush1.bf16.msra.mxu0 0
  %475 = vmatprep.subr.bf16.mxu0 0
  %476 = vmatpush1.bf16.msra.mxu0 0
  %477 = vmatprep.subr.bf16.mxu0 0
  %478 = vmatpush1.bf16.msra.mxu0 0
  %479 = vmatprep.subr.bf16.mxu0 %v274
  %480 = vmatpush1.bf16.msra.mxu0 %v271
  %481 = vmatprep.subr.bf16.mxu0 %v201
  %482 = vmatpush1.bf16.msra.mxu0 %v200
  %483 = vmatprep.subr.bf16.mxu0 %v197
  %484 = vmatpush1.bf16.msra.mxu0 %v196
  %485 = vmatprep.subr.bf16.mxu0 0
  %486 = vmatpush2.bf16.msra.mxu0 0
  %487 = vmatprep.subr.bf16.mxu0 0
  %488 = vmatpush2.bf16.msra.mxu0 0
  %489 = vmatprep.subr.bf16.mxu0 0
  %490 = vmatpush2.bf16.msra.mxu0 0
  %491 = vmatprep.subr.bf16.mxu0 0
  %492 = vmatpush2.bf16.msra.mxu0 0
  %493 = vmatprep.subr.bf16.mxu0 0
  %494 = vmatpush2.bf16.msra.mxu0 0
  %495 = vmatprep.subr.bf16.mxu0 0
  %496 = vmatpush2.bf16.msra.mxu0 0
  %497 = vmatprep.subr.bf16.mxu0 0
  %498 = vmatpush2.bf16.msra.mxu0 0
  %499 = vmatprep.subr.bf16.mxu0 0
  %500 = vmatpush2.bf16.msra.mxu0 0
  %501 = vmatprep.mubr.bf16.mxu0 0
  %502 = vmatmul.mubr.bf16.gmra.mxu0 %v216
  %v503 = vpop.f32.mrf.mxu0
  %v504 = vadd.f32 0.0, %v503
  %v505 = vpop.f32.mrf.mxu0
  %v506 = vadd.f32 0.0, %v505
  %v507 = vpop.f32.mrf.mxu0
  %v508 = vadd.f32 0.0, %v507
  %v509 = vpop.f32.mrf.mxu0
  %v510 = vadd.f32 0.0, %v509
  %511 = vmatprep.mubr.bf16.mxu0 0
  %512 = vmatmul.mubr.bf16.gmra.mxu0 %v219
  %v513 = vpop.f32.mrf.mxu0
  %v514 = vadd.f32 0.0, %v513
  %v515 = vpop.f32.mrf.mxu0
  %v516 = vadd.f32 0.0, %v515
  %v517 = vpop.f32.mrf.mxu0
  %v518 = vadd.f32 0.0, %v517
  %v519 = vpop.f32.mrf.mxu0
  %v520 = vadd.f32 0.0, %v519
  %521 = vmatprep.mubr.bf16.mxu0 0
  %522 = vmatmul.mubr.bf16.gmra.mxu0 %v222
  %v523 = vpop.f32.mrf.mxu0
  %v524 = vadd.f32 0.0, %v523
  %v525 = vpop.f32.mrf.mxu0
  %v526 = vadd.f32 0.0, %v525
  %v527 = vpop.f32.mrf.mxu0
  %v528 = vadd.f32 0.0, %v527
  %v529 = vpop.f32.mrf.mxu0
  %v530 = vadd.f32 0.0, %v529
  %531 = vmatprep.mubr.bf16.mxu0 0
  %532 = vmatmul.mubr.bf16.gmra.mxu0 %v225
  %v533 = vpop.f32.mrf.mxu0
  %v534 = vadd.f32 0.0, %v533
  %v535 = vpop.f32.mrf.mxu0
  %v536 = vadd.f32 0.0, %v535
  %v537 = vpop.f32.mrf.mxu0
  %v538 = vadd.f32 0.0, %v537
  %v539 = vpop.f32.mrf.mxu0
  %v540 = vadd.f32 0.0, %v539
  %541 = vmatprep.mubr.bf16.mxu0 0
  %542 = vmatmul.mubr.bf16.gmra.mxu0 %v228
  %v543 = vpop.f32.mrf.mxu0
  %v544 = vadd.f32 0.0, %v543
  %v545 = vpop.f32.mrf.mxu0
  %v546 = vadd.f32 0.0, %v545
  %v547 = vpop.f32.mrf.mxu0
  %v548 = vadd.f32 0.0, %v547
  %v549 = vpop.f32.mrf.mxu0
  %v550 = vadd.f32 0.0, %v549
  %551 = vmatprep.mubr.bf16.mxu0 0
  %552 = vmatmul.mubr.bf16.gmra.mxu0 %v231
  %v553 = vpop.f32.mrf.mxu0
  %v554 = vadd.f32 0.0, %v553
  %v555 = vpop.f32.mrf.mxu0
  %v556 = vadd.f32 0.0, %v555
  %v557 = vpop.f32.mrf.mxu0
  %v558 = vadd.f32 0.0, %v557
  %v559 = vpop.f32.mrf.mxu0
  %v560 = vadd.f32 0.0, %v559
  %561 = vmatprep.mubr.bf16.mxu0 0
  %562 = vmatmul.mubr.bf16.gmra.mxu0 %v234
  %v563 = vpop.f32.mrf.mxu0
  %v564 = vadd.f32 0.0, %v563
  %v565 = vpop.f32.mrf.mxu0
  %v566 = vadd.f32 0.0, %v565
  %v567 = vpop.f32.mrf.mxu0
  %v568 = vadd.f32 0.0, %v567
  %v569 = vpop.f32.mrf.mxu0
  %v570 = vadd.f32 0.0, %v569
  %571 = vmatprep.mubr.bf16.mxu0 0
  %572 = vmatmul.mubr.bf16.gmra.mxu0 %v237
  %v573 = vpop.f32.mrf.mxu0
  %v574 = vadd.f32 0.0, %v573
  %v575 = vpop.f32.mrf.mxu0
  %v576 = vadd.f32 0.0, %v575
  %v577 = vpop.f32.mrf.mxu0
  %v578 = vadd.f32 0.0, %v577
  %v579 = vpop.f32.mrf.mxu0
  %v580 = vadd.f32 0.0, %v579
  %581 = vmatprep.mubr.bf16.mxu0 0
  %582 = vmatmul.mubr.bf16.gmra.mxu0 %v240
  %v583 = vpop.f32.mrf.mxu0
  %v584 = vadd.f32 0.0, %v583
  %v585 = vpop.f32.mrf.mxu0
  %v586 = vadd.f32 0.0, %v585
  %v587 = vpop.f32.mrf.mxu0
  %v588 = vadd.f32 0.0, %v587
  %v589 = vpop.f32.mrf.mxu0
  %v590 = vadd.f32 0.0, %v589
  %591 = vmatprep.mubr.bf16.mxu0 0
  %592 = vmatmul.mubr.bf16.gmra.mxu0 %v243
  %v593 = vpop.f32.mrf.mxu0
  %v594 = vadd.f32 0.0, %v593
  %v595 = vpop.f32.mrf.mxu0
  %v596 = vadd.f32 0.0, %v595
  %v597 = vpop.f32.mrf.mxu0
  %v598 = vadd.f32 0.0, %v597
  %v599 = vpop.f32.mrf.mxu0
  %v600 = vadd.f32 0.0, %v599
  %601 = vmatprep.mubr.bf16.mxu0 0
  %602 = vmatmul.mubr.bf16.gmra.mxu0 %v246
  %v603 = vpop.f32.mrf.mxu0
  %v604 = vadd.f32 0.0, %v603
  %v605 = vpop.f32.mrf.mxu0
  %v606 = vadd.f32 0.0, %v605
  %v607 = vpop.f32.mrf.mxu0
  %v608 = vadd.f32 0.0, %v607
  %v609 = vpop.f32.mrf.mxu0
  %v610 = vadd.f32 0.0, %v609
  %611 = vmatprep.mubr.bf16.mxu0 0
  %612 = vmatmul.mubr.bf16.gmra.mxu0 %v249
  %v613 = vpop.f32.mrf.mxu0
  %v614 = vadd.f32 0.0, %v613
  %v615 = vpop.f32.mrf.mxu0
  %v616 = vadd.f32 0.0, %v615
  %v617 = vpop.f32.mrf.mxu0
  %v618 = vadd.f32 0.0, %v617
  %v619 = vpop.f32.mrf.mxu0
  %v620 = vadd.f32 0.0, %v619
  %621 = vmatprep.mubr.bf16.mxu0 0
  %622 = vmatmul.mubr.bf16.gmra.mxu0 %v252
  %v623 = vpop.f32.mrf.mxu0
  %v624 = vadd.f32 0.0, %v623
  %v625 = vpop.f32.mrf.mxu0
  %v626 = vadd.f32 0.0, %v625
  %v627 = vpop.f32.mrf.mxu0
  %v628 = vadd.f32 0.0, %v627
  %v629 = vpop.f32.mrf.mxu0
  %v630 = vadd.f32 0.0, %v629
  %631 = vmatprep.mubr.bf16.mxu0 0
  %632 = vmatmul.mubr.bf16.gmra.mxu0 %v255
  %v633 = vpop.f32.mrf.mxu0
  %v634 = vadd.f32 0.0, %v633
  %v635 = vpop.f32.mrf.mxu0
  %v636 = vadd.f32 0.0, %v635
  %v637 = vpop.f32.mrf.mxu0
  %v638 = vadd.f32 0.0, %v637
  %v639 = vpop.f32.mrf.mxu0
  %v640 = vadd.f32 0.0, %v639
  %641 = vmatprep.mubr.bf16.mxu0 0
  %642 = vmatmul.mubr.bf16.gmra.mxu0 %v258
  %v643 = vpop.f32.mrf.mxu0
  %v644 = vadd.f32 0.0, %v643
  %v645 = vpop.f32.mrf.mxu0
  %v646 = vadd.f32 0.0, %v645
  %v647 = vpop.f32.mrf.mxu0
  %v648 = vadd.f32 0.0, %v647
  %v649 = vpop.f32.mrf.mxu0
  %v650 = vadd.f32 0.0, %v649
  %651 = vmatprep.mubr.bf16.mxu0 0
  %652 = vmatmul.mubr.bf16.gmra.mxu0 %v261
  %v653 = vpop.f32.mrf.mxu0
  %v654 = vadd.f32 0.0, %v653
  %v655 = vpop.f32.mrf.mxu0
  %v656 = vadd.f32 0.0, %v655
  %v657 = vpop.f32.mrf.mxu0
  %v658 = vadd.f32 0.0, %v657
  %v659 = vpop.f32.mrf.mxu0
  %v660 = vadd.f32 0.0, %v659
  %661 = vdwg.mxu0
  %v662 = vadd.f32 %v311, %v315
  %v663 = vadd.f32 %v662, %v321
  %v664 = vadd.f32 %v663, %v325
  %v665 = vadd.f32 %v664, %v331
  %v666 = vadd.f32 %v665, %v335
  %v667 = vadd.f32 %v666, %v341
  %v668 = vadd.f32 %v667, %v345
  %v669 = vadd.f32 %v668, %v351
  %v670 = vadd.f32 %v669, %v355
  %v671 = vadd.f32 %v670, %v361
  %v672 = vadd.f32 %v671, %v365
  %v673 = vadd.f32 %v672, %v371
  %v674 = vadd.f32 %v673, %v375
  %v675 = vadd.f32 %v674, %v381
  %v676 = vadd.f32 %v675, %v385
  %v677 = vadd.f32 %v676, %v391
  %v678 = vadd.f32 %v677, %v395
  %v679 = vadd.f32 %v678, %v401
  %v680 = vadd.f32 %v679, %v405
  %v681 = vadd.f32 %v680, %v411
  %v682 = vadd.f32 %v681, %v415
  %v683 = vadd.f32 %v682, %v421
  %v684 = vadd.f32 %v683, %v425
  %v685 = vadd.f32 %v684, %v431
  %v686 = vadd.f32 %v685, %v435
  %v687 = vadd.f32 %v686, %v441
  %v688 = vadd.f32 %v687, %v445
  %v689 = vadd.f32 %v688, %v451
  %v690 = vadd.f32 %v689, %v455
  %v691 = vadd.f32 %v690, %v461
  %v692 = vadd.f32 %v691, %v465
  %v693 = vrot.slane %v692, 4
  %v694 = vadd.f32 %v692, %v693
  %v695 = vrot.slane %v694, 2
  %v696 = vadd.f32 %v694, %v695
  %v697 = vrot.slane %v696, 1
  %v698 = vadd.f32 %v696, %v697
  %v699 = vadd.f32 %v313, %v317
  %v700 = vadd.f32 %v699, %v323
  %v701 = vadd.f32 %v700, %v327
  %v702 = vadd.f32 %v701, %v333
  %v703 = vadd.f32 %v702, %v337
  %v704 = vadd.f32 %v703, %v343
  %v705 = vadd.f32 %v704, %v347
  %v706 = vadd.f32 %v705, %v353
  %v707 = vadd.f32 %v706, %v357
  %v708 = vadd.f32 %v707, %v363
  %v709 = vadd.f32 %v708, %v367
  %v710 = vadd.f32 %v709, %v373
  %v711 = vadd.f32 %v710, %v377
  %v712 = vadd.f32 %v711, %v383
  %v713 = vadd.f32 %v712, %v387
  %v714 = vadd.f32 %v713, %v393
  %v715 = vadd.f32 %v714, %v397
  %v716 = vadd.f32 %v715, %v403
  %v717 = vadd.f32 %v716, %v407
  %v718 = vadd.f32 %v717, %v413
  %v719 = vadd.f32 %v718, %v417
  %v720 = vadd.f32 %v719, %v423
  %v721 = vadd.f32 %v720, %v427
  %v722 = vadd.f32 %v721, %v433
  %v723 = vadd.f32 %v722, %v437
  %v724 = vadd.f32 %v723, %v443
  %v725 = vadd.f32 %v724, %v447
  %v726 = vadd.f32 %v725, %v453
  %v727 = vadd.f32 %v726, %v457
  %v728 = vadd.f32 %v727, %v463
  %v729 = vadd.f32 %v728, %v467
  %v730 = vrot.slane %v729, 4
  %v731 = vadd.f32 %v729, %v730
  %v732 = vrot.slane %v731, 2
  %v733 = vadd.f32 %v731, %v732
  %v734 = vrot.slane %v733, 1
  %v735 = vadd.f32 %v733, %v734
  %v736 = vadd.f32 %v504, %v508
  %v737 = vadd.f32 %v736, %v514
  %v738 = vadd.f32 %v737, %v518
  %v739 = vadd.f32 %v738, %v524
  %v740 = vadd.f32 %v739, %v528
  %v741 = vadd.f32 %v740, %v534
  %v742 = vadd.f32 %v741, %v538
  %v743 = vadd.f32 %v742, %v544
  %v744 = vadd.f32 %v743, %v548
  %v745 = vadd.f32 %v744, %v554
  %v746 = vadd.f32 %v745, %v558
  %v747 = vadd.f32 %v746, %v564
  %v748 = vadd.f32 %v747, %v568
  %v749 = vadd.f32 %v748, %v574
  %v750 = vadd.f32 %v749, %v578
  %v751 = vadd.f32 %v750, %v584
  %v752 = vadd.f32 %v751, %v588
  %v753 = vadd.f32 %v752, %v594
  %v754 = vadd.f32 %v753, %v598
  %v755 = vadd.f32 %v754, %v604
  %v756 = vadd.f32 %v755, %v608
  %v757 = vadd.f32 %v756, %v614
  %v758 = vadd.f32 %v757, %v618
  %v759 = vadd.f32 %v758, %v624
  %v760 = vadd.f32 %v759, %v628
  %v761 = vadd.f32 %v760, %v634
  %v762 = vadd.f32 %v761, %v638
  %v763 = vadd.f32 %v762, %v644
  %v764 = vadd.f32 %v763, %v648
  %v765 = vadd.f32 %v764, %v654
  %v766 = vadd.f32 %v765, %v658
  %v767 = vrot.slane %v766, 4
  %v768 = vadd.f32 %v766, %v767
  %v769 = vrot.slane %v768, 2
  %v770 = vadd.f32 %v768, %v769
  %v771 = vrot.slane %v770, 1
  %v772 = vadd.f32 %v770, %v771
  %v773 = vadd.f32 %v506, %v510
  %v774 = vadd.f32 %v773, %v516
  %v775 = vadd.f32 %v774, %v520
  %v776 = vadd.f32 %v775, %v526
  %v777 = vadd.f32 %v776, %v530
  %v778 = vadd.f32 %v777, %v536
  %v779 = vadd.f32 %v778, %v540
  %v780 = vadd.f32 %v779, %v546
  %v781 = vadd.f32 %v780, %v550
  %v782 = vadd.f32 %v781, %v556
  %v783 = vadd.f32 %v782, %v560
  %v784 = vadd.f32 %v783, %v566
  %v785 = vadd.f32 %v784, %v570
  %v786 = vadd.f32 %v785, %v576
  %v787 = vadd.f32 %v786, %v580
  %v788 = vadd.f32 %v787, %v586
  %v789 = vadd.f32 %v788, %v590
  %v790 = vadd.f32 %v789, %v596
  %v791 = vadd.f32 %v790, %v600
  %v792 = vadd.f32 %v791, %v606
  %v793 = vadd.f32 %v792, %v610
  %v794 = vadd.f32 %v793, %v616
  %v795 = vadd.f32 %v794, %v620
  %v796 = vadd.f32 %v795, %v626
  %v797 = vadd.f32 %v796, %v630
  %v798 = vadd.f32 %v797, %v636
  %v799 = vadd.f32 %v798, %v640
  %v800 = vadd.f32 %v799, %v646
  %v801 = vadd.f32 %v800, %v650
  %v802 = vadd.f32 %v801, %v656
  %v803 = vadd.f32 %v802, %v660
  %v804 = vrot.slane %v803, 4
  %v805 = vadd.f32 %v803, %v804
  %v806 = vrot.slane %v805, 2
  %v807 = vadd.f32 %v805, %v806
  %v808 = vrot.slane %v807, 1
  %v809 = vadd.f32 %v807, %v808
  %v810 = vmul.f32 %v698, 0.00390625
  %v811 = vmul.f32 %v735, 0.00390625
  %v812 = vmul.f32 %v772, 0.00390625
  %v813 = vmul.f32 %v809, 0.00390625
  %v814 = vmul.f32 %v311, %v311
  %v815 = vmul.f32 %v313, %v313
  %v816 = vmul.f32 %v504, %v504
  %v817 = vmul.f32 %v506, %v506
  %v818 = vmul.f32 %v315, %v315
  %v819 = vmul.f32 %v317, %v317
  %v820 = vmul.f32 %v508, %v508
  %v821 = vmul.f32 %v510, %v510
  %v822 = vmul.f32 %v321, %v321
  %v823 = vmul.f32 %v323, %v323
  %v824 = vmul.f32 %v514, %v514
  %v825 = vmul.f32 %v516, %v516
  %v826 = vmul.f32 %v325, %v325
  %v827 = vmul.f32 %v327, %v327
  %v828 = vmul.f32 %v518, %v518
  %v829 = vmul.f32 %v520, %v520
  %v830 = vmul.f32 %v331, %v331
  %v831 = vmul.f32 %v333, %v333
  %v832 = vmul.f32 %v524, %v524
  %v833 = vmul.f32 %v526, %v526
  %v834 = vmul.f32 %v335, %v335
  %v835 = vmul.f32 %v337, %v337
  %v836 = vmul.f32 %v528, %v528
  %v837 = vmul.f32 %v530, %v530
  %v838 = vmul.f32 %v341, %v341
  %v839 = vmul.f32 %v343, %v343
  %v840 = vmul.f32 %v534, %v534
  %v841 = vmul.f32 %v536, %v536
  %v842 = vmul.f32 %v345, %v345
  %v843 = vmul.f32 %v347, %v347
  %v844 = vmul.f32 %v538, %v538
  %v845 = vmul.f32 %v540, %v540
  %v846 = vmul.f32 %v351, %v351
  %v847 = vmul.f32 %v353, %v353
  %v848 = vmul.f32 %v544, %v544
  %v849 = vmul.f32 %v546, %v546
  %v850 = vmul.f32 %v355, %v355
  %v851 = vmul.f32 %v357, %v357
  %v852 = vmul.f32 %v548, %v548
  %v853 = vmul.f32 %v550, %v550
  %v854 = vmul.f32 %v361, %v361
  %v855 = vmul.f32 %v363, %v363
  %v856 = vmul.f32 %v554, %v554
  %v857 = vmul.f32 %v556, %v556
  %v858 = vmul.f32 %v365, %v365
  %v859 = vmul.f32 %v367, %v367
  %v860 = vmul.f32 %v558, %v558
  %v861 = vmul.f32 %v560, %v560
  %v862 = vmul.f32 %v371, %v371
  %v863 = vmul.f32 %v373, %v373
  %v864 = vmul.f32 %v564, %v564
  %v865 = vmul.f32 %v566, %v566
  %v866 = vmul.f32 %v375, %v375
  %v867 = vmul.f32 %v377, %v377
  %v868 = vmul.f32 %v568, %v568
  %v869 = vmul.f32 %v570, %v570
  %v870 = vmul.f32 %v381, %v381
  %v871 = vmul.f32 %v383, %v383
  %v872 = vmul.f32 %v574, %v574
  %v873 = vmul.f32 %v576, %v576
  %v874 = vmul.f32 %v385, %v385
  %v875 = vmul.f32 %v387, %v387
  %v876 = vmul.f32 %v578, %v578
  %v877 = vmul.f32 %v580, %v580
  %v878 = vmul.f32 %v391, %v391
  %v879 = vmul.f32 %v393, %v393
  %v880 = vmul.f32 %v584, %v584
  %v881 = vmul.f32 %v586, %v586
  %v882 = vmul.f32 %v395, %v395
  %v883 = vmul.f32 %v397, %v397
  %v884 = vmul.f32 %v588, %v588
  %v885 = vmul.f32 %v590, %v590
  %v886 = vmul.f32 %v401, %v401
  %v887 = vmul.f32 %v403, %v403
  %v888 = vmul.f32 %v594, %v594
  %v889 = vmul.f32 %v596, %v596
  %v890 = vmul.f32 %v405, %v405
  %v891 = vmul.f32 %v407, %v407
  %v892 = vmul.f32 %v598, %v598
  %v893 = vmul.f32 %v600, %v600
  %v894 = vmul.f32 %v411, %v411
  %v895 = vmul.f32 %v413, %v413
  %v896 = vmul.f32 %v604, %v604
  %v897 = vmul.f32 %v606, %v606
  %v898 = vmul.f32 %v415, %v415
  %v899 = vmul.f32 %v417, %v417
  %v900 = vmul.f32 %v608, %v608
  %v901 = vmul.f32 %v610, %v610
  %v902 = vmul.f32 %v421, %v421
  %v903 = vmul.f32 %v423, %v423
  %v904 = vmul.f32 %v614, %v614
  %v905 = vmul.f32 %v616, %v616
  %v906 = vmul.f32 %v425, %v425
  %v907 = vmul.f32 %v427, %v427
  %v908 = vmul.f32 %v618, %v618
  %v909 = vmul.f32 %v620, %v620
  %v910 = vmul.f32 %v431, %v431
  %v911 = vmul.f32 %v433, %v433
  %v912 = vmul.f32 %v624, %v624
  %v913 = vmul.f32 %v626, %v626
  %v914 = vmul.f32 %v435, %v435
  %v915 = vmul.f32 %v437, %v437
  %v916 = vmul.f32 %v628, %v628
  %v917 = vmul.f32 %v630, %v630
  %v918 = vmul.f32 %v441, %v441
  %v919 = vmul.f32 %v443, %v443
  %v920 = vmul.f32 %v634, %v634
  %v921 = vmul.f32 %v636, %v636
  %v922 = vmul.f32 %v445, %v445
  %v923 = vmul.f32 %v447, %v447
  %v924 = vmul.f32 %v638, %v638
  %v925 = vmul.f32 %v640, %v640
  %v926 = vmul.f32 %v451, %v451
  %v927 = vmul.f32 %v453, %v453
  %v928 = vmul.f32 %v644, %v644
  %v929 = vmul.f32 %v646, %v646
  %v930 = vmul.f32 %v455, %v455
  %v931 = vmul.f32 %v457, %v457
  %v932 = vmul.f32 %v648, %v648
  %v933 = vmul.f32 %v650, %v650
  %v934 = vmul.f32 %v461, %v461
  %v935 = vmul.f32 %v463, %v463
  %v936 = vmul.f32 %v654, %v654
  %v937 = vmul.f32 %v656, %v656
  %v938 = vmul.f32 %v465, %v465
  %v939 = vmul.f32 %v467, %v467
  %v940 = vmul.f32 %v658, %v658
  %v941 = vmul.f32 %v660, %v660
  %v942 = vadd.f32 %v814, %v818
  %v943 = vadd.f32 %v942, %v822
  %v944 = vadd.f32 %v943, %v826
  %v945 = vadd.f32 %v944, %v830
  %v946 = vadd.f32 %v945, %v834
  %v947 = vadd.f32 %v946, %v838
  %v948 = vadd.f32 %v947, %v842
  %v949 = vadd.f32 %v948, %v846
  %v950 = vadd.f32 %v949, %v850
  %v951 = vadd.f32 %v950, %v854
  %v952 = vadd.f32 %v951, %v858
  %v953 = vadd.f32 %v952, %v862
  %v954 = vadd.f32 %v953, %v866
  %v955 = vadd.f32 %v954, %v870
  %v956 = vadd.f32 %v955, %v874
  %v957 = vadd.f32 %v956, %v878
  %v958 = vadd.f32 %v957, %v882
  %v959 = vadd.f32 %v958, %v886
  %v960 = vadd.f32 %v959, %v890
  %v961 = vadd.f32 %v960, %v894
  %v962 = vadd.f32 %v961, %v898
  %v963 = vadd.f32 %v962, %v902
  %v964 = vadd.f32 %v963, %v906
  %v965 = vadd.f32 %v964, %v910
  %v966 = vadd.f32 %v965, %v914
  %v967 = vadd.f32 %v966, %v918
  %v968 = vadd.f32 %v967, %v922
  %v969 = vadd.f32 %v968, %v926
  %v970 = vadd.f32 %v969, %v930
  %v971 = vadd.f32 %v970, %v934
  %v972 = vadd.f32 %v971, %v938
  %v973 = vrot.slane %v972, 4
  %v974 = vadd.f32 %v972, %v973
  %v975 = vrot.slane %v974, 2
  %v976 = vadd.f32 %v974, %v975
  %v977 = vrot.slane %v976, 1
  %v978 = vadd.f32 %v976, %v977
  %v979 = vadd.f32 %v815, %v819
  %v980 = vadd.f32 %v979, %v823
  %v981 = vadd.f32 %v980, %v827
  %v982 = vadd.f32 %v981, %v831
  %v983 = vadd.f32 %v982, %v835
  %v984 = vadd.f32 %v983, %v839
  %v985 = vadd.f32 %v984, %v843
  %v986 = vadd.f32 %v985, %v847
  %v987 = vadd.f32 %v986, %v851
  %v988 = vadd.f32 %v987, %v855
  %v989 = vadd.f32 %v988, %v859
  %v990 = vadd.f32 %v989, %v863
  %v991 = vadd.f32 %v990, %v867
  %v992 = vadd.f32 %v991, %v871
  %v993 = vadd.f32 %v992, %v875
  %v994 = vadd.f32 %v993, %v879
  %v995 = vadd.f32 %v994, %v883
  %v996 = vadd.f32 %v995, %v887
  %v997 = vadd.f32 %v996, %v891
  %v998 = vadd.f32 %v997, %v895
  %v999 = vadd.f32 %v998, %v899
  %v1000 = vadd.f32 %v999, %v903
  %v1001 = vadd.f32 %v1000, %v907
  %v1002 = vadd.f32 %v1001, %v911
  %v1003 = vadd.f32 %v1002, %v915
  %v1004 = vadd.f32 %v1003, %v919
  %v1005 = vadd.f32 %v1004, %v923
  %v1006 = vadd.f32 %v1005, %v927
  %v1007 = vadd.f32 %v1006, %v931
  %v1008 = vadd.f32 %v1007, %v935
  %v1009 = vadd.f32 %v1008, %v939
  %v1010 = vrot.slane %v1009, 4
  %v1011 = vadd.f32 %v1009, %v1010
  %v1012 = vrot.slane %v1011, 2
  %v1013 = vadd.f32 %v1011, %v1012
  %v1014 = vrot.slane %v1013, 1
  %v1015 = vadd.f32 %v1013, %v1014
  %v1016 = vadd.f32 %v816, %v820
  %v1017 = vadd.f32 %v1016, %v824
  %v1018 = vadd.f32 %v1017, %v828
  %v1019 = vadd.f32 %v1018, %v832
  %v1020 = vadd.f32 %v1019, %v836
  %v1021 = vadd.f32 %v1020, %v840
  %v1022 = vadd.f32 %v1021, %v844
  %v1023 = vadd.f32 %v1022, %v848
  %v1024 = vadd.f32 %v1023, %v852
  %v1025 = vadd.f32 %v1024, %v856
  %v1026 = vadd.f32 %v1025, %v860
  %v1027 = vadd.f32 %v1026, %v864
  %v1028 = vadd.f32 %v1027, %v868
  %v1029 = vadd.f32 %v1028, %v872
  %v1030 = vadd.f32 %v1029, %v876
  %v1031 = vadd.f32 %v1030, %v880
  %v1032 = vadd.f32 %v1031, %v884
  %v1033 = vadd.f32 %v1032, %v888
  %v1034 = vadd.f32 %v1033, %v892
  %v1035 = vadd.f32 %v1034, %v896
  %v1036 = vadd.f32 %v1035, %v900
  %v1037 = vadd.f32 %v1036, %v904
  %v1038 = vadd.f32 %v1037, %v908
  %v1039 = vadd.f32 %v1038, %v912
  %v1040 = vadd.f32 %v1039, %v916
  %v1041 = vadd.f32 %v1040, %v920
  %v1042 = vadd.f32 %v1041, %v924
  %v1043 = vadd.f32 %v1042, %v928
  %v1044 = vadd.f32 %v1043, %v932
  %v1045 = vadd.f32 %v1044, %v936
  %v1046 = vadd.f32 %v1045, %v940
  %v1047 = vrot.slane %v1046, 4
  %v1048 = vadd.f32 %v1046, %v1047
  %v1049 = vrot.slane %v1048, 2
  %v1050 = vadd.f32 %v1048, %v1049
  %v1051 = vrot.slane %v1050, 1
  %v1052 = vadd.f32 %v1050, %v1051
  %v1053 = vadd.f32 %v817, %v821
  %v1054 = vadd.f32 %v1053, %v825
  %v1055 = vadd.f32 %v1054, %v829
  %v1056 = vadd.f32 %v1055, %v833
  %v1057 = vadd.f32 %v1056, %v837
  %v1058 = vadd.f32 %v1057, %v841
  %v1059 = vadd.f32 %v1058, %v845
  %v1060 = vadd.f32 %v1059, %v849
  %v1061 = vadd.f32 %v1060, %v853
  %v1062 = vadd.f32 %v1061, %v857
  %v1063 = vadd.f32 %v1062, %v861
  %v1064 = vadd.f32 %v1063, %v865
  %v1065 = vadd.f32 %v1064, %v869
  %v1066 = vadd.f32 %v1065, %v873
  %v1067 = vadd.f32 %v1066, %v877
  %v1068 = vadd.f32 %v1067, %v881
  %v1069 = vadd.f32 %v1068, %v885
  %v1070 = vadd.f32 %v1069, %v889
  %v1071 = vadd.f32 %v1070, %v893
  %v1072 = vadd.f32 %v1071, %v897
  %v1073 = vadd.f32 %v1072, %v901
  %v1074 = vadd.f32 %v1073, %v905
  %v1075 = vadd.f32 %v1074, %v909
  %v1076 = vadd.f32 %v1075, %v913
  %v1077 = vadd.f32 %v1076, %v917
  %v1078 = vadd.f32 %v1077, %v921
  %v1079 = vadd.f32 %v1078, %v925
  %v1080 = vadd.f32 %v1079, %v929
  %v1081 = vadd.f32 %v1080, %v933
  %v1082 = vadd.f32 %v1081, %v937
  %v1083 = vadd.f32 %v1082, %v941
  %v1084 = vrot.slane %v1083, 4
  %v1085 = vadd.f32 %v1083, %v1084
  %v1086 = vrot.slane %v1085, 2
  %v1087 = vadd.f32 %v1085, %v1086
  %v1088 = vrot.slane %v1087, 1
  %v1089 = vadd.f32 %v1087, %v1088
  %v1090 = vmul.f32 %v978, 0.00390625
  %v1091 = vmul.f32 %v1015, 0.00390625
  %v1092 = vmul.f32 %v1052, 0.00390625
  %v1093 = vmul.f32 %v1089, 0.00390625
  %v1094 = vmul.f32 %v810, %v810
  %v1095 = vmul.f32 %v811, %v811
  %v1096 = vmul.f32 %v812, %v812
  %v1097 = vmul.f32 %v813, %v813
  %v1098 = vsub.f32 %v1090, %v1094
  %v1099 = vsub.f32 %v1091, %v1095
  %v1100 = vsub.f32 %v1092, %v1096
  %v1101 = vsub.f32 %v1093, %v1097
  %v1102 = vld [vmem:[%s2] sm:$0xf]
  %v1103 = vadd.f32 %v1098, 1e-05
  %v1104 = vadd.f32 %v1099, 1e-05
  %v1105 = vadd.f32 %v1100, 1e-05
  %v1106 = vadd.f32 %v1101, 1e-05
  %v1107 = vrsqrt.pop %v1103
  %v1108 = vrsqrt.pop %v1104
  %v1109 = vrsqrt.pop %v1105
  %v1110 = vrsqrt.pop %v1106
  %v1115 = vcombine.low %v1107, %v1108
  %v1116 = vcombine.low %v1109, %v1110
  %v1118 = vunpack.c.l.s4 1966171168
  %v1119 = vunpack.c.0.s8 %v1118
  %v1120 = vlaneseq
  %v1121 = vshrl.u32 %v1120, 7
  %v1122 = vsub.s32 %v1119, %v1121
  %v1123 = vrot.slane %v1115, %v1122
  %v1125 = vunpack.c.l.s4 1966171168
  %v1126 = vunpack.c.0.s8 %v1125
  %v1127 = vlaneseq
  %v1128 = vshrl.u32 %v1127, 7
  %v1129 = vsub.s32 %v1126, %v1128
  %v1130 = vrot.slane %v1116, %v1129
  %v1131 = vcombine.low %v1123, %v1130
  %v1133 = vunpack.c.l.s4 1966171168
  %v1134 = vunpack.c.0.s8 %v1133
  %v1135 = vlaneseq
  %v1136 = vshrl.u32 %v1135, 7
  %v1137 = vsub.s32 %v1134, %v1136
  %v1138 = vrot.slane %v1131, %v1137
  %v1140 = vmul.f32 %v1102, %v1138
  %v1141 = vld [vmem:[%s3] sm:$0xf]
  %v1143 = vlaneseq
  %v1144 = vshrl.u32 %v1143, 7
  %v1145 = vsub.s32 0, %v1144
  %v1146 = vrot.slane %v1140, %v1145
  %v1147 = vlaneseq
  %v1148 = vshrl.u32 %v1147, 7
  %v1149 = vsub.s32 1, %v1148
  %v1150 = vrot.slane %v1140, %v1149
  %v1151 = vlaneseq
  %v1152 = vshrl.u32 %v1151, 7
  %v1153 = vsub.s32 2, %v1152
  %v1154 = vrot.slane %v1140, %v1153
  %v1155 = vlaneseq
  %v1156 = vshrl.u32 %v1155, 7
  %v1157 = vsub.s32 3, %v1156
  %v1158 = vrot.slane %v1140, %v1157
  %v1163 = vmul.f32 %v810, %v1146
  %v1164 = vmul.f32 %v811, %v1150
  %v1165 = vmul.f32 %v812, %v1154
  %v1166 = vmul.f32 %v813, %v1158
  %v1171 = vcombine.low %v1163, %v1164
  %v1172 = vcombine.low %v1165, %v1166
  %v1174 = vunpack.c.l.s4 1966171168
  %v1175 = vunpack.c.0.s8 %v1174
  %v1176 = vlaneseq
  %v1177 = vshrl.u32 %v1176, 7
  %v1178 = vsub.s32 %v1175, %v1177
  %v1179 = vrot.slane %v1171, %v1178
  %v1181 = vunpack.c.l.s4 1966171168
  %v1182 = vunpack.c.0.s8 %v1181
  %v1183 = vlaneseq
  %v1184 = vshrl.u32 %v1183, 7
  %v1185 = vsub.s32 %v1182, %v1184
  %v1186 = vrot.slane %v1172, %v1185
  %v1187 = vcombine.low %v1179, %v1186
  %v1189 = vunpack.c.l.s4 1966171168
  %v1190 = vunpack.c.0.s8 %v1189
  %v1191 = vlaneseq
  %v1192 = vshrl.u32 %v1191, 7
  %v1193 = vsub.s32 %v1190, %v1192
  %v1194 = vrot.slane %v1187, %v1193
  %v1196 = vsub.f32 %v1141, %v1194
  %v1197 = vmul.f32 %v311, %v1146
  %v1198 = vmul.f32 %v313, %v1150
  %v1199 = vmul.f32 %v504, %v1154
  %v1200 = vmul.f32 %v506, %v1158
  %v1201 = vmul.f32 %v315, %v1146
  %v1202 = vmul.f32 %v317, %v1150
  %v1203 = vmul.f32 %v508, %v1154
  %v1204 = vmul.f32 %v510, %v1158
  %v1205 = vmul.f32 %v321, %v1146
  %v1206 = vmul.f32 %v323, %v1150
  %v1207 = vmul.f32 %v514, %v1154
  %v1208 = vmul.f32 %v516, %v1158
  %v1209 = vmul.f32 %v325, %v1146
  %v1210 = vmul.f32 %v327, %v1150
  %v1211 = vmul.f32 %v518, %v1154
  %v1212 = vmul.f32 %v520, %v1158
  %v1213 = vmul.f32 %v331, %v1146
  %v1214 = vmul.f32 %v333, %v1150
  %v1215 = vmul.f32 %v524, %v1154
  %v1216 = vmul.f32 %v526, %v1158
  %v1217 = vmul.f32 %v335, %v1146
  %v1218 = vmul.f32 %v337, %v1150
  %v1219 = vmul.f32 %v528, %v1154
  %v1220 = vmul.f32 %v530, %v1158
  %v1221 = vmul.f32 %v341, %v1146
  %v1222 = vmul.f32 %v343, %v1150
  %v1223 = vmul.f32 %v534, %v1154
  %v1224 = vmul.f32 %v536, %v1158
  %v1225 = vmul.f32 %v345, %v1146
  %v1226 = vmul.f32 %v347, %v1150
  %v1227 = vmul.f32 %v538, %v1154
  %v1228 = vmul.f32 %v540, %v1158
  %v1229 = vmul.f32 %v351, %v1146
  %v1230 = vmul.f32 %v353, %v1150
  %v1231 = vmul.f32 %v544, %v1154
  %v1232 = vmul.f32 %v546, %v1158
  %v1233 = vmul.f32 %v355, %v1146
  %v1234 = vmul.f32 %v357, %v1150
  %v1235 = vmul.f32 %v548, %v1154
  %v1236 = vmul.f32 %v550, %v1158
  %v1237 = vmul.f32 %v361, %v1146
  %v1238 = vmul.f32 %v363, %v1150
  %v1239 = vmul.f32 %v554, %v1154
  %v1240 = vmul.f32 %v556, %v1158
  %v1241 = vmul.f32 %v365, %v1146
  %v1242 = vmul.f32 %v367, %v1150
  %v1243 = vmul.f32 %v558, %v1154
  %v1244 = vmul.f32 %v560, %v1158
  %v1245 = vmul.f32 %v371, %v1146
  %v1246 = vmul.f32 %v373, %v1150
  %v1247 = vmul.f32 %v564, %v1154
  %v1248 = vmul.f32 %v566, %v1158
  %v1249 = vmul.f32 %v375, %v1146
  %v1250 = vmul.f32 %v377, %v1150
  %v1251 = vmul.f32 %v568, %v1154
  %v1252 = vmul.f32 %v570, %v1158
  %v1253 = vmul.f32 %v381, %v1146
  %v1254 = vmul.f32 %v383, %v1150
  %v1255 = vmul.f32 %v574, %v1154
  %v1256 = vmul.f32 %v576, %v1158
  %v1257 = vmul.f32 %v385, %v1146
  %v1258 = vmul.f32 %v387, %v1150
  %v1259 = vmul.f32 %v578, %v1154
  %v1260 = vmul.f32 %v580, %v1158
  %v1261 = vmul.f32 %v391, %v1146
  %v1262 = vmul.f32 %v393, %v1150
  %v1263 = vmul.f32 %v584, %v1154
  %v1264 = vmul.f32 %v586, %v1158
  %v1265 = vmul.f32 %v395, %v1146
  %v1266 = vmul.f32 %v397, %v1150
  %v1267 = vmul.f32 %v588, %v1154
  %v1268 = vmul.f32 %v590, %v1158
  %v1269 = vmul.f32 %v401, %v1146
  %v1270 = vmul.f32 %v403, %v1150
  %v1271 = vmul.f32 %v594, %v1154
  %v1272 = vmul.f32 %v596, %v1158
  %v1273 = vmul.f32 %v405, %v1146
  %v1274 = vmul.f32 %v407, %v1150
  %v1275 = vmul.f32 %v598, %v1154
  %v1276 = vmul.f32 %v600, %v1158
  %v1277 = vmul.f32 %v411, %v1146
  %v1278 = vmul.f32 %v413, %v1150
  %v1279 = vmul.f32 %v604, %v1154
  %v1280 = vmul.f32 %v606, %v1158
  %v1281 = vmul.f32 %v415, %v1146
  %v1282 = vmul.f32 %v417, %v1150
  %v1283 = vmul.f32 %v608, %v1154
  %v1284 = vmul.f32 %v610, %v1158
  %v1285 = vmul.f32 %v421, %v1146
  %v1286 = vmul.f32 %v423, %v1150
  %v1287 = vmul.f32 %v614, %v1154
  %v1288 = vmul.f32 %v616, %v1158
  %v1289 = vmul.f32 %v425, %v1146
  %v1290 = vmul.f32 %v427, %v1150
  %v1291 = vmul.f32 %v618, %v1154
  %v1292 = vmul.f32 %v620, %v1158
  %v1293 = vmul.f32 %v431, %v1146
  %v1294 = vmul.f32 %v433, %v1150
  %v1295 = vmul.f32 %v624, %v1154
  %v1296 = vmul.f32 %v626, %v1158
  %v1297 = vmul.f32 %v435, %v1146
  %v1298 = vmul.f32 %v437, %v1150
  %v1299 = vmul.f32 %v628, %v1154
  %v1300 = vmul.f32 %v630, %v1158
  %v1301 = vmul.f32 %v441, %v1146
  %v1302 = vmul.f32 %v443, %v1150
  %v1303 = vmul.f32 %v634, %v1154
  %v1304 = vmul.f32 %v636, %v1158
  %v1305 = vmul.f32 %v445, %v1146
  %v1306 = vmul.f32 %v447, %v1150
  %v1307 = vmul.f32 %v638, %v1154
  %v1308 = vmul.f32 %v640, %v1158
  %v1309 = vmul.f32 %v451, %v1146
  %v1310 = vmul.f32 %v453, %v1150
  %v1311 = vmul.f32 %v644, %v1154
  %v1312 = vmul.f32 %v646, %v1158
  %v1313 = vmul.f32 %v455, %v1146
  %v1314 = vmul.f32 %v457, %v1150
  %v1315 = vmul.f32 %v648, %v1154
  %v1316 = vmul.f32 %v650, %v1158
  %v1317 = vmul.f32 %v461, %v1146
  %v1318 = vmul.f32 %v463, %v1150
  %v1319 = vmul.f32 %v654, %v1154
  %v1320 = vmul.f32 %v656, %v1158
  %v1321 = vmul.f32 %v465, %v1146
  %v1322 = vmul.f32 %v467, %v1150
  %v1323 = vmul.f32 %v658, %v1154
  %v1324 = vmul.f32 %v660, %v1158
  %v1326 = vlaneseq
  %v1327 = vshrl.u32 %v1326, 7
  %v1328 = vsub.s32 0, %v1327
  %v1329 = vrot.slane %v1196, %v1328
  %v1330 = vlaneseq
  %v1331 = vshrl.u32 %v1330, 7
  %v1332 = vsub.s32 1, %v1331
  %v1333 = vrot.slane %v1196, %v1332
  %v1334 = vlaneseq
  %v1335 = vshrl.u32 %v1334, 7
  %v1336 = vsub.s32 2, %v1335
  %v1337 = vrot.slane %v1196, %v1336
  %v1338 = vlaneseq
  %v1339 = vshrl.u32 %v1338, 7
  %v1340 = vsub.s32 3, %v1339
  %v1341 = vrot.slane %v1196, %v1340
  %v1346 = vadd.f32 %v1197, %v1329
  %v1347 = vadd.f32 %v1198, %v1333
  %v1348 = vadd.f32 %v1199, %v1337
  %v1349 = vadd.f32 %v1200, %v1341
  %v1350 = vadd.f32 %v1201, %v1329
  %v1351 = vadd.f32 %v1202, %v1333
  %v1352 = vadd.f32 %v1203, %v1337
  %v1353 = vadd.f32 %v1204, %v1341
  %v1354 = vadd.f32 %v1205, %v1329
  %v1355 = vadd.f32 %v1206, %v1333
  %v1356 = vadd.f32 %v1207, %v1337
  %v1357 = vadd.f32 %v1208, %v1341
  %v1358 = vadd.f32 %v1209, %v1329
  %v1359 = vadd.f32 %v1210, %v1333
  %v1360 = vadd.f32 %v1211, %v1337
  %v1361 = vadd.f32 %v1212, %v1341
  %v1362 = vadd.f32 %v1213, %v1329
  %v1363 = vadd.f32 %v1214, %v1333
  %v1364 = vadd.f32 %v1215, %v1337
  %v1365 = vadd.f32 %v1216, %v1341
  %v1366 = vadd.f32 %v1217, %v1329
  %v1367 = vadd.f32 %v1218, %v1333
  %v1368 = vadd.f32 %v1219, %v1337
  %v1369 = vadd.f32 %v1220, %v1341
  %v1370 = vadd.f32 %v1221, %v1329
  %v1371 = vadd.f32 %v1222, %v1333
  %v1372 = vadd.f32 %v1223, %v1337
  %v1373 = vadd.f32 %v1224, %v1341
  %v1374 = vadd.f32 %v1225, %v1329
  %v1375 = vadd.f32 %v1226, %v1333
  %v1376 = vadd.f32 %v1227, %v1337
  %v1377 = vadd.f32 %v1228, %v1341
  %v1378 = vadd.f32 %v1229, %v1329
  %v1379 = vadd.f32 %v1230, %v1333
  %v1380 = vadd.f32 %v1231, %v1337
  %v1381 = vadd.f32 %v1232, %v1341
  %v1382 = vadd.f32 %v1233, %v1329
  %v1383 = vadd.f32 %v1234, %v1333
  %v1384 = vadd.f32 %v1235, %v1337
  %v1385 = vadd.f32 %v1236, %v1341
  %v1386 = vadd.f32 %v1237, %v1329
  %v1387 = vadd.f32 %v1238, %v1333
  %v1388 = vadd.f32 %v1239, %v1337
  %v1389 = vadd.f32 %v1240, %v1341
  %v1390 = vadd.f32 %v1241, %v1329
  %v1391 = vadd.f32 %v1242, %v1333
  %v1392 = vadd.f32 %v1243, %v1337
  %v1393 = vadd.f32 %v1244, %v1341
  %v1394 = vadd.f32 %v1245, %v1329
  %v1395 = vadd.f32 %v1246, %v1333
  %v1396 = vadd.f32 %v1247, %v1337
  %v1397 = vadd.f32 %v1248, %v1341
  %v1398 = vadd.f32 %v1249, %v1329
  %v1399 = vadd.f32 %v1250, %v1333
  %v1400 = vadd.f32 %v1251, %v1337
  %v1401 = vadd.f32 %v1252, %v1341
  %v1402 = vadd.f32 %v1253, %v1329
  %v1403 = vadd.f32 %v1254, %v1333
  %v1404 = vadd.f32 %v1255, %v1337
  %v1405 = vadd.f32 %v1256, %v1341
  %v1406 = vadd.f32 %v1257, %v1329
  %v1407 = vadd.f32 %v1258, %v1333
  %v1408 = vadd.f32 %v1259, %v1337
  %v1409 = vadd.f32 %v1260, %v1341
  %v1410 = vadd.f32 %v1261, %v1329
  %v1411 = vadd.f32 %v1262, %v1333
  %v1412 = vadd.f32 %v1263, %v1337
  %v1413 = vadd.f32 %v1264, %v1341
  %v1414 = vadd.f32 %v1265, %v1329
  %v1415 = vadd.f32 %v1266, %v1333
  %v1416 = vadd.f32 %v1267, %v1337
  %v1417 = vadd.f32 %v1268, %v1341
  %v1418 = vadd.f32 %v1269, %v1329
  %v1419 = vadd.f32 %v1270, %v1333
  %v1420 = vadd.f32 %v1271, %v1337
  %v1421 = vadd.f32 %v1272, %v1341
  %v1422 = vadd.f32 %v1273, %v1329
  %v1423 = vadd.f32 %v1274, %v1333
  %v1424 = vadd.f32 %v1275, %v1337
  %v1425 = vadd.f32 %v1276, %v1341
  %v1426 = vadd.f32 %v1277, %v1329
  %v1427 = vadd.f32 %v1278, %v1333
  %v1428 = vadd.f32 %v1279, %v1337
  %v1429 = vadd.f32 %v1280, %v1341
  %v1430 = vadd.f32 %v1281, %v1329
  %v1431 = vadd.f32 %v1282, %v1333
  %v1432 = vadd.f32 %v1283, %v1337
  %v1433 = vadd.f32 %v1284, %v1341
  %v1434 = vadd.f32 %v1285, %v1329
  %v1435 = vadd.f32 %v1286, %v1333
  %v1436 = vadd.f32 %v1287, %v1337
  %v1437 = vadd.f32 %v1288, %v1341
  %v1438 = vadd.f32 %v1289, %v1329
  %v1439 = vadd.f32 %v1290, %v1333
  %v1440 = vadd.f32 %v1291, %v1337
  %v1441 = vadd.f32 %v1292, %v1341
  %v1442 = vadd.f32 %v1293, %v1329
  %v1443 = vadd.f32 %v1294, %v1333
  %v1444 = vadd.f32 %v1295, %v1337
  %v1445 = vadd.f32 %v1296, %v1341
  %v1446 = vadd.f32 %v1297, %v1329
  %v1447 = vadd.f32 %v1298, %v1333
  %v1448 = vadd.f32 %v1299, %v1337
  %v1449 = vadd.f32 %v1300, %v1341
  %v1450 = vadd.f32 %v1301, %v1329
  %v1451 = vadd.f32 %v1302, %v1333
  %v1452 = vadd.f32 %v1303, %v1337
  %v1453 = vadd.f32 %v1304, %v1341
  %v1454 = vadd.f32 %v1305, %v1329
  %v1455 = vadd.f32 %v1306, %v1333
  %v1456 = vadd.f32 %v1307, %v1337
  %v1457 = vadd.f32 %v1308, %v1341
  %v1458 = vadd.f32 %v1309, %v1329
  %v1459 = vadd.f32 %v1310, %v1333
  %v1460 = vadd.f32 %v1311, %v1337
  %v1461 = vadd.f32 %v1312, %v1341
  %v1462 = vadd.f32 %v1313, %v1329
  %v1463 = vadd.f32 %v1314, %v1333
  %v1464 = vadd.f32 %v1315, %v1337
  %v1465 = vadd.f32 %v1316, %v1341
  %v1466 = vadd.f32 %v1317, %v1329
  %v1467 = vadd.f32 %v1318, %v1333
  %v1468 = vadd.f32 %v1319, %v1337
  %v1469 = vadd.f32 %v1320, %v1341
  %v1470 = vadd.f32 %v1321, %v1329
  %v1471 = vadd.f32 %v1322, %v1333
  %v1472 = vadd.f32 %v1323, %v1337
  %v1473 = vadd.f32 %v1324, %v1341
  %v1474 = vmax.f32 %v1346, 0.0
  %v1475 = vmax.f32 %v1347, 0.0
  %v1476 = vmax.f32 %v1348, 0.0
  %v1477 = vmax.f32 %v1349, 0.0
  %v1478 = vmax.f32 %v1350, 0.0
  %v1479 = vmax.f32 %v1351, 0.0
  %v1480 = vmax.f32 %v1352, 0.0
  %v1481 = vmax.f32 %v1353, 0.0
  %v1482 = vmax.f32 %v1354, 0.0
  %v1483 = vmax.f32 %v1355, 0.0
  %v1484 = vmax.f32 %v1356, 0.0
  %v1485 = vmax.f32 %v1357, 0.0
  %v1486 = vmax.f32 %v1358, 0.0
  %v1487 = vmax.f32 %v1359, 0.0
  %v1488 = vmax.f32 %v1360, 0.0
  %v1489 = vmax.f32 %v1361, 0.0
  %v1490 = vmax.f32 %v1362, 0.0
  %v1491 = vmax.f32 %v1363, 0.0
  %v1492 = vmax.f32 %v1364, 0.0
  %v1493 = vmax.f32 %v1365, 0.0
  %v1494 = vmax.f32 %v1366, 0.0
  %v1495 = vmax.f32 %v1367, 0.0
  %v1496 = vmax.f32 %v1368, 0.0
  %v1497 = vmax.f32 %v1369, 0.0
  %v1498 = vmax.f32 %v1370, 0.0
  %v1499 = vmax.f32 %v1371, 0.0
  %v1500 = vmax.f32 %v1372, 0.0
  %v1501 = vmax.f32 %v1373, 0.0
  %v1502 = vmax.f32 %v1374, 0.0
  %v1503 = vmax.f32 %v1375, 0.0
  %v1504 = vmax.f32 %v1376, 0.0
  %v1505 = vmax.f32 %v1377, 0.0
  %v1506 = vmax.f32 %v1378, 0.0
  %v1507 = vmax.f32 %v1379, 0.0
  %v1508 = vmax.f32 %v1380, 0.0
  %v1509 = vmax.f32 %v1381, 0.0
  %v1510 = vmax.f32 %v1382, 0.0
  %v1511 = vmax.f32 %v1383, 0.0
  %v1512 = vmax.f32 %v1384, 0.0
  %v1513 = vmax.f32 %v1385, 0.0
  %v1514 = vmax.f32 %v1386, 0.0
  %v1515 = vmax.f32 %v1387, 0.0
  %v1516 = vmax.f32 %v1388, 0.0
  %v1517 = vmax.f32 %v1389, 0.0
  %v1518 = vmax.f32 %v1390, 0.0
  %v1519 = vmax.f32 %v1391, 0.0
  %v1520 = vmax.f32 %v1392, 0.0
  %v1521 = vmax.f32 %v1393, 0.0
  %v1522 = vmax.f32 %v1394, 0.0
  %v1523 = vmax.f32 %v1395, 0.0
  %v1524 = vmax.f32 %v1396, 0.0
  %v1525 = vmax.f32 %v1397, 0.0
  %v1526 = vmax.f32 %v1398, 0.0
  %v1527 = vmax.f32 %v1399, 0.0
  %v1528 = vmax.f32 %v1400, 0.0
  %v1529 = vmax.f32 %v1401, 0.0
  %v1530 = vmax.f32 %v1402, 0.0
  %v1531 = vmax.f32 %v1403, 0.0
  %v1532 = vmax.f32 %v1404, 0.0
  %v1533 = vmax.f32 %v1405, 0.0
  %v1534 = vmax.f32 %v1406, 0.0
  %v1535 = vmax.f32 %v1407, 0.0
  %v1536 = vmax.f32 %v1408, 0.0
  %v1537 = vmax.f32 %v1409, 0.0
  %v1538 = vmax.f32 %v1410, 0.0
  %v1539 = vmax.f32 %v1411, 0.0
  %v1540 = vmax.f32 %v1412, 0.0
  %v1541 = vmax.f32 %v1413, 0.0
  %v1542 = vmax.f32 %v1414, 0.0
  %v1543 = vmax.f32 %v1415, 0.0
  %v1544 = vmax.f32 %v1416, 0.0
  %v1545 = vmax.f32 %v1417, 0.0
  %v1546 = vmax.f32 %v1418, 0.0
  %v1547 = vmax.f32 %v1419, 0.0
  %v1548 = vmax.f32 %v1420, 0.0
  %v1549 = vmax.f32 %v1421, 0.0
  %v1550 = vmax.f32 %v1422, 0.0
  %v1551 = vmax.f32 %v1423, 0.0
  %v1552 = vmax.f32 %v1424, 0.0
  %v1553 = vmax.f32 %v1425, 0.0
  %v1554 = vmax.f32 %v1426, 0.0
  %v1555 = vmax.f32 %v1427, 0.0
  %v1556 = vmax.f32 %v1428, 0.0
  %v1557 = vmax.f32 %v1429, 0.0
  %v1558 = vmax.f32 %v1430, 0.0
  %v1559 = vmax.f32 %v1431, 0.0
  %v1560 = vmax.f32 %v1432, 0.0
  %v1561 = vmax.f32 %v1433, 0.0
  %v1562 = vmax.f32 %v1434, 0.0
  %v1563 = vmax.f32 %v1435, 0.0
  %v1564 = vmax.f32 %v1436, 0.0
  %v1565 = vmax.f32 %v1437, 0.0
  %v1566 = vmax.f32 %v1438, 0.0
  %v1567 = vmax.f32 %v1439, 0.0
  %v1568 = vmax.f32 %v1440, 0.0
  %v1569 = vmax.f32 %v1441, 0.0
  %v1570 = vmax.f32 %v1442, 0.0
  %v1571 = vmax.f32 %v1443, 0.0
  %v1572 = vmax.f32 %v1444, 0.0
  %v1573 = vmax.f32 %v1445, 0.0
  %v1574 = vmax.f32 %v1446, 0.0
  %v1575 = vmax.f32 %v1447, 0.0
  %v1576 = vmax.f32 %v1448, 0.0
  %v1577 = vmax.f32 %v1449, 0.0
  %v1578 = vmax.f32 %v1450, 0.0
  %v1579 = vmax.f32 %v1451, 0.0
  %v1580 = vmax.f32 %v1452, 0.0
  %v1581 = vmax.f32 %v1453, 0.0
  %v1582 = vmax.f32 %v1454, 0.0
  %v1583 = vmax.f32 %v1455, 0.0
  %v1584 = vmax.f32 %v1456, 0.0
  %v1585 = vmax.f32 %v1457, 0.0
  %v1586 = vmax.f32 %v1458, 0.0
  %v1587 = vmax.f32 %v1459, 0.0
  %v1588 = vmax.f32 %v1460, 0.0
  %v1589 = vmax.f32 %v1461, 0.0
  %v1590 = vmax.f32 %v1462, 0.0
  %v1591 = vmax.f32 %v1463, 0.0
  %v1592 = vmax.f32 %v1464, 0.0
  %v1593 = vmax.f32 %v1465, 0.0
  %v1594 = vmax.f32 %v1466, 0.0
  %v1595 = vmax.f32 %v1467, 0.0
  %v1596 = vmax.f32 %v1468, 0.0
  %v1597 = vmax.f32 %v1469, 0.0
  %v1598 = vmax.f32 %v1470, 0.0
  %v1599 = vmax.f32 %v1471, 0.0
  %v1600 = vmax.f32 %v1472, 0.0
  %v1601 = vmax.f32 %v1473, 0.0
  %v1602 = vpack.c.bf16 %v1478, %v1474
  %v1603 = vpack.c.bf16 %v1479, %v1475
  %v1604 = vpack.c.bf16 %v1480, %v1476
  %v1605 = vpack.c.bf16 %v1481, %v1477
  %v1606 = vpack.c.bf16 %v1486, %v1482
  %v1607 = vpack.c.bf16 %v1487, %v1483
  %v1608 = vpack.c.bf16 %v1488, %v1484
  %v1609 = vpack.c.bf16 %v1489, %v1485
  %v1610 = vpack.c.bf16 %v1494, %v1490
  %v1611 = vpack.c.bf16 %v1495, %v1491
  %v1612 = vpack.c.bf16 %v1496, %v1492
  %v1613 = vpack.c.bf16 %v1497, %v1493
  %v1614 = vpack.c.bf16 %v1502, %v1498
  %v1615 = vpack.c.bf16 %v1503, %v1499
  %v1616 = vpack.c.bf16 %v1504, %v1500
  %v1617 = vpack.c.bf16 %v1505, %v1501
  %v1618 = vpack.c.bf16 %v1510, %v1506
  %v1619 = vpack.c.bf16 %v1511, %v1507
  %v1620 = vpack.c.bf16 %v1512, %v1508
  %v1621 = vpack.c.bf16 %v1513, %v1509
  %v1622 = vpack.c.bf16 %v1518, %v1514
  %v1623 = vpack.c.bf16 %v1519, %v1515
  %v1624 = vpack.c.bf16 %v1520, %v1516
  %v1625 = vpack.c.bf16 %v1521, %v1517
  %v1626 = vpack.c.bf16 %v1526, %v1522
  %v1627 = vpack.c.bf16 %v1527, %v1523
  %v1628 = vpack.c.bf16 %v1528, %v1524
  %v1629 = vpack.c.bf16 %v1529, %v1525
  %v1630 = vpack.c.bf16 %v1534, %v1530
  %v1631 = vpack.c.bf16 %v1535, %v1531
  %v1632 = vpack.c.bf16 %v1536, %v1532
  %v1633 = vpack.c.bf16 %v1537, %v1533
  %v1634 = vpack.c.bf16 %v1542, %v1538
  %v1635 = vpack.c.bf16 %v1543, %v1539
  %v1636 = vpack.c.bf16 %v1544, %v1540
  %v1637 = vpack.c.bf16 %v1545, %v1541
  %v1638 = vpack.c.bf16 %v1550, %v1546
  %v1639 = vpack.c.bf16 %v1551, %v1547
  %v1640 = vpack.c.bf16 %v1552, %v1548
  %v1641 = vpack.c.bf16 %v1553, %v1549
  %v1642 = vpack.c.bf16 %v1558, %v1554
  %v1643 = vpack.c.bf16 %v1559, %v1555
  %v1644 = vpack.c.bf16 %v1560, %v1556
  %v1645 = vpack.c.bf16 %v1561, %v1557
  %v1646 = vpack.c.bf16 %v1566, %v1562
  %v1647 = vpack.c.bf16 %v1567, %v1563
  %v1648 = vpack.c.bf16 %v1568, %v1564
  %v1649 = vpack.c.bf16 %v1569, %v1565
  %v1650 = vpack.c.bf16 %v1574, %v1570
  %v1651 = vpack.c.bf16 %v1575, %v1571
  %v1652 = vpack.c.bf16 %v1576, %v1572
  %v1653 = vpack.c.bf16 %v1577, %v1573
  %v1654 = vpack.c.bf16 %v1582, %v1578
  %v1655 = vpack.c.bf16 %v1583, %v1579
  %v1656 = vpack.c.bf16 %v1584, %v1580
  %v1657 = vpack.c.bf16 %v1585, %v1581
  %v1658 = vpack.c.bf16 %v1590, %v1586
  %v1659 = vpack.c.bf16 %v1591, %v1587
  %v1660 = vpack.c.bf16 %v1592, %v1588
  %v1661 = vpack.c.bf16 %v1593, %v1589
  %v1662 = vpack.c.bf16 %v1598, %v1594
  %v1663 = vpack.c.bf16 %v1599, %v1595
  %v1664 = vpack.c.bf16 %v1600, %v1596
  %v1665 = vpack.c.bf16 %v1601, %v1597
  %v1666 = vld [vmem:[%s4] sm:$0xff]
  %v1667 = vld [vmem:[%s4 + $0x8] sm:$0xff]
  %v1668 = vld [vmem:[%s4 + $0x10] sm:$0xff]
  %v1669 = vld [vmem:[%s4 + $0x18] sm:$0xff]
  %v1670 = vld [vmem:[%s4 + $0x20] sm:$0xff]
  %v1671 = vld [vmem:[%s4 + $0x28] sm:$0xff]
  %v1672 = vld [vmem:[%s4 + $0x30] sm:$0xff]
  %v1673 = vld [vmem:[%s4 + $0x38] sm:$0xff]
  %v1674 = vld [vmem:[%s4 + $0x40] sm:$0xff]
  %v1675 = vld [vmem:[%s4 + $0x48] sm:$0xff]
  %v1676 = vld [vmem:[%s4 + $0x50] sm:$0xff]
  %v1677 = vld [vmem:[%s4 + $0x58] sm:$0xff]
  %v1678 = vld [vmem:[%s4 + $0x60] sm:$0xff]
  %v1679 = vld [vmem:[%s4 + $0x68] sm:$0xff]
  %v1680 = vld [vmem:[%s4 + $0x70] sm:$0xff]
  %v1681 = vld [vmem:[%s4 + $0x78] sm:$0xff]
  %v1682 = vld [vmem:[%s4 + $0x80] sm:$0xff]
  %v1683 = vld [vmem:[%s4 + $0x88] sm:$0xff]
  %v1684 = vld [vmem:[%s4 + $0x90] sm:$0xff]
  %v1685 = vld [vmem:[%s4 + $0x98] sm:$0xff]
  %v1686 = vld [vmem:[%s4 + $0xa0] sm:$0xff]
  %v1687 = vld [vmem:[%s4 + $0xa8] sm:$0xff]
  %v1688 = vld [vmem:[%s4 + $0xb0] sm:$0xff]
  %v1689 = vld [vmem:[%s4 + $0xb8] sm:$0xff]
  %v1690 = vld [vmem:[%s4 + $0xc0] sm:$0xff]
  %v1691 = vld [vmem:[%s4 + $0xc8] sm:$0xff]
  %v1692 = vld [vmem:[%s4 + $0xd0] sm:$0xff]
  %v1693 = vld [vmem:[%s4 + $0xd8] sm:$0xff]
  %v1694 = vld [vmem:[%s4 + $0xe0] sm:$0xff]
  %v1695 = vld [vmem:[%s4 + $0xe8] sm:$0xff]
  %v1696 = vld [vmem:[%s4 + $0xf0] sm:$0xff]
  %v1697 = vld [vmem:[%s4 + $0xf8] sm:$0xff]
  %v1698 = vld [vmem:[%s4 + $0x100] sm:$0xff]
  %v1699 = vld [vmem:[%s4 + $0x108] sm:$0xff]
  %v1700 = vld [vmem:[%s4 + $0x110] sm:$0xff]
  %v1701 = vld [vmem:[%s4 + $0x118] sm:$0xff]
  %v1702 = vld [vmem:[%s4 + $0x120] sm:$0xff]
  %v1703 = vld [vmem:[%s4 + $0x128] sm:$0xff]
  %v1704 = vld [vmem:[%s4 + $0x130] sm:$0xff]
  %v1705 = vld [vmem:[%s4 + $0x138] sm:$0xff]
  %v1706 = vld [vmem:[%s4 + $0x140] sm:$0xff]
  %v1707 = vld [vmem:[%s4 + $0x148] sm:$0xff]
  %v1708 = vld [vmem:[%s4 + $0x150] sm:$0xff]
  %v1709 = vld [vmem:[%s4 + $0x158] sm:$0xff]
  %v1710 = vld [vmem:[%s4 + $0x160] sm:$0xff]
  %v1711 = vld [vmem:[%s4 + $0x168] sm:$0xff]
  %v1712 = vld [vmem:[%s4 + $0x170] sm:$0xff]
  %v1713 = vld [vmem:[%s4 + $0x178] sm:$0xff]
  %v1714 = vld [vmem:[%s4 + $0x180] sm:$0xff]
  %v1715 = vld [vmem:[%s4 + $0x188] sm:$0xff]
  %v1716 = vld [vmem:[%s4 + $0x190] sm:$0xff]
  %v1717 = vld [vmem:[%s4 + $0x198] sm:$0xff]
  %v1718 = vld [vmem:[%s4 + $0x1a0] sm:$0xff]
  %v1719 = vld [vmem:[%s4 + $0x1a8] sm:$0xff]
  %v1720 = vld [vmem:[%s4 + $0x1b0] sm:$0xff]
  %v1721 = vld [vmem:[%s4 + $0x1b8] sm:$0xff]
  %v1722 = vld [vmem:[%s4 + $0x1c0] sm:$0xff]
  %v1723 = vld [vmem:[%s4 + $0x1c8] sm:$0xff]
  %v1724 = vld [vmem:[%s4 + $0x1d0] sm:$0xff]
  %v1725 = vld [vmem:[%s4 + $0x1d8] sm:$0xff]
  %v1726 = vld [vmem:[%s4 + $0x1e0] sm:$0xff]
  %v1727 = vld [vmem:[%s4 + $0x1e8] sm:$0xff]
  %v1728 = vld [vmem:[%s4 + $0x1f0] sm:$0xff]
  %v1729 = vld [vmem:[%s4 + $0x1f8] sm:$0xff]
  %v1794 = vunpack.c.l.b16 %v1666
  %v1795 = vunpack.c.h.b16 %v1666
  %v1796 = vunpack.c.l.b16 %v1667
  %v1797 = vunpack.c.h.b16 %v1667
  %v1798 = vunpack.c.l.b16 %v1668
  %v1799 = vunpack.c.h.b16 %v1668
  %v1800 = vunpack.c.l.b16 %v1669
  %v1801 = vunpack.c.h.b16 %v1669
  %v1802 = vunpack.c.l.b16 %v1670
  %v1803 = vunpack.c.h.b16 %v1670
  %v1804 = vunpack.c.l.b16 %v1671
  %v1805 = vunpack.c.h.b16 %v1671
  %v1806 = vunpack.c.l.b16 %v1672
  %v1807 = vunpack.c.h.b16 %v1672
  %v1808 = vunpack.c.l.b16 %v1673
  %v1809 = vunpack.c.h.b16 %v1673
  %v1810 = vunpack.c.l.b16 %v1674
  %v1811 = vunpack.c.h.b16 %v1674
  %v1812 = vunpack.c.l.b16 %v1675
  %v1813 = vunpack.c.h.b16 %v1675
  %v1814 = vunpack.c.l.b16 %v1676
  %v1815 = vunpack.c.h.b16 %v1676
  %v1816 = vunpack.c.l.b16 %v1677
  %v1817 = vunpack.c.h.b16 %v1677
  %v1818 = vunpack.c.l.b16 %v1678
  %v1819 = vunpack.c.h.b16 %v1678
  %v1820 = vunpack.c.l.b16 %v1679
  %v1821 = vunpack.c.h.b16 %v1679
  %v1822 = vunpack.c.l.b16 %v1680
  %v1823 = vunpack.c.h.b16 %v1680
  %v1824 = vunpack.c.l.b16 %v1681
  %v1825 = vunpack.c.h.b16 %v1681
  %v1826 = vunpack.c.l.b16 %v1682
  %v1827 = vunpack.c.h.b16 %v1682
  %v1828 = vunpack.c.l.b16 %v1683
  %v1829 = vunpack.c.h.b16 %v1683
  %v1830 = vunpack.c.l.b16 %v1684
  %v1831 = vunpack.c.h.b16 %v1684
  %v1832 = vunpack.c.l.b16 %v1685
  %v1833 = vunpack.c.h.b16 %v1685
  %v1834 = vunpack.c.l.b16 %v1686
  %v1835 = vunpack.c.h.b16 %v1686
  %v1836 = vunpack.c.l.b16 %v1687
  %v1837 = vunpack.c.h.b16 %v1687
  %v1838 = vunpack.c.l.b16 %v1688
  %v1839 = vunpack.c.h.b16 %v1688
  %v1840 = vunpack.c.l.b16 %v1689
  %v1841 = vunpack.c.h.b16 %v1689
  %v1842 = vunpack.c.l.b16 %v1690
  %v1843 = vunpack.c.h.b16 %v1690
  %v1844 = vunpack.c.l.b16 %v1691
  %v1845 = vunpack.c.h.b16 %v1691
  %v1846 = vunpack.c.l.b16 %v1692
  %v1847 = vunpack.c.h.b16 %v1692
  %v1848 = vunpack.c.l.b16 %v1693
  %v1849 = vunpack.c.h.b16 %v1693
  %v1850 = vunpack.c.l.b16 %v1694
  %v1851 = vunpack.c.h.b16 %v1694
  %v1852 = vunpack.c.l.b16 %v1695
  %v1853 = vunpack.c.h.b16 %v1695
  %v1854 = vunpack.c.l.b16 %v1696
  %v1855 = vunpack.c.h.b16 %v1696
  %v1856 = vunpack.c.l.b16 %v1697
  %v1857 = vunpack.c.h.b16 %v1697
  %v1858 = vunpack.c.l.b16 %v1698
  %v1859 = vunpack.c.h.b16 %v1698
  %v1860 = vunpack.c.l.b16 %v1699
  %v1861 = vunpack.c.h.b16 %v1699
  %v1862 = vunpack.c.l.b16 %v1700
  %v1863 = vunpack.c.h.b16 %v1700
  %v1864 = vunpack.c.l.b16 %v1701
  %v1865 = vunpack.c.h.b16 %v1701
  %v1866 = vunpack.c.l.b16 %v1702
  %v1867 = vunpack.c.h.b16 %v1702
  %v1868 = vunpack.c.l.b16 %v1703
  %v1869 = vunpack.c.h.b16 %v1703
  %v1870 = vunpack.c.l.b16 %v1704
  %v1871 = vunpack.c.h.b16 %v1704
  %v1872 = vunpack.c.l.b16 %v1705
  %v1873 = vunpack.c.h.b16 %v1705
  %v1874 = vunpack.c.l.b16 %v1706
  %v1875 = vunpack.c.h.b16 %v1706
  %v1876 = vunpack.c.l.b16 %v1707
  %v1877 = vunpack.c.h.b16 %v1707
  %v1878 = vunpack.c.l.b16 %v1708
  %v1879 = vunpack.c.h.b16 %v1708
  %v1880 = vunpack.c.l.b16 %v1709
  %v1881 = vunpack.c.h.b16 %v1709
  %v1882 = vunpack.c.l.b16 %v1710
  %v1883 = vunpack.c.h.b16 %v1710
  %v1884 = vunpack.c.l.b16 %v1711
  %v1885 = vunpack.c.h.b16 %v1711
  %v1886 = vunpack.c.l.b16 %v1712
  %v1887 = vunpack.c.h.b16 %v1712
  %v1888 = vunpack.c.l.b16 %v1713
  %v1889 = vunpack.c.h.b16 %v1713
  %v1890 = vunpack.c.l.b16 %v1714
  %v1891 = vunpack.c.h.b16 %v1714
  %v1892 = vunpack.c.l.b16 %v1715
  %v1893 = vunpack.c.h.b16 %v1715
  %v1894 = vunpack.c.l.b16 %v1716
  %v1895 = vunpack.c.h.b16 %v1716
  %v1896 = vunpack.c.l.b16 %v1717
  %v1897 = vunpack.c.h.b16 %v1717
  %v1898 = vunpack.c.l.b16 %v1718
  %v1899 = vunpack.c.h.b16 %v1718
  %v1900 = vunpack.c.l.b16 %v1719
  %v1901 = vunpack.c.h.b16 %v1719
  %v1902 = vunpack.c.l.b16 %v1720
  %v1903 = vunpack.c.h.b16 %v1720
  %v1904 = vunpack.c.l.b16 %v1721
  %v1905 = vunpack.c.h.b16 %v1721
  %v1906 = vunpack.c.l.b16 %v1722
  %v1907 = vunpack.c.h.b16 %v1722
  %v1908 = vunpack.c.l.b16 %v1723
  %v1909 = vunpack.c.h.b16 %v1723
  %v1910 = vunpack.c.l.b16 %v1724
  %v1911 = vunpack.c.h.b16 %v1724
  %v1912 = vunpack.c.l.b16 %v1725
  %v1913 = vunpack.c.h.b16 %v1725
  %v1914 = vunpack.c.l.b16 %v1726
  %v1915 = vunpack.c.h.b16 %v1726
  %v1916 = vunpack.c.l.b16 %v1727
  %v1917 = vunpack.c.h.b16 %v1727
  %v1918 = vunpack.c.l.b16 %v1728
  %v1919 = vunpack.c.h.b16 %v1728
  %v1920 = vunpack.c.l.b16 %v1729
  %v1921 = vunpack.c.h.b16 %v1729
  %v1922 = vpack.c.b16 %v1796, %v1794
  %v1923 = vpack.c.b16 %v1797, %v1795
  %v1924 = vpack.c.b16 %v1800, %v1798
  %v1925 = vpack.c.b16 %v1801, %v1799
  %v1926 = vpack.c.b16 %v1804, %v1802
  %v1927 = vpack.c.b16 %v1805, %v1803
  %v1928 = vpack.c.b16 %v1808, %v1806
  %v1929 = vpack.c.b16 %v1809, %v1807
  %v1930 = vpack.c.b16 %v1812, %v1810
  %v1931 = vpack.c.b16 %v1813, %v1811
  %v1932 = vpack.c.b16 %v1816, %v1814
  %v1933 = vpack.c.b16 %v1817, %v1815
  %v1934 = vpack.c.b16 %v1820, %v1818
  %v1935 = vpack.c.b16 %v1821, %v1819
  %v1936 = vpack.c.b16 %v1824, %v1822
  %v1937 = vpack.c.b16 %v1825, %v1823
  %v1938 = vpack.c.b16 %v1828, %v1826
  %v1939 = vpack.c.b16 %v1829, %v1827
  %v1940 = vpack.c.b16 %v1832, %v1830
  %v1941 = vpack.c.b16 %v1833, %v1831
  %v1942 = vpack.c.b16 %v1836, %v1834
  %v1943 = vpack.c.b16 %v1837, %v1835
  %v1944 = vpack.c.b16 %v1840, %v1838
  %v1945 = vpack.c.b16 %v1841, %v1839
  %v1946 = vpack.c.b16 %v1844, %v1842
  %v1947 = vpack.c.b16 %v1845, %v1843
  %v1948 = vpack.c.b16 %v1848, %v1846
  %v1949 = vpack.c.b16 %v1849, %v1847
  %v1950 = vpack.c.b16 %v1852, %v1850
  %v1951 = vpack.c.b16 %v1853, %v1851
  %v1952 = vpack.c.b16 %v1856, %v1854
  %v1953 = vpack.c.b16 %v1857, %v1855
  %v1954 = vpack.c.b16 %v1860, %v1858
  %v1955 = vpack.c.b16 %v1861, %v1859
  %v1956 = vpack.c.b16 %v1864, %v1862
  %v1957 = vpack.c.b16 %v1865, %v1863
  %v1958 = vpack.c.b16 %v1868, %v1866
  %v1959 = vpack.c.b16 %v1869, %v1867
  %v1960 = vpack.c.b16 %v1872, %v1870
  %v1961 = vpack.c.b16 %v1873, %v1871
  %v1962 = vpack.c.b16 %v1876, %v1874
  %v1963 = vpack.c.b16 %v1877, %v1875
  %v1964 = vpack.c.b16 %v1880, %v1878
  %v1965 = vpack.c.b16 %v1881, %v1879
  %v1966 = vpack.c.b16 %v1884, %v1882
  %v1967 = vpack.c.b16 %v1885, %v1883
  %v1968 = vpack.c.b16 %v1888, %v1886
  %v1969 = vpack.c.b16 %v1889, %v1887
  %v1970 = vpack.c.b16 %v1892, %v1890
  %v1971 = vpack.c.b16 %v1893, %v1891
  %v1972 = vpack.c.b16 %v1896, %v1894
  %v1973 = vpack.c.b16 %v1897, %v1895
  %v1974 = vpack.c.b16 %v1900, %v1898
  %v1975 = vpack.c.b16 %v1901, %v1899
  %v1976 = vpack.c.b16 %v1904, %v1902
  %v1977 = vpack.c.b16 %v1905, %v1903
  %v1978 = vpack.c.b16 %v1908, %v1906
  %v1979 = vpack.c.b16 %v1909, %v1907
  %v1980 = vpack.c.b16 %v1912, %v1910
  %v1981 = vpack.c.b16 %v1913, %v1911
  %v1982 = vpack.c.b16 %v1916, %v1914
  %v1983 = vpack.c.b16 %v1917, %v1915
  %v1984 = vpack.c.b16 %v1920, %v1918
  %v1985 = vpack.c.b16 %v1921, %v1919
  %2050 = vmatprep.subr.bf16.mxu0 %v1937
  %2051 = vmatpush1.bf16.msra.mxu0 %v1936
  %2052 = vmatprep.subr.bf16.mxu0 %v1935
  %2053 = vmatpush1.bf16.msra.mxu0 %v1934
  %2054 = vmatprep.subr.bf16.mxu0 %v1933
  %2055 = vmatpush1.bf16.msra.mxu0 %v1932
  %2056 = vmatprep.subr.bf16.mxu0 %v1931
  %2057 = vmatpush1.bf16.msra.mxu0 %v1930
  %2058 = vmatprep.subr.bf16.mxu0 %v1929
  %2059 = vmatpush1.bf16.msra.mxu0 %v1928
  %2060 = vmatprep.subr.bf16.mxu0 %v1927
  %2061 = vmatpush1.bf16.msra.mxu0 %v1926
  %2062 = vmatprep.subr.bf16.mxu0 %v1925
  %2063 = vmatpush1.bf16.msra.mxu0 %v1924
  %2064 = vmatprep.subr.bf16.mxu0 %v1923
  %2065 = vmatpush1.bf16.msra.mxu0 %v1922
  %2066 = vmatprep.subr.bf16.mxu0 %v1953
  %2067 = vmatpush2.bf16.msra.mxu0 %v1952
  %2068 = vmatprep.subr.bf16.mxu0 %v1951
  %2069 = vmatpush2.bf16.msra.mxu0 %v1950
  %2070 = vmatprep.subr.bf16.mxu0 %v1949
  %2071 = vmatpush2.bf16.msra.mxu0 %v1948
  %2072 = vmatprep.subr.bf16.mxu0 %v1947
  %2073 = vmatpush2.bf16.msra.mxu0 %v1946
  %2074 = vmatprep.subr.bf16.mxu0 %v1945
  %2075 = vmatpush2.bf16.msra.mxu0 %v1944
  %2076 = vmatprep.subr.bf16.mxu0 %v1943
  %2077 = vmatpush2.bf16.msra.mxu0 %v1942
  %2078 = vmatprep.subr.bf16.mxu0 %v1941
  %2079 = vmatpush2.bf16.msra.mxu0 %v1940
  %2080 = vmatprep.subr.bf16.mxu0 %v1939
  %2081 = vmatpush2.bf16.msra.mxu0 %v1938
  %2082 = vmatprep.mubr.bf16.mxu0 %v1603
  %2083 = vmatmul.mubr.bf16.gmra.mxu0 %v1602
  %v2084 = vpop.f32.mrf.mxu0
  %v2085 = vadd.f32 0.0, %v2084
  %v2086 = vpop.f32.mrf.mxu0
  %v2087 = vadd.f32 0.0, %v2086
  %v2088 = vpop.f32.mrf.mxu0
  %v2089 = vadd.f32 0.0, %v2088
  %v2090 = vpop.f32.mrf.mxu0
  %v2091 = vadd.f32 0.0, %v2090
  %2092 = vmatprep.mubr.bf16.mxu0 %v1607
  %2093 = vmatmul.mubr.bf16.gmra.mxu0 %v1606
  %v2094 = vpop.f32.mrf.mxu0
  %v2095 = vadd.f32 0.0, %v2094
  %v2096 = vpop.f32.mrf.mxu0
  %v2097 = vadd.f32 0.0, %v2096
  %v2098 = vpop.f32.mrf.mxu0
  %v2099 = vadd.f32 0.0, %v2098
  %v2100 = vpop.f32.mrf.mxu0
  %v2101 = vadd.f32 0.0, %v2100
  %2102 = vmatprep.mubr.bf16.mxu0 %v1611
  %2103 = vmatmul.mubr.bf16.gmra.mxu0 %v1610
  %v2104 = vpop.f32.mrf.mxu0
  %v2105 = vadd.f32 0.0, %v2104
  %v2106 = vpop.f32.mrf.mxu0
  %v2107 = vadd.f32 0.0, %v2106
  %v2108 = vpop.f32.mrf.mxu0
  %v2109 = vadd.f32 0.0, %v2108
  %v2110 = vpop.f32.mrf.mxu0
  %v2111 = vadd.f32 0.0, %v2110
  %2112 = vmatprep.mubr.bf16.mxu0 %v1615
  %2113 = vmatmul.mubr.bf16.gmra.mxu0 %v1614
  %v2114 = vpop.f32.mrf.mxu0
  %v2115 = vadd.f32 0.0, %v2114
  %v2116 = vpop.f32.mrf.mxu0
  %v2117 = vadd.f32 0.0, %v2116
  %v2118 = vpop.f32.mrf.mxu0
  %v2119 = vadd.f32 0.0, %v2118
  %v2120 = vpop.f32.mrf.mxu0
  %v2121 = vadd.f32 0.0, %v2120
  %2122 = vmatprep.mubr.bf16.mxu0 %v1619
  %2123 = vmatmul.mubr.bf16.gmra.mxu0 %v1618
  %v2124 = vpop.f32.mrf.mxu0
  %v2125 = vadd.f32 0.0, %v2124
  %v2126 = vpop.f32.mrf.mxu0
  %v2127 = vadd.f32 0.0, %v2126
  %v2128 = vpop.f32.mrf.mxu0
  %v2129 = vadd.f32 0.0, %v2128
  %v2130 = vpop.f32.mrf.mxu0
  %v2131 = vadd.f32 0.0, %v2130
  %2132 = vmatprep.mubr.bf16.mxu0 %v1623
  %2133 = vmatmul.mubr.bf16.gmra.mxu0 %v1622
  %v2134 = vpop.f32.mrf.mxu0
  %v2135 = vadd.f32 0.0, %v2134
  %v2136 = vpop.f32.mrf.mxu0
  %v2137 = vadd.f32 0.0, %v2136
  %v2138 = vpop.f32.mrf.mxu0
  %v2139 = vadd.f32 0.0, %v2138
  %v2140 = vpop.f32.mrf.mxu0
  %v2141 = vadd.f32 0.0, %v2140
  %2142 = vmatprep.mubr.bf16.mxu0 %v1627
  %2143 = vmatmul.mubr.bf16.gmra.mxu0 %v1626
  %v2144 = vpop.f32.mrf.mxu0
  %v2145 = vadd.f32 0.0, %v2144
  %v2146 = vpop.f32.mrf.mxu0
  %v2147 = vadd.f32 0.0, %v2146
  %v2148 = vpop.f32.mrf.mxu0
  %v2149 = vadd.f32 0.0, %v2148
  %v2150 = vpop.f32.mrf.mxu0
  %v2151 = vadd.f32 0.0, %v2150
  %2152 = vmatprep.mubr.bf16.mxu0 %v1631
  %2153 = vmatmul.mubr.bf16.gmra.mxu0 %v1630
  %v2154 = vpop.f32.mrf.mxu0
  %v2155 = vadd.f32 0.0, %v2154
  %v2156 = vpop.f32.mrf.mxu0
  %v2157 = vadd.f32 0.0, %v2156
  %v2158 = vpop.f32.mrf.mxu0
  %v2159 = vadd.f32 0.0, %v2158
  %v2160 = vpop.f32.mrf.mxu0
  %v2161 = vadd.f32 0.0, %v2160
  %2162 = vmatprep.mubr.bf16.mxu0 %v1635
  %2163 = vmatmul.mubr.bf16.gmra.mxu0 %v1634
  %v2164 = vpop.f32.mrf.mxu0
  %v2165 = vadd.f32 0.0, %v2164
  %v2166 = vpop.f32.mrf.mxu0
  %v2167 = vadd.f32 0.0, %v2166
  %v2168 = vpop.f32.mrf.mxu0
  %v2169 = vadd.f32 0.0, %v2168
  %v2170 = vpop.f32.mrf.mxu0
  %v2171 = vadd.f32 0.0, %v2170
  %2172 = vmatprep.mubr.bf16.mxu0 %v1639
  %2173 = vmatmul.mubr.bf16.gmra.mxu0 %v1638
  %v2174 = vpop.f32.mrf.mxu0
  %v2175 = vadd.f32 0.0, %v2174
  %v2176 = vpop.f32.mrf.mxu0
  %v2177 = vadd.f32 0.0, %v2176
  %v2178 = vpop.f32.mrf.mxu0
  %v2179 = vadd.f32 0.0, %v2178
  %v2180 = vpop.f32.mrf.mxu0
  %v2181 = vadd.f32 0.0, %v2180
  %2182 = vmatprep.mubr.bf16.mxu0 %v1643
  %2183 = vmatmul.mubr.bf16.gmra.mxu0 %v1642
  %v2184 = vpop.f32.mrf.mxu0
  %v2185 = vadd.f32 0.0, %v2184
  %v2186 = vpop.f32.mrf.mxu0
  %v2187 = vadd.f32 0.0, %v2186
  %v2188 = vpop.f32.mrf.mxu0
  %v2189 = vadd.f32 0.0, %v2188
  %v2190 = vpop.f32.mrf.mxu0
  %v2191 = vadd.f32 0.0, %v2190
  %2192 = vmatprep.mubr.bf16.mxu0 %v1647
  %2193 = vmatmul.mubr.bf16.gmra.mxu0 %v1646
  %v2194 = vpop.f32.mrf.mxu0
  %v2195 = vadd.f32 0.0, %v2194
  %v2196 = vpop.f32.mrf.mxu0
  %v2197 = vadd.f32 0.0, %v2196
  %v2198 = vpop.f32.mrf.mxu0
  %v2199 = vadd.f32 0.0, %v2198
  %v2200 = vpop.f32.mrf.mxu0
  %v2201 = vadd.f32 0.0, %v2200
  %2202 = vmatprep.mubr.bf16.mxu0 %v1651
  %2203 = vmatmul.mubr.bf16.gmra.mxu0 %v1650
  %v2204 = vpop.f32.mrf.mxu0
  %v2205 = vadd.f32 0.0, %v2204
  %v2206 = vpop.f32.mrf.mxu0
  %v2207 = vadd.f32 0.0, %v2206
  %v2208 = vpop.f32.mrf.mxu0
  %v2209 = vadd.f32 0.0, %v2208
  %v2210 = vpop.f32.mrf.mxu0
  %v2211 = vadd.f32 0.0, %v2210
  %2212 = vmatprep.mubr.bf16.mxu0 %v1655
  %2213 = vmatmul.mubr.bf16.gmra.mxu0 %v1654
  %v2214 = vpop.f32.mrf.mxu0
  %v2215 = vadd.f32 0.0, %v2214
  %v2216 = vpop.f32.mrf.mxu0
  %v2217 = vadd.f32 0.0, %v2216
  %v2218 = vpop.f32.mrf.mxu0
  %v2219 = vadd.f32 0.0, %v2218
  %v2220 = vpop.f32.mrf.mxu0
  %v2221 = vadd.f32 0.0, %v2220
  %2222 = vmatprep.mubr.bf16.mxu0 %v1659
  %2223 = vmatmul.mubr.bf16.gmra.mxu0 %v1658
  %v2224 = vpop.f32.mrf.mxu0
  %v2225 = vadd.f32 0.0, %v2224
  %v2226 = vpop.f32.mrf.mxu0
  %v2227 = vadd.f32 0.0, %v2226
  %v2228 = vpop.f32.mrf.mxu0
  %v2229 = vadd.f32 0.0, %v2228
  %v2230 = vpop.f32.mrf.mxu0
  %v2231 = vadd.f32 0.0, %v2230
  %2232 = vmatprep.mubr.bf16.mxu0 %v1663
  %2233 = vmatmul.mubr.bf16.gmra.mxu0 %v1662
  %v2234 = vpop.f32.mrf.mxu0
  %v2235 = vadd.f32 0.0, %v2234
  %v2236 = vpop.f32.mrf.mxu0
  %v2237 = vadd.f32 0.0, %v2236
  %v2238 = vpop.f32.mrf.mxu0
  %v2239 = vadd.f32 0.0, %v2238
  %v2240 = vpop.f32.mrf.mxu0
  %v2241 = vadd.f32 0.0, %v2240
  %2242 = vdwg.mxu0
  %2243 = vmatprep.subr.bf16.mxu0 %v1969
  %2244 = vmatpush1.bf16.msra.mxu0 %v1968
  %2245 = vmatprep.subr.bf16.mxu0 %v1967
  %2246 = vmatpush1.bf16.msra.mxu0 %v1966
  %2247 = vmatprep.subr.bf16.mxu0 %v1965
  %2248 = vmatpush1.bf16.msra.mxu0 %v1964
  %2249 = vmatprep.subr.bf16.mxu0 %v1963
  %2250 = vmatpush1.bf16.msra.mxu0 %v1962
  %2251 = vmatprep.subr.bf16.mxu0 %v1961
  %2252 = vmatpush1.bf16.msra.mxu0 %v1960
  %2253 = vmatprep.subr.bf16.mxu0 %v1959
  %2254 = vmatpush1.bf16.msra.mxu0 %v1958
  %2255 = vmatprep.subr.bf16.mxu0 %v1957
  %2256 = vmatpush1.bf16.msra.mxu0 %v1956
  %2257 = vmatprep.subr.bf16.mxu0 %v1955
  %2258 = vmatpush1.bf16.msra.mxu0 %v1954
  %2259 = vmatprep.subr.bf16.mxu0 %v1985
  %2260 = vmatpush2.bf16.msra.mxu0 %v1984
  %2261 = vmatprep.subr.bf16.mxu0 %v1983
  %2262 = vmatpush2.bf16.msra.mxu0 %v1982
  %2263 = vmatprep.subr.bf16.mxu0 %v1981
  %2264 = vmatpush2.bf16.msra.mxu0 %v1980
  %2265 = vmatprep.subr.bf16.mxu0 %v1979
  %2266 = vmatpush2.bf16.msra.mxu0 %v1978
  %2267 = vmatprep.subr.bf16.mxu0 %v1977
  %2268 = vmatpush2.bf16.msra.mxu0 %v1976
  %2269 = vmatprep.subr.bf16.mxu0 %v1975
  %2270 = vmatpush2.bf16.msra.mxu0 %v1974
  %2271 = vmatprep.subr.bf16.mxu0 %v1973
  %2272 = vmatpush2.bf16.msra.mxu0 %v1972
  %2273 = vmatprep.subr.bf16.mxu0 %v1971
  %2274 = vmatpush2.bf16.msra.mxu0 %v1970
  %2275 = vmatprep.mubr.bf16.mxu0 %v1605
  %2276 = vmatmul.mubr.bf16.gmra.mxu0 %v1604
  %v2277 = vpop.f32.mrf.mxu0
  %v2278 = vadd.f32 %v2085, %v2277
  %v2279 = vpop.f32.mrf.mxu0
  %v2280 = vadd.f32 %v2087, %v2279
  %v2281 = vpop.f32.mrf.mxu0
  %v2282 = vadd.f32 %v2089, %v2281
  %v2283 = vpop.f32.mrf.mxu0
  %v2284 = vadd.f32 %v2091, %v2283
  %2285 = vmatprep.mubr.bf16.mxu0 %v1609
  %2286 = vmatmul.mubr.bf16.gmra.mxu0 %v1608
  %v2287 = vpop.f32.mrf.mxu0
  %v2288 = vadd.f32 %v2095, %v2287
  %v2289 = vpop.f32.mrf.mxu0
  %v2290 = vadd.f32 %v2097, %v2289
  %v2291 = vpop.f32.mrf.mxu0
  %v2292 = vadd.f32 %v2099, %v2291
  %v2293 = vpop.f32.mrf.mxu0
  %v2294 = vadd.f32 %v2101, %v2293
  %2295 = vmatprep.mubr.bf16.mxu0 %v1613
  %2296 = vmatmul.mubr.bf16.gmra.mxu0 %v1612
  %v2297 = vpop.f32.mrf.mxu0
  %v2298 = vadd.f32 %v2105, %v2297
  %v2299 = vpop.f32.mrf.mxu0
  %v2300 = vadd.f32 %v2107, %v2299
  %v2301 = vpop.f32.mrf.mxu0
  %v2302 = vadd.f32 %v2109, %v2301
  %v2303 = vpop.f32.mrf.mxu0
  %v2304 = vadd.f32 %v2111, %v2303
  %2305 = vmatprep.mubr.bf16.mxu0 %v1617
  %2306 = vmatmul.mubr.bf16.gmra.mxu0 %v1616
  %v2307 = vpop.f32.mrf.mxu0
  %v2308 = vadd.f32 %v2115, %v2307
  %v2309 = vpop.f32.mrf.mxu0
  %v2310 = vadd.f32 %v2117, %v2309
  %v2311 = vpop.f32.mrf.mxu0
  %v2312 = vadd.f32 %v2119, %v2311
  %v2313 = vpop.f32.mrf.mxu0
  %v2314 = vadd.f32 %v2121, %v2313
  %2315 = vmatprep.mubr.bf16.mxu0 %v1621
  %2316 = vmatmul.mubr.bf16.gmra.mxu0 %v1620
  %v2317 = vpop.f32.mrf.mxu0
  %v2318 = vadd.f32 %v2125, %v2317
  %v2319 = vpop.f32.mrf.mxu0
  %v2320 = vadd.f32 %v2127, %v2319
  %v2321 = vpop.f32.mrf.mxu0
  %v2322 = vadd.f32 %v2129, %v2321
  %v2323 = vpop.f32.mrf.mxu0
  %v2324 = vadd.f32 %v2131, %v2323
  %2325 = vmatprep.mubr.bf16.mxu0 %v1625
  %2326 = vmatmul.mubr.bf16.gmra.mxu0 %v1624
  %v2327 = vpop.f32.mrf.mxu0
  %v2328 = vadd.f32 %v2135, %v2327
  %v2329 = vpop.f32.mrf.mxu0
  %v2330 = vadd.f32 %v2137, %v2329
  %v2331 = vpop.f32.mrf.mxu0
  %v2332 = vadd.f32 %v2139, %v2331
  %v2333 = vpop.f32.mrf.mxu0
  %v2334 = vadd.f32 %v2141, %v2333
  %2335 = vmatprep.mubr.bf16.mxu0 %v1629
  %2336 = vmatmul.mubr.bf16.gmra.mxu0 %v1628
  %v2337 = vpop.f32.mrf.mxu0
  %v2338 = vadd.f32 %v2145, %v2337
  %v2339 = vpop.f32.mrf.mxu0
  %v2340 = vadd.f32 %v2147, %v2339
  %v2341 = vpop.f32.mrf.mxu0
  %v2342 = vadd.f32 %v2149, %v2341
  %v2343 = vpop.f32.mrf.mxu0
  %v2344 = vadd.f32 %v2151, %v2343
  %2345 = vmatprep.mubr.bf16.mxu0 %v1633
  %2346 = vmatmul.mubr.bf16.gmra.mxu0 %v1632
  %v2347 = vpop.f32.mrf.mxu0
  %v2348 = vadd.f32 %v2155, %v2347
  %v2349 = vpop.f32.mrf.mxu0
  %v2350 = vadd.f32 %v2157, %v2349
  %v2351 = vpop.f32.mrf.mxu0
  %v2352 = vadd.f32 %v2159, %v2351
  %v2353 = vpop.f32.mrf.mxu0
  %v2354 = vadd.f32 %v2161, %v2353
  %2355 = vmatprep.mubr.bf16.mxu0 %v1637
  %2356 = vmatmul.mubr.bf16.gmra.mxu0 %v1636
  %v2357 = vpop.f32.mrf.mxu0
  %v2358 = vadd.f32 %v2165, %v2357
  %v2359 = vpop.f32.mrf.mxu0
  %v2360 = vadd.f32 %v2167, %v2359
  %v2361 = vpop.f32.mrf.mxu0
  %v2362 = vadd.f32 %v2169, %v2361
  %v2363 = vpop.f32.mrf.mxu0
  %v2364 = vadd.f32 %v2171, %v2363
  %2365 = vmatprep.mubr.bf16.mxu0 %v1641
  %2366 = vmatmul.mubr.bf16.gmra.mxu0 %v1640
  %v2367 = vpop.f32.mrf.mxu0
  %v2368 = vadd.f32 %v2175, %v2367
  %v2369 = vpop.f32.mrf.mxu0
  %v2370 = vadd.f32 %v2177, %v2369
  %v2371 = vpop.f32.mrf.mxu0
  %v2372 = vadd.f32 %v2179, %v2371
  %v2373 = vpop.f32.mrf.mxu0
  %v2374 = vadd.f32 %v2181, %v2373
  %2375 = vmatprep.mubr.bf16.mxu0 %v1645
  %2376 = vmatmul.mubr.bf16.gmra.mxu0 %v1644
  %v2377 = vpop.f32.mrf.mxu0
  %v2378 = vadd.f32 %v2185, %v2377
  %v2379 = vpop.f32.mrf.mxu0
  %v2380 = vadd.f32 %v2187, %v2379
  %v2381 = vpop.f32.mrf.mxu0
  %v2382 = vadd.f32 %v2189, %v2381
  %v2383 = vpop.f32.mrf.mxu0
  %v2384 = vadd.f32 %v2191, %v2383
  %2385 = vmatprep.mubr.bf16.mxu0 %v1649
  %2386 = vmatmul.mubr.bf16.gmra.mxu0 %v1648
  %v2387 = vpop.f32.mrf.mxu0
  %v2388 = vadd.f32 %v2195, %v2387
  %v2389 = vpop.f32.mrf.mxu0
  %v2390 = vadd.f32 %v2197, %v2389
  %v2391 = vpop.f32.mrf.mxu0
  %v2392 = vadd.f32 %v2199, %v2391
  %v2393 = vpop.f32.mrf.mxu0
  %v2394 = vadd.f32 %v2201, %v2393
  %2395 = vmatprep.mubr.bf16.mxu0 %v1653
  %2396 = vmatmul.mubr.bf16.gmra.mxu0 %v1652
  %v2397 = vpop.f32.mrf.mxu0
  %v2398 = vadd.f32 %v2205, %v2397
  %v2399 = vpop.f32.mrf.mxu0
  %v2400 = vadd.f32 %v2207, %v2399
  %v2401 = vpop.f32.mrf.mxu0
  %v2402 = vadd.f32 %v2209, %v2401
  %v2403 = vpop.f32.mrf.mxu0
  %v2404 = vadd.f32 %v2211, %v2403
  %2405 = vmatprep.mubr.bf16.mxu0 %v1657
  %2406 = vmatmul.mubr.bf16.gmra.mxu0 %v1656
  %v2407 = vpop.f32.mrf.mxu0
  %v2408 = vadd.f32 %v2215, %v2407
  %v2409 = vpop.f32.mrf.mxu0
  %v2410 = vadd.f32 %v2217, %v2409
  %v2411 = vpop.f32.mrf.mxu0
  %v2412 = vadd.f32 %v2219, %v2411
  %v2413 = vpop.f32.mrf.mxu0
  %v2414 = vadd.f32 %v2221, %v2413
  %2415 = vmatprep.mubr.bf16.mxu0 %v1661
  %2416 = vmatmul.mubr.bf16.gmra.mxu0 %v1660
  %v2417 = vpop.f32.mrf.mxu0
  %v2418 = vadd.f32 %v2225, %v2417
  %v2419 = vpop.f32.mrf.mxu0
  %v2420 = vadd.f32 %v2227, %v2419
  %v2421 = vpop.f32.mrf.mxu0
  %v2422 = vadd.f32 %v2229, %v2421
  %v2423 = vpop.f32.mrf.mxu0
  %v2424 = vadd.f32 %v2231, %v2423
  %2425 = vmatprep.mubr.bf16.mxu0 %v1665
  %2426 = vmatmul.mubr.bf16.gmra.mxu0 %v1664
  %v2427 = vpop.f32.mrf.mxu0
  %v2428 = vadd.f32 %v2235, %v2427
  %v2429 = vpop.f32.mrf.mxu0
  %v2430 = vadd.f32 %v2237, %v2429
  %v2431 = vpop.f32.mrf.mxu0
  %v2432 = vadd.f32 %v2239, %v2431
  %v2433 = vpop.f32.mrf.mxu0
  %v2434 = vadd.f32 %v2241, %v2433
  %2435 = vdwg.mxu0
  %v2436 = vadd.f32 %v2278, %v2282
  %v2437 = vadd.f32 %v2436, %v2288
  %v2438 = vadd.f32 %v2437, %v2292
  %v2439 = vadd.f32 %v2438, %v2298
  %v2440 = vadd.f32 %v2439, %v2302
  %v2441 = vadd.f32 %v2440, %v2308
  %v2442 = vadd.f32 %v2441, %v2312
  %v2443 = vadd.f32 %v2442, %v2318
  %v2444 = vadd.f32 %v2443, %v2322
  %v2445 = vadd.f32 %v2444, %v2328
  %v2446 = vadd.f32 %v2445, %v2332
  %v2447 = vadd.f32 %v2446, %v2338
  %v2448 = vadd.f32 %v2447, %v2342
  %v2449 = vadd.f32 %v2448, %v2348
  %v2450 = vadd.f32 %v2449, %v2352
  %v2451 = vadd.f32 %v2450, %v2358
  %v2452 = vadd.f32 %v2451, %v2362
  %v2453 = vadd.f32 %v2452, %v2368
  %v2454 = vadd.f32 %v2453, %v2372
  %v2455 = vadd.f32 %v2454, %v2378
  %v2456 = vadd.f32 %v2455, %v2382
  %v2457 = vadd.f32 %v2456, %v2388
  %v2458 = vadd.f32 %v2457, %v2392
  %v2459 = vadd.f32 %v2458, %v2398
  %v2460 = vadd.f32 %v2459, %v2402
  %v2461 = vadd.f32 %v2460, %v2408
  %v2462 = vadd.f32 %v2461, %v2412
  %v2463 = vadd.f32 %v2462, %v2418
  %v2464 = vadd.f32 %v2463, %v2422
  %v2465 = vadd.f32 %v2464, %v2428
  %v2466 = vadd.f32 %v2465, %v2432
  %v2467 = vrot.slane %v2466, 4
  %v2468 = vadd.f32 %v2466, %v2467
  %v2469 = vrot.slane %v2468, 2
  %v2470 = vadd.f32 %v2468, %v2469
  %v2471 = vrot.slane %v2470, 1
  %v2472 = vadd.f32 %v2470, %v2471
  %v2473 = vadd.f32 %v2280, %v2284
  %v2474 = vadd.f32 %v2473, %v2290
  %v2475 = vadd.f32 %v2474, %v2294
  %v2476 = vadd.f32 %v2475, %v2300
  %v2477 = vadd.f32 %v2476, %v2304
  %v2478 = vadd.f32 %v2477, %v2310
  %v2479 = vadd.f32 %v2478, %v2314
  %v2480 = vadd.f32 %v2479, %v2320
  %v2481 = vadd.f32 %v2480, %v2324
  %v2482 = vadd.f32 %v2481, %v2330
  %v2483 = vadd.f32 %v2482, %v2334
  %v2484 = vadd.f32 %v2483, %v2340
  %v2485 = vadd.f32 %v2484, %v2344
  %v2486 = vadd.f32 %v2485, %v2350
  %v2487 = vadd.f32 %v2486, %v2354
  %v2488 = vadd.f32 %v2487, %v2360
  %v2489 = vadd.f32 %v2488, %v2364
  %v2490 = vadd.f32 %v2489, %v2370
  %v2491 = vadd.f32 %v2490, %v2374
  %v2492 = vadd.f32 %v2491, %v2380
  %v2493 = vadd.f32 %v2492, %v2384
  %v2494 = vadd.f32 %v2493, %v2390
  %v2495 = vadd.f32 %v2494, %v2394
  %v2496 = vadd.f32 %v2495, %v2400
  %v2497 = vadd.f32 %v2496, %v2404
  %v2498 = vadd.f32 %v2497, %v2410
  %v2499 = vadd.f32 %v2498, %v2414
  %v2500 = vadd.f32 %v2499, %v2420
  %v2501 = vadd.f32 %v2500, %v2424
  %v2502 = vadd.f32 %v2501, %v2430
  %v2503 = vadd.f32 %v2502, %v2434
  %v2504 = vrot.slane %v2503, 4
  %v2505 = vadd.f32 %v2503, %v2504
  %v2506 = vrot.slane %v2505, 2
  %v2507 = vadd.f32 %v2505, %v2506
  %v2508 = vrot.slane %v2507, 1
  %v2509 = vadd.f32 %v2507, %v2508
  %v2510 = vmul.f32 %v2472, 0.00390625
  %v2511 = vmul.f32 %v2509, 0.00390625
  %v2512 = vmul.f32 %v2278, %v2278
  %v2513 = vmul.f32 %v2280, %v2280
  %v2514 = vmul.f32 %v2282, %v2282
  %v2515 = vmul.f32 %v2284, %v2284
  %v2516 = vmul.f32 %v2288, %v2288
  %v2517 = vmul.f32 %v2290, %v2290
  %v2518 = vmul.f32 %v2292, %v2292
  %v2519 = vmul.f32 %v2294, %v2294
  %v2520 = vmul.f32 %v2298, %v2298
  %v2521 = vmul.f32 %v2300, %v2300
  %v2522 = vmul.f32 %v2302, %v2302
  %v2523 = vmul.f32 %v2304, %v2304
  %v2524 = vmul.f32 %v2308, %v2308
  %v2525 = vmul.f32 %v2310, %v2310
  %v2526 = vmul.f32 %v2312, %v2312
  %v2527 = vmul.f32 %v2314, %v2314
  %v2528 = vmul.f32 %v2318, %v2318
  %v2529 = vmul.f32 %v2320, %v2320
  %v2530 = vmul.f32 %v2322, %v2322
  %v2531 = vmul.f32 %v2324, %v2324
  %v2532 = vmul.f32 %v2328, %v2328
  %v2533 = vmul.f32 %v2330, %v2330
  %v2534 = vmul.f32 %v2332, %v2332
  %v2535 = vmul.f32 %v2334, %v2334
  %v2536 = vmul.f32 %v2338, %v2338
  %v2537 = vmul.f32 %v2340, %v2340
  %v2538 = vmul.f32 %v2342, %v2342
  %v2539 = vmul.f32 %v2344, %v2344
  %v2540 = vmul.f32 %v2348, %v2348
  %v2541 = vmul.f32 %v2350, %v2350
  %v2542 = vmul.f32 %v2352, %v2352
  %v2543 = vmul.f32 %v2354, %v2354
  %v2544 = vmul.f32 %v2358, %v2358
  %v2545 = vmul.f32 %v2360, %v2360
  %v2546 = vmul.f32 %v2362, %v2362
  %v2547 = vmul.f32 %v2364, %v2364
  %v2548 = vmul.f32 %v2368, %v2368
  %v2549 = vmul.f32 %v2370, %v2370
  %v2550 = vmul.f32 %v2372, %v2372
  %v2551 = vmul.f32 %v2374, %v2374
  %v2552 = vmul.f32 %v2378, %v2378
  %v2553 = vmul.f32 %v2380, %v2380
  %v2554 = vmul.f32 %v2382, %v2382
  %v2555 = vmul.f32 %v2384, %v2384
  %v2556 = vmul.f32 %v2388, %v2388
  %v2557 = vmul.f32 %v2390, %v2390
  %v2558 = vmul.f32 %v2392, %v2392
  %v2559 = vmul.f32 %v2394, %v2394
  %v2560 = vmul.f32 %v2398, %v2398
  %v2561 = vmul.f32 %v2400, %v2400
  %v2562 = vmul.f32 %v2402, %v2402
  %v2563 = vmul.f32 %v2404, %v2404
  %v2564 = vmul.f32 %v2408, %v2408
  %v2565 = vmul.f32 %v2410, %v2410
  %v2566 = vmul.f32 %v2412, %v2412
  %v2567 = vmul.f32 %v2414, %v2414
  %v2568 = vmul.f32 %v2418, %v2418
  %v2569 = vmul.f32 %v2420, %v2420
  %v2570 = vmul.f32 %v2422, %v2422
  %v2571 = vmul.f32 %v2424, %v2424
  %v2572 = vmul.f32 %v2428, %v2428
  %v2573 = vmul.f32 %v2430, %v2430
  %v2574 = vmul.f32 %v2432, %v2432
  %v2575 = vmul.f32 %v2434, %v2434
  %v2576 = vadd.f32 %v2512, %v2514
  %v2577 = vadd.f32 %v2576, %v2516
  %v2578 = vadd.f32 %v2577, %v2518
  %v2579 = vadd.f32 %v2578, %v2520
  %v2580 = vadd.f32 %v2579, %v2522
  %v2581 = vadd.f32 %v2580, %v2524
  %v2582 = vadd.f32 %v2581, %v2526
  %v2583 = vadd.f32 %v2582, %v2528
  %v2584 = vadd.f32 %v2583, %v2530
  %v2585 = vadd.f32 %v2584, %v2532
  %v2586 = vadd.f32 %v2585, %v2534
  %v2587 = vadd.f32 %v2586, %v2536
  %v2588 = vadd.f32 %v2587, %v2538
  %v2589 = vadd.f32 %v2588, %v2540
  %v2590 = vadd.f32 %v2589, %v2542
  %v2591 = vadd.f32 %v2590, %v2544
  %v2592 = vadd.f32 %v2591, %v2546
  %v2593 = vadd.f32 %v2592, %v2548
  %v2594 = vadd.f32 %v2593, %v2550
  %v2595 = vadd.f32 %v2594, %v2552
  %v2596 = vadd.f32 %v2595, %v2554
  %v2597 = vadd.f32 %v2596, %v2556
  %v2598 = vadd.f32 %v2597, %v2558
  %v2599 = vadd.f32 %v2598, %v2560
  %v2600 = vadd.f32 %v2599, %v2562
  %v2601 = vadd.f32 %v2600, %v2564
  %v2602 = vadd.f32 %v2601, %v2566
  %v2603 = vadd.f32 %v2602, %v2568
  %v2604 = vadd.f32 %v2603, %v2570
  %v2605 = vadd.f32 %v2604, %v2572
  %v2606 = vadd.f32 %v2605, %v2574
  %v2607 = vrot.slane %v2606, 4
  %v2608 = vadd.f32 %v2606, %v2607
  %v2609 = vrot.slane %v2608, 2
  %v2610 = vadd.f32 %v2608, %v2609
  %v2611 = vrot.slane %v2610, 1
  %v2612 = vadd.f32 %v2610, %v2611
  %v2613 = vadd.f32 %v2513, %v2515
  %v2614 = vadd.f32 %v2613, %v2517
  %v2615 = vadd.f32 %v2614, %v2519
  %v2616 = vadd.f32 %v2615, %v2521
  %v2617 = vadd.f32 %v2616, %v2523
  %v2618 = vadd.f32 %v2617, %v2525
  %v2619 = vadd.f32 %v2618, %v2527
  %v2620 = vadd.f32 %v2619, %v2529
  %v2621 = vadd.f32 %v2620, %v2531
  %v2622 = vadd.f32 %v2621, %v2533
  %v2623 = vadd.f32 %v2622, %v2535
  %v2624 = vadd.f32 %v2623, %v2537
  %v2625 = vadd.f32 %v2624, %v2539
  %v2626 = vadd.f32 %v2625, %v2541
  %v2627 = vadd.f32 %v2626, %v2543
  %v2628 = vadd.f32 %v2627, %v2545
  %v2629 = vadd.f32 %v2628, %v2547
  %v2630 = vadd.f32 %v2629, %v2549
  %v2631 = vadd.f32 %v2630, %v2551
  %v2632 = vadd.f32 %v2631, %v2553
  %v2633 = vadd.f32 %v2632, %v2555
  %v2634 = vadd.f32 %v2633, %v2557
  %v2635 = vadd.f32 %v2634, %v2559
  %v2636 = vadd.f32 %v2635, %v2561
  %v2637 = vadd.f32 %v2636, %v2563
  %v2638 = vadd.f32 %v2637, %v2565
  %v2639 = vadd.f32 %v2638, %v2567
  %v2640 = vadd.f32 %v2639, %v2569
  %v2641 = vadd.f32 %v2640, %v2571
  %v2642 = vadd.f32 %v2641, %v2573
  %v2643 = vadd.f32 %v2642, %v2575
  %v2644 = vrot.slane %v2643, 4
  %v2645 = vadd.f32 %v2643, %v2644
  %v2646 = vrot.slane %v2645, 2
  %v2647 = vadd.f32 %v2645, %v2646
  %v2648 = vrot.slane %v2647, 1
  %v2649 = vadd.f32 %v2647, %v2648
  %v2650 = vmul.f32 %v2612, 0.00390625
  %v2651 = vmul.f32 %v2649, 0.00390625
  %v2652 = vmul.f32 %v2510, %v2510
  %v2653 = vmul.f32 %v2511, %v2511
  %v2654 = vsub.f32 %v2650, %v2652
  %v2655 = vsub.f32 %v2651, %v2653
  %v2656 = vld [vmem:[%s5] sm:$0x3]
  %v2657 = vadd.f32 %v2654, 1e-05
  %v2658 = vadd.f32 %v2655, 1e-05
  %v2659 = vrsqrt.pop %v2657
  %v2660 = vrsqrt.pop %v2658
  %v2663 = vcombine.low %v2659, %v2660
  %v2665 = vunpack.c.l.s4 1966171168
  %v2666 = vunpack.c.0.s8 %v2665
  %v2667 = vlaneseq
  %v2668 = vshrl.u32 %v2667, 7
  %v2669 = vsub.s32 %v2666, %v2668
  %v2670 = vrot.slane %v2663, %v2669
  %v2672 = vunpack.c.l.s4 1966171168
  %v2673 = vunpack.c.0.s8 %v2672
  %v2674 = vlaneseq
  %v2675 = vshrl.u32 %v2674, 7
  %v2676 = vsub.s32 %v2673, %v2675
  %v2677 = vrot.slane %v2670, %v2676
  %v2679 = vmul.f32 %v2656, %v2677
  %v2680 = vld [vmem:[%s6] sm:$0x3]
  %v2682 = vlaneseq
  %v2683 = vshrl.u32 %v2682, 7
  %v2684 = vsub.s32 0, %v2683
  %v2685 = vrot.slane %v2679, %v2684
  %v2686 = vlaneseq
  %v2687 = vshrl.u32 %v2686, 7
  %v2688 = vsub.s32 1, %v2687
  %v2689 = vrot.slane %v2679, %v2688
  %v2692 = vmul.f32 %v2510, %v2685
  %v2693 = vmul.f32 %v2511, %v2689
  %v2696 = vcombine.low %v2692, %v2693
  %v2698 = vunpack.c.l.s4 1966171168
  %v2699 = vunpack.c.0.s8 %v2698
  %v2700 = vlaneseq
  %v2701 = vshrl.u32 %v2700, 7
  %v2702 = vsub.s32 %v2699, %v2701
  %v2703 = vrot.slane %v2696, %v2702
  %v2705 = vunpack.c.l.s4 1966171168
  %v2706 = vunpack.c.0.s8 %v2705
  %v2707 = vlaneseq
  %v2708 = vshrl.u32 %v2707, 7
  %v2709 = vsub.s32 %v2706, %v2708
  %v2710 = vrot.slane %v2703, %v2709
  %v2712 = vsub.f32 %v2680, %v2710
  %v2713 = vmul.f32 %v2278, %v2685
  %v2714 = vmul.f32 %v2280, %v2689
  %v2715 = vmul.f32 %v2282, %v2685
  %v2716 = vmul.f32 %v2284, %v2689
  %v2717 = vmul.f32 %v2288, %v2685
  %v2718 = vmul.f32 %v2290, %v2689
  %v2719 = vmul.f32 %v2292, %v2685
  %v2720 = vmul.f32 %v2294, %v2689
  %v2721 = vmul.f32 %v2298, %v2685
  %v2722 = vmul.f32 %v2300, %v2689
  %v2723 = vmul.f32 %v2302, %v2685
  %v2724 = vmul.f32 %v2304, %v2689
  %v2725 = vmul.f32 %v2308, %v2685
  %v2726 = vmul.f32 %v2310, %v2689
  %v2727 = vmul.f32 %v2312, %v2685
  %v2728 = vmul.f32 %v2314, %v2689
  %v2729 = vmul.f32 %v2318, %v2685
  %v2730 = vmul.f32 %v2320, %v2689
  %v2731 = vmul.f32 %v2322, %v2685
  %v2732 = vmul.f32 %v2324, %v2689
  %v2733 = vmul.f32 %v2328, %v2685
  %v2734 = vmul.f32 %v2330, %v2689
  %v2735 = vmul.f32 %v2332, %v2685
  %v2736 = vmul.f32 %v2334, %v2689
  %v2737 = vmul.f32 %v2338, %v2685
  %v2738 = vmul.f32 %v2340, %v2689
  %v2739 = vmul.f32 %v2342, %v2685
  %v2740 = vmul.f32 %v2344, %v2689
  %v2741 = vmul.f32 %v2348, %v2685
  %v2742 = vmul.f32 %v2350, %v2689
  %v2743 = vmul.f32 %v2352, %v2685
  %v2744 = vmul.f32 %v2354, %v2689
  %v2745 = vmul.f32 %v2358, %v2685
  %v2746 = vmul.f32 %v2360, %v2689
  %v2747 = vmul.f32 %v2362, %v2685
  %v2748 = vmul.f32 %v2364, %v2689
  %v2749 = vmul.f32 %v2368, %v2685
  %v2750 = vmul.f32 %v2370, %v2689
  %v2751 = vmul.f32 %v2372, %v2685
  %v2752 = vmul.f32 %v2374, %v2689
  %v2753 = vmul.f32 %v2378, %v2685
  %v2754 = vmul.f32 %v2380, %v2689
  %v2755 = vmul.f32 %v2382, %v2685
  %v2756 = vmul.f32 %v2384, %v2689
  %v2757 = vmul.f32 %v2388, %v2685
  %v2758 = vmul.f32 %v2390, %v2689
  %v2759 = vmul.f32 %v2392, %v2685
  %v2760 = vmul.f32 %v2394, %v2689
  %v2761 = vmul.f32 %v2398, %v2685
  %v2762 = vmul.f32 %v2400, %v2689
  %v2763 = vmul.f32 %v2402, %v2685
  %v2764 = vmul.f32 %v2404, %v2689
  %v2765 = vmul.f32 %v2408, %v2685
  %v2766 = vmul.f32 %v2410, %v2689
  %v2767 = vmul.f32 %v2412, %v2685
  %v2768 = vmul.f32 %v2414, %v2689
  %v2769 = vmul.f32 %v2418, %v2685
  %v2770 = vmul.f32 %v2420, %v2689
  %v2771 = vmul.f32 %v2422, %v2685
  %v2772 = vmul.f32 %v2424, %v2689
  %v2773 = vmul.f32 %v2428, %v2685
  %v2774 = vmul.f32 %v2430, %v2689
  %v2775 = vmul.f32 %v2432, %v2685
  %v2776 = vmul.f32 %v2434, %v2689
  %v2778 = vlaneseq
  %v2779 = vshrl.u32 %v2778, 7
  %v2780 = vsub.s32 0, %v2779
  %v2781 = vrot.slane %v2712, %v2780
  %v2782 = vlaneseq
  %v2783 = vshrl.u32 %v2782, 7
  %v2784 = vsub.s32 1, %v2783
  %v2785 = vrot.slane %v2712, %v2784
  %v2788 = vadd.f32 %v2713, %v2781
  %v2789 = vadd.f32 %v2714, %v2785
  %v2790 = vadd.f32 %v2715, %v2781
  %v2791 = vadd.f32 %v2716, %v2785
  %v2792 = vadd.f32 %v2717, %v2781
  %v2793 = vadd.f32 %v2718, %v2785
  %v2794 = vadd.f32 %v2719, %v2781
  %v2795 = vadd.f32 %v2720, %v2785
  %v2796 = vadd.f32 %v2721, %v2781
  %v2797 = vadd.f32 %v2722, %v2785
  %v2798 = vadd.f32 %v2723, %v2781
  %v2799 = vadd.f32 %v2724, %v2785
  %v2800 = vadd.f32 %v2725, %v2781
  %v2801 = vadd.f32 %v2726, %v2785
  %v2802 = vadd.f32 %v2727, %v2781
  %v2803 = vadd.f32 %v2728, %v2785
  %v2804 = vadd.f32 %v2729, %v2781
  %v2805 = vadd.f32 %v2730, %v2785
  %v2806 = vadd.f32 %v2731, %v2781
  %v2807 = vadd.f32 %v2732, %v2785
  %v2808 = vadd.f32 %v2733, %v2781
  %v2809 = vadd.f32 %v2734, %v2785
  %v2810 = vadd.f32 %v2735, %v2781
  %v2811 = vadd.f32 %v2736, %v2785
  %v2812 = vadd.f32 %v2737, %v2781
  %v2813 = vadd.f32 %v2738, %v2785
  %v2814 = vadd.f32 %v2739, %v2781
  %v2815 = vadd.f32 %v2740, %v2785
  %v2816 = vadd.f32 %v2741, %v2781
  %v2817 = vadd.f32 %v2742, %v2785
  %v2818 = vadd.f32 %v2743, %v2781
  %v2819 = vadd.f32 %v2744, %v2785
  %v2820 = vadd.f32 %v2745, %v2781
  %v2821 = vadd.f32 %v2746, %v2785
  %v2822 = vadd.f32 %v2747, %v2781
  %v2823 = vadd.f32 %v2748, %v2785
  %v2824 = vadd.f32 %v2749, %v2781
  %v2825 = vadd.f32 %v2750, %v2785
  %v2826 = vadd.f32 %v2751, %v2781
  %v2827 = vadd.f32 %v2752, %v2785
  %v2828 = vadd.f32 %v2753, %v2781
  %v2829 = vadd.f32 %v2754, %v2785
  %v2830 = vadd.f32 %v2755, %v2781
  %v2831 = vadd.f32 %v2756, %v2785
  %v2832 = vadd.f32 %v2757, %v2781
  %v2833 = vadd.f32 %v2758, %v2785
  %v2834 = vadd.f32 %v2759, %v2781
  %v2835 = vadd.f32 %v2760, %v2785
  %v2836 = vadd.f32 %v2761, %v2781
  %v2837 = vadd.f32 %v2762, %v2785
  %v2838 = vadd.f32 %v2763, %v2781
  %v2839 = vadd.f32 %v2764, %v2785
  %v2840 = vadd.f32 %v2765, %v2781
  %v2841 = vadd.f32 %v2766, %v2785
  %v2842 = vadd.f32 %v2767, %v2781
  %v2843 = vadd.f32 %v2768, %v2785
  %v2844 = vadd.f32 %v2769, %v2781
  %v2845 = vadd.f32 %v2770, %v2785
  %v2846 = vadd.f32 %v2771, %v2781
  %v2847 = vadd.f32 %v2772, %v2785
  %v2848 = vadd.f32 %v2773, %v2781
  %v2849 = vadd.f32 %v2774, %v2785
  %v2850 = vadd.f32 %v2775, %v2781
  %v2851 = vadd.f32 %v2776, %v2785
  %v2852 = vmax.f32 %v2788, 0.0
  %v2853 = vmax.f32 %v2789, 0.0
  %v2854 = vmax.f32 %v2790, 0.0
  %v2855 = vmax.f32 %v2791, 0.0
  %v2856 = vmax.f32 %v2792, 0.0
  %v2857 = vmax.f32 %v2793, 0.0
  %v2858 = vmax.f32 %v2794, 0.0
  %v2859 = vmax.f32 %v2795, 0.0
  %v2860 = vmax.f32 %v2796, 0.0
  %v2861 = vmax.f32 %v2797, 0.0
  %v2862 = vmax.f32 %v2798, 0.0
  %v2863 = vmax.f32 %v2799, 0.0
  %v2864 = vmax.f32 %v2800, 0.0
  %v2865 = vmax.f32 %v2801, 0.0
  %v2866 = vmax.f32 %v2802, 0.0
  %v2867 = vmax.f32 %v2803, 0.0
  %v2868 = vmax.f32 %v2804, 0.0
  %v2869 = vmax.f32 %v2805, 0.0
  %v2870 = vmax.f32 %v2806, 0.0
  %v2871 = vmax.f32 %v2807, 0.0
  %v2872 = vmax.f32 %v2808, 0.0
  %v2873 = vmax.f32 %v2809, 0.0
  %v2874 = vmax.f32 %v2810, 0.0
  %v2875 = vmax.f32 %v2811, 0.0
  %v2876 = vmax.f32 %v2812, 0.0
  %v2877 = vmax.f32 %v2813, 0.0
  %v2878 = vmax.f32 %v2814, 0.0
  %v2879 = vmax.f32 %v2815, 0.0
  %v2880 = vmax.f32 %v2816, 0.0
  %v2881 = vmax.f32 %v2817, 0.0
  %v2882 = vmax.f32 %v2818, 0.0
  %v2883 = vmax.f32 %v2819, 0.0
  %v2884 = vmax.f32 %v2820, 0.0
  %v2885 = vmax.f32 %v2821, 0.0
  %v2886 = vmax.f32 %v2822, 0.0
  %v2887 = vmax.f32 %v2823, 0.0
  %v2888 = vmax.f32 %v2824, 0.0
  %v2889 = vmax.f32 %v2825, 0.0
  %v2890 = vmax.f32 %v2826, 0.0
  %v2891 = vmax.f32 %v2827, 0.0
  %v2892 = vmax.f32 %v2828, 0.0
  %v2893 = vmax.f32 %v2829, 0.0
  %v2894 = vmax.f32 %v2830, 0.0
  %v2895 = vmax.f32 %v2831, 0.0
  %v2896 = vmax.f32 %v2832, 0.0
  %v2897 = vmax.f32 %v2833, 0.0
  %v2898 = vmax.f32 %v2834, 0.0
  %v2899 = vmax.f32 %v2835, 0.0
  %v2900 = vmax.f32 %v2836, 0.0
  %v2901 = vmax.f32 %v2837, 0.0
  %v2902 = vmax.f32 %v2838, 0.0
  %v2903 = vmax.f32 %v2839, 0.0
  %v2904 = vmax.f32 %v2840, 0.0
  %v2905 = vmax.f32 %v2841, 0.0
  %v2906 = vmax.f32 %v2842, 0.0
  %v2907 = vmax.f32 %v2843, 0.0
  %v2908 = vmax.f32 %v2844, 0.0
  %v2909 = vmax.f32 %v2845, 0.0
  %v2910 = vmax.f32 %v2846, 0.0
  %v2911 = vmax.f32 %v2847, 0.0
  %v2912 = vmax.f32 %v2848, 0.0
  %v2913 = vmax.f32 %v2849, 0.0
  %v2914 = vmax.f32 %v2850, 0.0
  %v2915 = vmax.f32 %v2851, 0.0
  %v2916 = vpack.c.bf16 %v2854, %v2852
  %v2917 = vpack.c.bf16 %v2855, %v2853
  %v2918 = vpack.c.bf16 %v2858, %v2856
  %v2919 = vpack.c.bf16 %v2859, %v2857
  %v2920 = vpack.c.bf16 %v2862, %v2860
  %v2921 = vpack.c.bf16 %v2863, %v2861
  %v2922 = vpack.c.bf16 %v2866, %v2864
  %v2923 = vpack.c.bf16 %v2867, %v2865
  %v2924 = vpack.c.bf16 %v2870, %v2868
  %v2925 = vpack.c.bf16 %v2871, %v2869
  %v2926 = vpack.c.bf16 %v2874, %v2872
  %v2927 = vpack.c.bf16 %v2875, %v2873
  %v2928 = vpack.c.bf16 %v2878, %v2876
  %v2929 = vpack.c.bf16 %v2879, %v2877
  %v2930 = vpack.c.bf16 %v2882, %v2880
  %v2931 = vpack.c.bf16 %v2883, %v2881
  %v2932 = vpack.c.bf16 %v2886, %v2884
  %v2933 = vpack.c.bf16 %v2887, %v2885
  %v2934 = vpack.c.bf16 %v2890, %v2888
  %v2935 = vpack.c.bf16 %v2891, %v2889
  %v2936 = vpack.c.bf16 %v2894, %v2892
  %v2937 = vpack.c.bf16 %v2895, %v2893
  %v2938 = vpack.c.bf16 %v2898, %v2896
  %v2939 = vpack.c.bf16 %v2899, %v2897
  %v2940 = vpack.c.bf16 %v2902, %v2900
  %v2941 = vpack.c.bf16 %v2903, %v2901
  %v2942 = vpack.c.bf16 %v2906, %v2904
  %v2943 = vpack.c.bf16 %v2907, %v2905
  %v2944 = vpack.c.bf16 %v2910, %v2908
  %v2945 = vpack.c.bf16 %v2911, %v2909
  %v2946 = vpack.c.bf16 %v2914, %v2912
  %v2947 = vpack.c.bf16 %v2915, %v2913
  %v2948 = vld [vmem:[%s7] sm:$0xf]
  %v2949 = vld [vmem:[%s7 + $0x4] sm:$0xf]
  %v2950 = vld [vmem:[%s7 + $0x8] sm:$0xf]
  %v2951 = vld [vmem:[%s7 + $0xc] sm:$0xf]
  %v2952 = vld [vmem:[%s7 + $0x10] sm:$0xf]
  %v2953 = vld [vmem:[%s7 + $0x14] sm:$0xf]
  %v2954 = vld [vmem:[%s7 + $0x18] sm:$0xf]
  %v2955 = vld [vmem:[%s7 + $0x1c] sm:$0xf]
  %v2956 = vld [vmem:[%s7 + $0x20] sm:$0xf]
  %v2957 = vld [vmem:[%s7 + $0x24] sm:$0xf]
  %v2958 = vld [vmem:[%s7 + $0x28] sm:$0xf]
  %v2959 = vld [vmem:[%s7 + $0x2c] sm:$0xf]
  %v2960 = vld [vmem:[%s7 + $0x30] sm:$0xf]
  %v2961 = vld [vmem:[%s7 + $0x34] sm:$0xf]
  %v2962 = vld [vmem:[%s7 + $0x38] sm:$0xf]
  %v2963 = vld [vmem:[%s7 + $0x3c] sm:$0xf]
  %v2964 = vld [vmem:[%s7 + $0x40] sm:$0xf]
  %v2965 = vld [vmem:[%s7 + $0x44] sm:$0xf]
  %v2966 = vld [vmem:[%s7 + $0x48] sm:$0xf]
  %v2967 = vld [vmem:[%s7 + $0x4c] sm:$0xf]
  %v2968 = vld [vmem:[%s7 + $0x50] sm:$0xf]
  %v2969 = vld [vmem:[%s7 + $0x54] sm:$0xf]
  %v2970 = vld [vmem:[%s7 + $0x58] sm:$0xf]
  %v2971 = vld [vmem:[%s7 + $0x5c] sm:$0xf]
  %v2972 = vld [vmem:[%s7 + $0x60] sm:$0xf]
  %v2973 = vld [vmem:[%s7 + $0x64] sm:$0xf]
  %v2974 = vld [vmem:[%s7 + $0x68] sm:$0xf]
  %v2975 = vld [vmem:[%s7 + $0x6c] sm:$0xf]
  %v2976 = vld [vmem:[%s7 + $0x70] sm:$0xf]
  %v2977 = vld [vmem:[%s7 + $0x74] sm:$0xf]
  %v2978 = vld [vmem:[%s7 + $0x78] sm:$0xf]
  %v2979 = vld [vmem:[%s7 + $0x7c] sm:$0xf]
  %v3012 = vunpack.c.l.b16 %v2948
  %v3013 = vunpack.c.l.b16 %v2949
  %v3014 = vunpack.c.l.b16 %v2950
  %v3015 = vunpack.c.l.b16 %v2951
  %v3016 = vunpack.c.l.b16 %v2952
  %v3017 = vunpack.c.l.b16 %v2953
  %v3018 = vunpack.c.l.b16 %v2954
  %v3019 = vunpack.c.l.b16 %v2955
  %v3020 = vunpack.c.l.b16 %v2956
  %v3021 = vunpack.c.l.b16 %v2957
  %v3022 = vunpack.c.l.b16 %v2958
  %v3023 = vunpack.c.l.b16 %v2959
  %v3024 = vunpack.c.l.b16 %v2960
  %v3025 = vunpack.c.l.b16 %v2961
  %v3026 = vunpack.c.l.b16 %v2962
  %v3027 = vunpack.c.l.b16 %v2963
  %v3028 = vunpack.c.l.b16 %v2964
  %v3029 = vunpack.c.l.b16 %v2965
  %v3030 = vunpack.c.l.b16 %v2966
  %v3031 = vunpack.c.l.b16 %v2967
  %v3032 = vunpack.c.l.b16 %v2968
  %v3033 = vunpack.c.l.b16 %v2969
  %v3034 = vunpack.c.l.b16 %v2970
  %v3035 = vunpack.c.l.b16 %v2971
  %v3036 = vunpack.c.l.b16 %v2972
  %v3037 = vunpack.c.l.b16 %v2973
  %v3038 = vunpack.c.l.b16 %v2974
  %v3039 = vunpack.c.l.b16 %v2975
  %v3040 = vunpack.c.l.b16 %v2976
  %v3041 = vunpack.c.l.b16 %v2977
  %v3042 = vunpack.c.l.b16 %v2978
  %v3043 = vunpack.c.l.b16 %v2979
  %v3044 = vpack.c.b16 %v3013, %v3012
  %v3045 = vpack.c.b16 %v3015, %v3014
  %v3046 = vpack.c.b16 %v3017, %v3016
  %v3047 = vpack.c.b16 %v3019, %v3018
  %v3048 = vpack.c.b16 %v3021, %v3020
  %v3049 = vpack.c.b16 %v3023, %v3022
  %v3050 = vpack.c.b16 %v3025, %v3024
  %v3051 = vpack.c.b16 %v3027, %v3026
  %v3052 = vpack.c.b16 %v3029, %v3028
  %v3053 = vpack.c.b16 %v3031, %v3030
  %v3054 = vpack.c.b16 %v3033, %v3032
  %v3055 = vpack.c.b16 %v3035, %v3034
  %v3056 = vpack.c.b16 %v3037, %v3036
  %v3057 = vpack.c.b16 %v3039, %v3038
  %v3058 = vpack.c.b16 %v3041, %v3040
  %v3059 = vpack.c.b16 %v3043, %v3042
  %3076 = vmatprep.subr.bf16.mxu0 0
  %3077 = vmatpush1.bf16.msra.mxu0 %v3051
  %3078 = vmatprep.subr.bf16.mxu0 0
  %3079 = vmatpush1.bf16.msra.mxu0 %v3050
  %3080 = vmatprep.subr.bf16.mxu0 0
  %3081 = vmatpush1.bf16.msra.mxu0 %v3049
  %3082 = vmatprep.subr.bf16.mxu0 0
  %3083 = vmatpush1.bf16.msra.mxu0 %v3048
  %3084 = vmatprep.subr.bf16.mxu0 0
  %3085 = vmatpush1.bf16.msra.mxu0 %v3047
  %3086 = vmatprep.subr.bf16.mxu0 0
  %3087 = vmatpush1.bf16.msra.mxu0 %v3046
  %3088 = vmatprep.subr.bf16.mxu0 0
  %3089 = vmatpush1.bf16.msra.mxu0 %v3045
  %3090 = vmatprep.subr.bf16.mxu0 0
  %3091 = vmatpush1.bf16.msra.mxu0 %v3044
  %3092 = vmatprep.subr.bf16.mxu0 0
  %3093 = vmatpush2.bf16.msra.mxu0 %v3059
  %3094 = vmatprep.subr.bf16.mxu0 0
  %3095 = vmatpush2.bf16.msra.mxu0 %v3058
  %3096 = vmatprep.subr.bf16.mxu0 0
  %3097 = vmatpush2.bf16.msra.mxu0 %v3057
  %3098 = vmatprep.subr.bf16.mxu0 0
  %3099 = vmatpush2.bf16.msra.mxu0 %v3056
  %3100 = vmatprep.subr.bf16.mxu0 0
  %3101 = vmatpush2.bf16.msra.mxu0 %v3055
  %3102 = vmatprep.subr.bf16.mxu0 0
  %3103 = vmatpush2.bf16.msra.mxu0 %v3054
  %3104 = vmatprep.subr.bf16.mxu0 0
  %3105 = vmatpush2.bf16.msra.mxu0 %v3053
  %3106 = vmatprep.subr.bf16.mxu0 0
  %3107 = vmatpush2.bf16.msra.mxu0 %v3052
  %3108 = vmatprep.mubr.bf16.mxu0 %v2917
  %3109 = vmatmul.mubr.bf16.gmra.mxu0 %v2916
  %v3110 = vpop.f32.mrf.mxu0
  %v3111 = vadd.f32 0.0, %v3110
  %v3112 = vpop.f32.mrf.mxu0
  %v3113 = vpop.f32.mrf.mxu0
  %v3114 = vadd.f32 0.0, %v3113
  %v3115 = vpop.f32.mrf.mxu0
  %3116 = vmatprep.mubr.bf16.mxu0 %v2919
  %3117 = vmatmul.mubr.bf16.gmra.mxu0 %v2918
  %v3118 = vpop.f32.mrf.mxu0
  %v3119 = vadd.f32 0.0, %v3118
  %v3120 = vpop.f32.mrf.mxu0
  %v3121 = vpop.f32.mrf.mxu0
  %v3122 = vadd.f32 0.0, %v3121
  %v3123 = vpop.f32.mrf.mxu0
  %3124 = vmatprep.mubr.bf16.mxu0 %v2921
  %3125 = vmatmul.mubr.bf16.gmra.mxu0 %v2920
  %v3126 = vpop.f32.mrf.mxu0
  %v3127 = vadd.f32 0.0, %v3126
  %v3128 = vpop.f32.mrf.mxu0
  %v3129 = vpop.f32.mrf.mxu0
  %v3130 = vadd.f32 0.0, %v3129
  %v3131 = vpop.f32.mrf.mxu0
  %3132 = vmatprep.mubr.bf16.mxu0 %v2923
  %3133 = vmatmul.mubr.bf16.gmra.mxu0 %v2922
  %v3134 = vpop.f32.mrf.mxu0
  %v3135 = vadd.f32 0.0, %v3134
  %v3136 = vpop.f32.mrf.mxu0
  %v3137 = vpop.f32.mrf.mxu0
  %v3138 = vadd.f32 0.0, %v3137
  %v3139 = vpop.f32.mrf.mxu0
  %3140 = vmatprep.mubr.bf16.mxu0 %v2925
  %3141 = vmatmul.mubr.bf16.gmra.mxu0 %v2924
  %v3142 = vpop.f32.mrf.mxu0
  %v3143 = vadd.f32 0.0, %v3142
  %v3144 = vpop.f32.mrf.mxu0
  %v3145 = vpop.f32.mrf.mxu0
  %v3146 = vadd.f32 0.0, %v3145
  %v3147 = vpop.f32.mrf.mxu0
  %3148 = vmatprep.mubr.bf16.mxu0 %v2927
  %3149 = vmatmul.mubr.bf16.gmra.mxu0 %v2926
  %v3150 = vpop.f32.mrf.mxu0
  %v3151 = vadd.f32 0.0, %v3150
  %v3152 = vpop.f32.mrf.mxu0
  %v3153 = vpop.f32.mrf.mxu0
  %v3154 = vadd.f32 0.0, %v3153
  %v3155 = vpop.f32.mrf.mxu0
  %3156 = vmatprep.mubr.bf16.mxu0 %v2929
  %3157 = vmatmul.mubr.bf16.gmra.mxu0 %v2928
  %v3158 = vpop.f32.mrf.mxu0
  %v3159 = vadd.f32 0.0, %v3158
  %v3160 = vpop.f32.mrf.mxu0
  %v3161 = vpop.f32.mrf.mxu0
  %v3162 = vadd.f32 0.0, %v3161
  %v3163 = vpop.f32.mrf.mxu0
  %3164 = vmatprep.mubr.bf16.mxu0 %v2931
  %3165 = vmatmul.mubr.bf16.gmra.mxu0 %v2930
  %v3166 = vpop.f32.mrf.mxu0
  %v3167 = vadd.f32 0.0, %v3166
  %v3168 = vpop.f32.mrf.mxu0
  %v3169 = vpop.f32.mrf.mxu0
  %v3170 = vadd.f32 0.0, %v3169
  %v3171 = vpop.f32.mrf.mxu0
  %3172 = vmatprep.mubr.bf16.mxu0 %v2933
  %3173 = vmatmul.mubr.bf16.gmra.mxu0 %v2932
  %v3174 = vpop.f32.mrf.mxu0
  %v3175 = vadd.f32 0.0, %v3174
  %v3176 = vpop.f32.mrf.mxu0
  %v3177 = vpop.f32.mrf.mxu0
  %v3178 = vadd.f32 0.0, %v3177
  %v3179 = vpop.f32.mrf.mxu0
  %3180 = vmatprep.mubr.bf16.mxu0 %v2935
  %3181 = vmatmul.mubr.bf16.gmra.mxu0 %v2934
  %v3182 = vpop.f32.mrf.mxu0
  %v3183 = vadd.f32 0.0, %v3182
  %v3184 = vpop.f32.mrf.mxu0
  %v3185 = vpop.f32.mrf.mxu0
  %v3186 = vadd.f32 0.0, %v3185
  %v3187 = vpop.f32.mrf.mxu0
  %3188 = vmatprep.mubr.bf16.mxu0 %v2937
  %3189 = vmatmul.mubr.bf16.gmra.mxu0 %v2936
  %v3190 = vpop.f32.mrf.mxu0
  %v3191 = vadd.f32 0.0, %v3190
  %v3192 = vpop.f32.mrf.mxu0
  %v3193 = vpop.f32.mrf.mxu0
  %v3194 = vadd.f32 0.0, %v3193
  %v3195 = vpop.f32.mrf.mxu0
  %3196 = vmatprep.mubr.bf16.mxu0 %v2939
  %3197 = vmatmul.mubr.bf16.gmra.mxu0 %v2938
  %v3198 = vpop.f32.mrf.mxu0
  %v3199 = vadd.f32 0.0, %v3198
  %v3200 = vpop.f32.mrf.mxu0
  %v3201 = vpop.f32.mrf.mxu0
  %v3202 = vadd.f32 0.0, %v3201
  %v3203 = vpop.f32.mrf.mxu0
  %3204 = vmatprep.mubr.bf16.mxu0 %v2941
  %3205 = vmatmul.mubr.bf16.gmra.mxu0 %v2940
  %v3206 = vpop.f32.mrf.mxu0
  %v3207 = vadd.f32 0.0, %v3206
  %v3208 = vpop.f32.mrf.mxu0
  %v3209 = vpop.f32.mrf.mxu0
  %v3210 = vadd.f32 0.0, %v3209
  %v3211 = vpop.f32.mrf.mxu0
  %3212 = vmatprep.mubr.bf16.mxu0 %v2943
  %3213 = vmatmul.mubr.bf16.gmra.mxu0 %v2942
  %v3214 = vpop.f32.mrf.mxu0
  %v3215 = vadd.f32 0.0, %v3214
  %v3216 = vpop.f32.mrf.mxu0
  %v3217 = vpop.f32.mrf.mxu0
  %v3218 = vadd.f32 0.0, %v3217
  %v3219 = vpop.f32.mrf.mxu0
  %3220 = vmatprep.mubr.bf16.mxu0 %v2945
  %3221 = vmatmul.mubr.bf16.gmra.mxu0 %v2944
  %v3222 = vpop.f32.mrf.mxu0
  %v3223 = vadd.f32 0.0, %v3222
  %v3224 = vpop.f32.mrf.mxu0
  %v3225 = vpop.f32.mrf.mxu0
  %v3226 = vadd.f32 0.0, %v3225
  %v3227 = vpop.f32.mrf.mxu0
  %3228 = vmatprep.mubr.bf16.mxu0 %v2947
  %3229 = vmatmul.mubr.bf16.gmra.mxu0 %v2946
  %v3230 = vpop.f32.mrf.mxu0
  %v3231 = vadd.f32 0.0, %v3230
  %v3232 = vpop.f32.mrf.mxu0
  %v3233 = vpop.f32.mrf.mxu0
  %v3234 = vadd.f32 0.0, %v3233
  %v3235 = vpop.f32.mrf.mxu0
  %3236 = vdwg.mxu0
  %vm3237 = vcmask 523264
  %v3238 = vsel %vm3237, %v3111, 0.0
  %v3239 = vsel %vm3237, %v3114, 0.0
  %v3240 = vadd.f32 %v3238, %v3239
  %v3241 = vsel %vm3237, %v3119, 0.0
  %v3242 = vadd.f32 %v3240, %v3241
  %v3243 = vsel %vm3237, %v3122, 0.0
  %v3244 = vadd.f32 %v3242, %v3243
  %v3245 = vsel %vm3237, %v3127, 0.0
  %v3246 = vadd.f32 %v3244, %v3245
  %v3247 = vsel %vm3237, %v3130, 0.0
  %v3248 = vadd.f32 %v3246, %v3247
  %v3249 = vsel %vm3237, %v3135, 0.0
  %v3250 = vadd.f32 %v3248, %v3249
  %v3251 = vsel %vm3237, %v3138, 0.0
  %v3252 = vadd.f32 %v3250, %v3251
  %v3253 = vsel %vm3237, %v3143, 0.0
  %v3254 = vadd.f32 %v3252, %v3253
  %v3255 = vsel %vm3237, %v3146, 0.0
  %v3256 = vadd.f32 %v3254, %v3255
  %v3257 = vsel %vm3237, %v3151, 0.0
  %v3258 = vadd.f32 %v3256, %v3257
  %v3259 = vsel %vm3237, %v3154, 0.0
  %v3260 = vadd.f32 %v3258, %v3259
  %v3261 = vsel %vm3237, %v3159, 0.0
  %v3262 = vadd.f32 %v3260, %v3261
  %v3263 = vsel %vm3237, %v3162, 0.0
  %v3264 = vadd.f32 %v3262, %v3263
  %v3265 = vsel %vm3237, %v3167, 0.0
  %v3266 = vadd.f32 %v3264, %v3265
  %v3267 = vsel %vm3237, %v3170, 0.0
  %v3268 = vadd.f32 %v3266, %v3267
  %v3269 = vsel %vm3237, %v3175, 0.0
  %v3270 = vadd.f32 %v3268, %v3269
  %v3271 = vsel %vm3237, %v3178, 0.0
  %v3272 = vadd.f32 %v3270, %v3271
  %v3273 = vsel %vm3237, %v3183, 0.0
  %v3274 = vadd.f32 %v3272, %v3273
  %v3275 = vsel %vm3237, %v3186, 0.0
  %v3276 = vadd.f32 %v3274, %v3275
  %v3277 = vsel %vm3237, %v3191, 0.0
  %v3278 = vadd.f32 %v3276, %v3277
  %v3279 = vsel %vm3237, %v3194, 0.0
  %v3280 = vadd.f32 %v3278, %v3279
  %v3281 = vsel %vm3237, %v3199, 0.0
  %v3282 = vadd.f32 %v3280, %v3281
  %v3283 = vsel %vm3237, %v3202, 0.0
  %v3284 = vadd.f32 %v3282, %v3283
  %v3285 = vsel %vm3237, %v3207, 0.0
  %v3286 = vadd.f32 %v3284, %v3285
  %v3287 = vsel %vm3237, %v3210, 0.0
  %v3288 = vadd.f32 %v3286, %v3287
  %v3289 = vsel %vm3237, %v3215, 0.0
  %v3290 = vadd.f32 %v3288, %v3289
  %v3291 = vsel %vm3237, %v3218, 0.0
  %v3292 = vadd.f32 %v3290, %v3291
  %v3293 = vsel %vm3237, %v3223, 0.0
  %v3294 = vadd.f32 %v3292, %v3293
  %v3295 = vsel %vm3237, %v3226, 0.0
  %v3296 = vadd.f32 %v3294, %v3295
  %v3297 = vsel %vm3237, %v3231, 0.0
  %v3298 = vadd.f32 %v3296, %v3297
  %v3299 = vsel %vm3237, %v3234, 0.0
  %v3300 = vadd.f32 %v3298, %v3299
  %v3301 = vrot.slane %v3300, 4
  %v3302 = vadd.f32 %v3300, %v3301
  %v3303 = vrot.slane %v3302, 2
  %v3304 = vadd.f32 %v3302, %v3303
  %v3305 = vrot.slane %v3304, 1
  %v3306 = vadd.f32 %v3304, %v3305
  %v3307 = vmul.f32 %v3306, 0.00390625
  %v3308 = vmul.f32 %v3111, %v3111
  %v3309 = vmul.f32 %v3114, %v3114
  %v3310 = vmul.f32 %v3119, %v3119
  %v3311 = vmul.f32 %v3122, %v3122
  %v3312 = vmul.f32 %v3127, %v3127
  %v3313 = vmul.f32 %v3130, %v3130
  %v3314 = vmul.f32 %v3135, %v3135
  %v3315 = vmul.f32 %v3138, %v3138
  %v3316 = vmul.f32 %v3143, %v3143
  %v3317 = vmul.f32 %v3146, %v3146
  %v3318 = vmul.f32 %v3151, %v3151
  %v3319 = vmul.f32 %v3154, %v3154
  %v3320 = vmul.f32 %v3159, %v3159
  %v3321 = vmul.f32 %v3162, %v3162
  %v3322 = vmul.f32 %v3167, %v3167
  %v3323 = vmul.f32 %v3170, %v3170
  %v3324 = vmul.f32 %v3175, %v3175
  %v3325 = vmul.f32 %v3178, %v3178
  %v3326 = vmul.f32 %v3183, %v3183
  %v3327 = vmul.f32 %v3186, %v3186
  %v3328 = vmul.f32 %v3191, %v3191
  %v3329 = vmul.f32 %v3194, %v3194
  %v3330 = vmul.f32 %v3199, %v3199
  %v3331 = vmul.f32 %v3202, %v3202
  %v3332 = vmul.f32 %v3207, %v3207
  %v3333 = vmul.f32 %v3210, %v3210
  %v3334 = vmul.f32 %v3215, %v3215
  %v3335 = vmul.f32 %v3218, %v3218
  %v3336 = vmul.f32 %v3223, %v3223
  %v3337 = vmul.f32 %v3226, %v3226
  %v3338 = vmul.f32 %v3231, %v3231
  %v3339 = vmul.f32 %v3234, %v3234
  %v3340 = vsel %vm3237, %v3308, 0.0
  %v3341 = vsel %vm3237, %v3309, 0.0
  %v3342 = vadd.f32 %v3340, %v3341
  %v3343 = vsel %vm3237, %v3310, 0.0
  %v3344 = vadd.f32 %v3342, %v3343
  %v3345 = vsel %vm3237, %v3311, 0.0
  %v3346 = vadd.f32 %v3344, %v3345
  %v3347 = vsel %vm3237, %v3312, 0.0
  %v3348 = vadd.f32 %v3346, %v3347
  %v3349 = vsel %vm3237, %v3313, 0.0
  %v3350 = vadd.f32 %v3348, %v3349
  %v3351 = vsel %vm3237, %v3314, 0.0
  %v3352 = vadd.f32 %v3350, %v3351
  %v3353 = vsel %vm3237, %v3315, 0.0
  %v3354 = vadd.f32 %v3352, %v3353
  %v3355 = vsel %vm3237, %v3316, 0.0
  %v3356 = vadd.f32 %v3354, %v3355
  %v3357 = vsel %vm3237, %v3317, 0.0
  %v3358 = vadd.f32 %v3356, %v3357
  %v3359 = vsel %vm3237, %v3318, 0.0
  %v3360 = vadd.f32 %v3358, %v3359
  %v3361 = vsel %vm3237, %v3319, 0.0
  %v3362 = vadd.f32 %v3360, %v3361
  %v3363 = vsel %vm3237, %v3320, 0.0
  %v3364 = vadd.f32 %v3362, %v3363
  %v3365 = vsel %vm3237, %v3321, 0.0
  %v3366 = vadd.f32 %v3364, %v3365
  %v3367 = vsel %vm3237, %v3322, 0.0
  %v3368 = vadd.f32 %v3366, %v3367
  %v3369 = vsel %vm3237, %v3323, 0.0
  %v3370 = vadd.f32 %v3368, %v3369
  %v3371 = vsel %vm3237, %v3324, 0.0
  %v3372 = vadd.f32 %v3370, %v3371
  %v3373 = vsel %vm3237, %v3325, 0.0
  %v3374 = vadd.f32 %v3372, %v3373
  %v3375 = vsel %vm3237, %v3326, 0.0
  %v3376 = vadd.f32 %v3374, %v3375
  %v3377 = vsel %vm3237, %v3327, 0.0
  %v3378 = vadd.f32 %v3376, %v3377
  %v3379 = vsel %vm3237, %v3328, 0.0
  %v3380 = vadd.f32 %v3378, %v3379
  %v3381 = vsel %vm3237, %v3329, 0.0
  %v3382 = vadd.f32 %v3380, %v3381
  %v3383 = vsel %vm3237, %v3330, 0.0
  %v3384 = vadd.f32 %v3382, %v3383
  %v3385 = vsel %vm3237, %v3331, 0.0
  %v3386 = vadd.f32 %v3384, %v3385
  %v3387 = vsel %vm3237, %v3332, 0.0
  %v3388 = vadd.f32 %v3386, %v3387
  %v3389 = vsel %vm3237, %v3333, 0.0
  %v3390 = vadd.f32 %v3388, %v3389
  %v3391 = vsel %vm3237, %v3334, 0.0
  %v3392 = vadd.f32 %v3390, %v3391
  %v3393 = vsel %vm3237, %v3335, 0.0
  %v3394 = vadd.f32 %v3392, %v3393
  %v3395 = vsel %vm3237, %v3336, 0.0
  %v3396 = vadd.f32 %v3394, %v3395
  %v3397 = vsel %vm3237, %v3337, 0.0
  %v3398 = vadd.f32 %v3396, %v3397
  %v3399 = vsel %vm3237, %v3338, 0.0
  %v3400 = vadd.f32 %v3398, %v3399
  %v3401 = vsel %vm3237, %v3339, 0.0
  %v3402 = vadd.f32 %v3400, %v3401
  %v3403 = vrot.slane %v3402, 4
  %v3404 = vadd.f32 %v3402, %v3403
  %v3405 = vrot.slane %v3404, 2
  %v3406 = vadd.f32 %v3404, %v3405
  %v3407 = vrot.slane %v3406, 1
  %v3408 = vadd.f32 %v3406, %v3407
  %v3409 = vmul.f32 %v3408, 0.00390625
  %v3410 = vmul.f32 %v3307, %v3307
  %v3411 = vsub.f32 %v3409, %v3410
  %v3412 = vld [vmem:[%s8] sm:$0x1]
  %v3413 = vadd.f32 %v3411, 1e-05
  %v3414 = vrsqrt.pop %v3413
  %v3415 = vmul.f32 %v3412, %v3414
  %v3416 = vld [vmem:[%s9] sm:$0x1]
  %v3417 = vmul.f32 %v3307, %v3415
  %v3418 = vsub.f32 %v3416, %v3417
  %v3420 = vlaneseq
  %v3421 = vshrl.u32 %v3420, 7
  %v3422 = vsub.s32 0, %v3421
  %v3423 = vrot.slane %v3415, %v3422
  %v3425 = vmul.f32 %v3111, %v3423
  %v3426 = vmul.f32 %v3114, %v3423
  %v3427 = vmul.f32 %v3119, %v3423
  %v3428 = vmul.f32 %v3122, %v3423
  %v3429 = vmul.f32 %v3127, %v3423
  %v3430 = vmul.f32 %v3130, %v3423
  %v3431 = vmul.f32 %v3135, %v3423
  %v3432 = vmul.f32 %v3138, %v3423
  %v3433 = vmul.f32 %v3143, %v3423
  %v3434 = vmul.f32 %v3146, %v3423
  %v3435 = vmul.f32 %v3151, %v3423
  %v3436 = vmul.f32 %v3154, %v3423
  %v3437 = vmul.f32 %v3159, %v3423
  %v3438 = vmul.f32 %v3162, %v3423
  %v3439 = vmul.f32 %v3167, %v3423
  %v3440 = vmul.f32 %v3170, %v3423
  %v3441 = vmul.f32 %v3175, %v3423
  %v3442 = vmul.f32 %v3178, %v3423
  %v3443 = vmul.f32 %v3183, %v3423
  %v3444 = vmul.f32 %v3186, %v3423
  %v3445 = vmul.f32 %v3191, %v3423
  %v3446 = vmul.f32 %v3194, %v3423
  %v3447 = vmul.f32 %v3199, %v3423
  %v3448 = vmul.f32 %v3202, %v3423
  %v3449 = vmul.f32 %v3207, %v3423
  %v3450 = vmul.f32 %v3210, %v3423
  %v3451 = vmul.f32 %v3215, %v3423
  %v3452 = vmul.f32 %v3218, %v3423
  %v3453 = vmul.f32 %v3223, %v3423
  %v3454 = vmul.f32 %v3226, %v3423
  %v3455 = vmul.f32 %v3231, %v3423
  %v3456 = vmul.f32 %v3234, %v3423
  %v3458 = vlaneseq
  %v3459 = vshrl.u32 %v3458, 7
  %v3460 = vsub.s32 0, %v3459
  %v3461 = vrot.slane %v3418, %v3460
  %v3463 = vadd.f32 %v3425, %v3461
  %v3464 = vadd.f32 %v3426, %v3461
  %v3465 = vadd.f32 %v3427, %v3461
  %v3466 = vadd.f32 %v3428, %v3461
  %v3467 = vadd.f32 %v3429, %v3461
  %v3468 = vadd.f32 %v3430, %v3461
  %v3469 = vadd.f32 %v3431, %v3461
  %v3470 = vadd.f32 %v3432, %v3461
  %v3471 = vadd.f32 %v3433, %v3461
  %v3472 = vadd.f32 %v3434, %v3461
  %v3473 = vadd.f32 %v3435, %v3461
  %v3474 = vadd.f32 %v3436, %v3461
  %v3475 = vadd.f32 %v3437, %v3461
  %v3476 = vadd.f32 %v3438, %v3461
  %v3477 = vadd.f32 %v3439, %v3461
  %v3478 = vadd.f32 %v3440, %v3461
  %v3479 = vadd.f32 %v3441, %v3461
  %v3480 = vadd.f32 %v3442, %v3461
  %v3481 = vadd.f32 %v3443, %v3461
  %v3482 = vadd.f32 %v3444, %v3461
  %v3483 = vadd.f32 %v3445, %v3461
  %v3484 = vadd.f32 %v3446, %v3461
  %v3485 = vadd.f32 %v3447, %v3461
  %v3486 = vadd.f32 %v3448, %v3461
  %v3487 = vadd.f32 %v3449, %v3461
  %v3488 = vadd.f32 %v3450, %v3461
  %v3489 = vadd.f32 %v3451, %v3461
  %v3490 = vadd.f32 %v3452, %v3461
  %v3491 = vadd.f32 %v3453, %v3461
  %v3492 = vadd.f32 %v3454, %v3461
  %v3493 = vadd.f32 %v3455, %v3461
  %v3494 = vadd.f32 %v3456, %v3461
  %v3495 = vmax.f32 %v3463, 0.0
  %v3496 = vmax.f32 %v3464, 0.0
  %v3497 = vmax.f32 %v3465, 0.0
  %v3498 = vmax.f32 %v3466, 0.0
  %v3499 = vmax.f32 %v3467, 0.0
  %v3500 = vmax.f32 %v3468, 0.0
  %v3501 = vmax.f32 %v3469, 0.0
  %v3502 = vmax.f32 %v3470, 0.0
  %v3503 = vmax.f32 %v3471, 0.0
  %v3504 = vmax.f32 %v3472, 0.0
  %v3505 = vmax.f32 %v3473, 0.0
  %v3506 = vmax.f32 %v3474, 0.0
  %v3507 = vmax.f32 %v3475, 0.0
  %v3508 = vmax.f32 %v3476, 0.0
  %v3509 = vmax.f32 %v3477, 0.0
  %v3510 = vmax.f32 %v3478, 0.0
  %v3511 = vmax.f32 %v3479, 0.0
  %v3512 = vmax.f32 %v3480, 0.0
  %v3513 = vmax.f32 %v3481, 0.0
  %v3514 = vmax.f32 %v3482, 0.0
  %v3515 = vmax.f32 %v3483, 0.0
  %v3516 = vmax.f32 %v3484, 0.0
  %v3517 = vmax.f32 %v3485, 0.0
  %v3518 = vmax.f32 %v3486, 0.0
  %v3519 = vmax.f32 %v3487, 0.0
  %v3520 = vmax.f32 %v3488, 0.0
  %v3521 = vmax.f32 %v3489, 0.0
  %v3522 = vmax.f32 %v3490, 0.0
  %v3523 = vmax.f32 %v3491, 0.0
  %v3524 = vmax.f32 %v3492, 0.0
  %v3525 = vmax.f32 %v3493, 0.0
  %v3526 = vmax.f32 %v3494, 0.0
  %v3527 = vpack.c.bf16 %v3496, %v3495
  %v3528 = vpack.c.bf16 %v3498, %v3497
  %v3529 = vpack.c.bf16 %v3500, %v3499
  %v3530 = vpack.c.bf16 %v3502, %v3501
  %v3531 = vpack.c.bf16 %v3504, %v3503
  %v3532 = vpack.c.bf16 %v3506, %v3505
  %v3533 = vpack.c.bf16 %v3508, %v3507
  %v3534 = vpack.c.bf16 %v3510, %v3509
  %v3535 = vpack.c.bf16 %v3512, %v3511
  %v3536 = vpack.c.bf16 %v3514, %v3513
  %v3537 = vpack.c.bf16 %v3516, %v3515
  %v3538 = vpack.c.bf16 %v3518, %v3517
  %v3539 = vpack.c.bf16 %v3520, %v3519
  %v3540 = vpack.c.bf16 %v3522, %v3521
  %v3541 = vpack.c.bf16 %v3524, %v3523
  %v3542 = vpack.c.bf16 %v3526, %v3525
  %v3543 = vld [vmem:[%s10] sm:$0xf]
  %v3544 = vld [vmem:[%s10 + $0x4] sm:$0xf]
  %v3545 = vld [vmem:[%s10 + $0x8] sm:$0xf]
  %v3546 = vld [vmem:[%s10 + $0xc] sm:$0xf]
  %v3547 = vld [vmem:[%s10 + $0x10] sm:$0xf]
  %v3548 = vld [vmem:[%s10 + $0x14] sm:$0xf]
  %v3549 = vld [vmem:[%s10 + $0x18] sm:$0xf]
  %v3550 = vld [vmem:[%s10 + $0x1c] sm:$0xf]
  %v3551 = vld [vmem:[%s11] sm:$0x1]
  %v3553 = vlaneseq
  %v3554 = vshrl.u32 %v3553, 7
  %v3555 = vsub.s32 0, %v3554
  %v3556 = vrot.slane %v3551, %v3555
  %v3566 = vunpack.c.l.b16 %v3543
  %v3567 = vunpack.c.l.b16 %v3544
  %v3568 = vunpack.c.l.b16 %v3545
  %v3569 = vunpack.c.l.b16 %v3546
  %v3570 = vunpack.c.l.b16 %v3547
  %v3571 = vunpack.c.l.b16 %v3548
  %v3572 = vunpack.c.l.b16 %v3549
  %v3573 = vunpack.c.l.b16 %v3550
  %v3574 = vpack.c.b16 %v3567, %v3566
  %v3575 = vpack.c.b16 %v3569, %v3568
  %v3576 = vpack.c.b16 %v3571, %v3570
  %v3577 = vpack.c.b16 %v3573, %v3572
  %v3583 = vsel %vm3237, %v3527, 0
  %v3586 = vsel %vm3237, %v3528, 0
  %v3589 = vsel %vm3237, %v3529, 0
  %v3592 = vsel %vm3237, %v3530, 0
  %v3595 = vsel %vm3237, %v3531, 0
  %v3598 = vsel %vm3237, %v3532, 0
  %v3601 = vsel %vm3237, %v3533, 0
  %v3604 = vsel %vm3237, %v3534, 0
  %v3607 = vsel %vm3237, %v3535, 0
  %v3610 = vsel %vm3237, %v3536, 0
  %v3613 = vsel %vm3237, %v3537, 0
  %v3616 = vsel %vm3237, %v3538, 0
  %v3619 = vsel %vm3237, %v3539, 0
  %v3622 = vsel %vm3237, %v3540, 0
  %v3625 = vsel %vm3237, %v3541, 0
  %v3628 = vsel %vm3237, %v3542, 0
  %3630 = vmatprep.subr.bf16.mxu0 0
  %3631 = vmatpush1.bf16.msra.mxu0 0
  %3632 = vmatprep.subr.bf16.mxu0 0
  %3633 = vmatpush1.bf16.msra.mxu0 0
  %3634 = vmatprep.subr.bf16.mxu0 0
  %3635 = vmatpush1.bf16.msra.mxu0 0
  %3636 = vmatprep.subr.bf16.mxu0 0
  %3637 = vmatpush1.bf16.msra.mxu0 0
  %3638 = vmatprep.subr.bf16.mxu0 0
  %3639 = vmatpush1.bf16.msra.mxu0 %v3577
  %3640 = vmatprep.subr.bf16.mxu0 0
  %3641 = vmatpush1.bf16.msra.mxu0 %v3576
  %3642 = vmatprep.subr.bf16.mxu0 0
  %3643 = vmatpush1.bf16.msra.mxu0 %v3575
  %3644 = vmatprep.subr.bf16.mxu0 0
  %3645 = vmatpush1.bf16.msra.mxu0 %v3574
  %3646 = vmatprep.subr.bf16.mxu0 0
  %3647 = vmatpush2.bf16.msra.mxu0 0
  %3648 = vmatprep.subr.bf16.mxu0 0
  %3649 = vmatpush2.bf16.msra.mxu0 0
  %3650 = vmatprep.subr.bf16.mxu0 0
  %3651 = vmatpush2.bf16.msra.mxu0 0
  %3652 = vmatprep.subr.bf16.mxu0 0
  %3653 = vmatpush2.bf16.msra.mxu0 0
  %3654 = vmatprep.subr.bf16.mxu0 0
  %3655 = vmatpush2.bf16.msra.mxu0 0
  %3656 = vmatprep.subr.bf16.mxu0 0
  %3657 = vmatpush2.bf16.msra.mxu0 0
  %3658 = vmatprep.subr.bf16.mxu0 0
  %3659 = vmatpush2.bf16.msra.mxu0 0
  %3660 = vmatprep.subr.bf16.mxu0 0
  %3661 = vmatpush2.bf16.msra.mxu0 0
  %3662 = vmatprep.mubr.bf16.mxu0 0
  %3663 = vmatmul.mubr.bf16.gmra.mxu0 %v3583
  %v3664 = vpop.f32.mrf.mxu0
  %v3665 = vadd.f32 %v3556, %v3664
  %v3666 = vpop.f32.mrf.mxu0
  %v3667 = vpop.f32.mrf.mxu0
  %v3668 = vadd.f32 %v3556, %v3667
  %v3669 = vpop.f32.mrf.mxu0
  %3670 = vmatprep.mubr.bf16.mxu0 0
  %3671 = vmatmul.mubr.bf16.gmra.mxu0 %v3586
  %v3672 = vpop.f32.mrf.mxu0
  %v3673 = vadd.f32 %v3556, %v3672
  %v3674 = vpop.f32.mrf.mxu0
  %v3675 = vpop.f32.mrf.mxu0
  %v3676 = vadd.f32 %v3556, %v3675
  %v3677 = vpop.f32.mrf.mxu0
  %3678 = vmatprep.mubr.bf16.mxu0 0
  %3679 = vmatmul.mubr.bf16.gmra.mxu0 %v3589
  %v3680 = vpop.f32.mrf.mxu0
  %v3681 = vadd.f32 %v3556, %v3680
  %v3682 = vpop.f32.mrf.mxu0
  %v3683 = vpop.f32.mrf.mxu0
  %v3684 = vadd.f32 %v3556, %v3683
  %v3685 = vpop.f32.mrf.mxu0
  %3686 = vmatprep.mubr.bf16.mxu0 0
  %3687 = vmatmul.mubr.bf16.gmra.mxu0 %v3592
  %v3688 = vpop.f32.mrf.mxu0
  %v3689 = vadd.f32 %v3556, %v3688
  %v3690 = vpop.f32.mrf.mxu0
  %v3691 = vpop.f32.mrf.mxu0
  %v3692 = vadd.f32 %v3556, %v3691
  %v3693 = vpop.f32.mrf.mxu0
  %3694 = vmatprep.mubr.bf16.mxu0 0
  %3695 = vmatmul.mubr.bf16.gmra.mxu0 %v3595
  %v3696 = vpop.f32.mrf.mxu0
  %v3697 = vadd.f32 %v3556, %v3696
  %v3698 = vpop.f32.mrf.mxu0
  %v3699 = vpop.f32.mrf.mxu0
  %v3700 = vadd.f32 %v3556, %v3699
  %v3701 = vpop.f32.mrf.mxu0
  %3702 = vmatprep.mubr.bf16.mxu0 0
  %3703 = vmatmul.mubr.bf16.gmra.mxu0 %v3598
  %v3704 = vpop.f32.mrf.mxu0
  %v3705 = vadd.f32 %v3556, %v3704
  %v3706 = vpop.f32.mrf.mxu0
  %v3707 = vpop.f32.mrf.mxu0
  %v3708 = vadd.f32 %v3556, %v3707
  %v3709 = vpop.f32.mrf.mxu0
  %3710 = vmatprep.mubr.bf16.mxu0 0
  %3711 = vmatmul.mubr.bf16.gmra.mxu0 %v3601
  %v3712 = vpop.f32.mrf.mxu0
  %v3713 = vadd.f32 %v3556, %v3712
  %v3714 = vpop.f32.mrf.mxu0
  %v3715 = vpop.f32.mrf.mxu0
  %v3716 = vadd.f32 %v3556, %v3715
  %v3717 = vpop.f32.mrf.mxu0
  %3718 = vmatprep.mubr.bf16.mxu0 0
  %3719 = vmatmul.mubr.bf16.gmra.mxu0 %v3604
  %v3720 = vpop.f32.mrf.mxu0
  %v3721 = vadd.f32 %v3556, %v3720
  %v3722 = vpop.f32.mrf.mxu0
  %v3723 = vpop.f32.mrf.mxu0
  %v3724 = vadd.f32 %v3556, %v3723
  %v3725 = vpop.f32.mrf.mxu0
  %3726 = vmatprep.mubr.bf16.mxu0 0
  %3727 = vmatmul.mubr.bf16.gmra.mxu0 %v3607
  %v3728 = vpop.f32.mrf.mxu0
  %v3729 = vadd.f32 %v3556, %v3728
  %v3730 = vpop.f32.mrf.mxu0
  %v3731 = vpop.f32.mrf.mxu0
  %v3732 = vadd.f32 %v3556, %v3731
  %v3733 = vpop.f32.mrf.mxu0
  %3734 = vmatprep.mubr.bf16.mxu0 0
  %3735 = vmatmul.mubr.bf16.gmra.mxu0 %v3610
  %v3736 = vpop.f32.mrf.mxu0
  %v3737 = vadd.f32 %v3556, %v3736
  %v3738 = vpop.f32.mrf.mxu0
  %v3739 = vpop.f32.mrf.mxu0
  %v3740 = vadd.f32 %v3556, %v3739
  %v3741 = vpop.f32.mrf.mxu0
  %3742 = vmatprep.mubr.bf16.mxu0 0
  %3743 = vmatmul.mubr.bf16.gmra.mxu0 %v3613
  %v3744 = vpop.f32.mrf.mxu0
  %v3745 = vadd.f32 %v3556, %v3744
  %v3746 = vpop.f32.mrf.mxu0
  %v3747 = vpop.f32.mrf.mxu0
  %v3748 = vadd.f32 %v3556, %v3747
  %v3749 = vpop.f32.mrf.mxu0
  %3750 = vmatprep.mubr.bf16.mxu0 0
  %3751 = vmatmul.mubr.bf16.gmra.mxu0 %v3616
  %v3752 = vpop.f32.mrf.mxu0
  %v3753 = vadd.f32 %v3556, %v3752
  %v3754 = vpop.f32.mrf.mxu0
  %v3755 = vpop.f32.mrf.mxu0
  %v3756 = vadd.f32 %v3556, %v3755
  %v3757 = vpop.f32.mrf.mxu0
  %3758 = vmatprep.mubr.bf16.mxu0 0
  %3759 = vmatmul.mubr.bf16.gmra.mxu0 %v3619
  %v3760 = vpop.f32.mrf.mxu0
  %v3761 = vadd.f32 %v3556, %v3760
  %v3762 = vpop.f32.mrf.mxu0
  %v3763 = vpop.f32.mrf.mxu0
  %v3764 = vadd.f32 %v3556, %v3763
  %v3765 = vpop.f32.mrf.mxu0
  %3766 = vmatprep.mubr.bf16.mxu0 0
  %3767 = vmatmul.mubr.bf16.gmra.mxu0 %v3622
  %v3768 = vpop.f32.mrf.mxu0
  %v3769 = vadd.f32 %v3556, %v3768
  %v3770 = vpop.f32.mrf.mxu0
  %v3771 = vpop.f32.mrf.mxu0
  %v3772 = vadd.f32 %v3556, %v3771
  %v3773 = vpop.f32.mrf.mxu0
  %3774 = vmatprep.mubr.bf16.mxu0 0
  %3775 = vmatmul.mubr.bf16.gmra.mxu0 %v3625
  %v3776 = vpop.f32.mrf.mxu0
  %v3777 = vadd.f32 %v3556, %v3776
  %v3778 = vpop.f32.mrf.mxu0
  %v3779 = vpop.f32.mrf.mxu0
  %v3780 = vadd.f32 %v3556, %v3779
  %v3781 = vpop.f32.mrf.mxu0
  %3782 = vmatprep.mubr.bf16.mxu0 0
  %3783 = vmatmul.mubr.bf16.gmra.mxu0 %v3628
  %v3784 = vpop.f32.mrf.mxu0
  %v3785 = vadd.f32 %v3556, %v3784
  %v3786 = vpop.f32.mrf.mxu0
  %v3787 = vpop.f32.mrf.mxu0
  %v3788 = vadd.f32 %v3556, %v3787
  %v3789 = vpop.f32.mrf.mxu0
  %3790 = vdwg.mxu0
  %vm3791 = vcmask 130048
  %3792 = vst.msk [vmem:[%s12] sm:$0xff] %vm3791, %v3665
  %3793 = vst.msk [vmem:[%s12 + $0x8] sm:$0xff] %vm3791, %v3668
  %3794 = vst.msk [vmem:[%s12 + $0x10] sm:$0xff] %vm3791, %v3673
  %3795 = vst.msk [vmem:[%s12 + $0x18] sm:$0xff] %vm3791, %v3676
  %3796 = vst.msk [vmem:[%s12 + $0x20] sm:$0xff] %vm3791, %v3681
  %3797 = vst.msk [vmem:[%s12 + $0x28] sm:$0xff] %vm3791, %v3684
  %3798 = vst.msk [vmem:[%s12 + $0x30] sm:$0xff] %vm3791, %v3689
  %3799 = vst.msk [vmem:[%s12 + $0x38] sm:$0xff] %vm3791, %v3692
  %3800 = vst.msk [vmem:[%s12 + $0x40] sm:$0xff] %vm3791, %v3697
  %3801 = vst.msk [vmem:[%s12 + $0x48] sm:$0xff] %vm3791, %v3700
  %3802 = vst.msk [vmem:[%s12 + $0x50] sm:$0xff] %vm3791, %v3705
  %3803 = vst.msk [vmem:[%s12 + $0x58] sm:$0xff] %vm3791, %v3708
  %3804 = vst.msk [vmem:[%s12 + $0x60] sm:$0xff] %vm3791, %v3713
  %3805 = vst.msk [vmem:[%s12 + $0x68] sm:$0xff] %vm3791, %v3716
  %3806 = vst.msk [vmem:[%s12 + $0x70] sm:$0xff] %vm3791, %v3721
  %3807 = vst.msk [vmem:[%s12 + $0x78] sm:$0xff] %vm3791, %v3724
  %3808 = vst.msk [vmem:[%s12 + $0x80] sm:$0xff] %vm3791, %v3729
  %3809 = vst.msk [vmem:[%s12 + $0x88] sm:$0xff] %vm3791, %v3732
  %3810 = vst.msk [vmem:[%s12 + $0x90] sm:$0xff] %vm3791, %v3737
  %3811 = vst.msk [vmem:[%s12 + $0x98] sm:$0xff] %vm3791, %v3740
  %3812 = vst.msk [vmem:[%s12 + $0xa0] sm:$0xff] %vm3791, %v3745
  %3813 = vst.msk [vmem:[%s12 + $0xa8] sm:$0xff] %vm3791, %v3748
  %3814 = vst.msk [vmem:[%s12 + $0xb0] sm:$0xff] %vm3791, %v3753
  %3815 = vst.msk [vmem:[%s12 + $0xb8] sm:$0xff] %vm3791, %v3756
  %3816 = vst.msk [vmem:[%s12 + $0xc0] sm:$0xff] %vm3791, %v3761
  %3817 = vst.msk [vmem:[%s12 + $0xc8] sm:$0xff] %vm3791, %v3764
  %3818 = vst.msk [vmem:[%s12 + $0xd0] sm:$0xff] %vm3791, %v3769
  %3819 = vst.msk [vmem:[%s12 + $0xd8] sm:$0xff] %vm3791, %v3772
  %3820 = vst.msk [vmem:[%s12 + $0xe0] sm:$0xff] %vm3791, %v3777
  %3821 = vst.msk [vmem:[%s12 + $0xe8] sm:$0xff] %vm3791, %v3780
  %3822 = vst.msk [vmem:[%s12 + $0xf0] sm:$0xff] %vm3791, %v3785
  %3823 = vst.msk [vmem:[%s12 + $0xf8] sm:$0xff] %vm3791, %v3788
  // Predicated region
  $region50: #{generator_forward.1} parent=0 // pred_check
    _
  $region51: #{generator_forward.1} parent=0 // pred_check_branch
    %3825 = sbr.rel (0) target = $region53
  $region52: #{generator_forward.1} parent=0 // pred_region
    _
  $region53: #{generator_forward.1} parent=0 // pred_fallthru
    _
  // Predicated region
  $region54: #{generator_forward.1} parent=0 // pred_check
    _
  $region55: #{generator_forward.1} parent=0 // pred_check_branch
    %3827 = sbr.rel (0) target = $region57
  $region56: #{generator_forward.1} parent=0 // pred_region
    _
  $region57: #{generator_forward.1} parent=0 // pred_fallthru
    _

</llo_original>
